<compile_context>
chip_gen: v5e
topology: v5e:2x2
jax: 0.10.0
libtpu: 0.0.40
codegen_flags: <defaults>
</compile_context>

<pallas_src>
import jax
import jax.numpy as jnp
from jax.experimental import pallas as pl
from jax.experimental.pallas import tpu as pltpu

NEG_SLOPE = 0.2
BN_EPS = 0.8


def _vmem_limit_bytes():
    # ~3/4 of physical VMEM, capped at 96 MiB:
    #   v7x: 64 MiB physical -> 48 MiB;  v5e/v6e: 128 MiB -> 96 MiB.
    # Per-step working sets here are a few MiB; this just has to beat the
    # default scoped limit so larger images / batches still fit comfortably.
    try:
        cap = int(pltpu.get_tpu_info().vmem_capacity_bytes)
    except Exception:
        cap = 64 * 1024 * 1024
    return min((cap * 3) // 4, 96 * 1024 * 1024)


# ------------------ fused conv (+ folded BN) + LeakyReLU kernel ------------------ #

def _make_conv_kernel(Ho, Ws, stride, cin, cout):
    """Implicit-GEMM 3x3 conv on one phase-decomposed, spatially-flattened image."""
    rows = Ho * Ws      # output rows incl. the (Ws - Wo) wrap-around columns

    def kernel(x_ref, w_ref, shift_ref, o_ref):
        # x_ref:     (stride^2, Hs*Ws + tail, cin)  bf16, one image
        # w_ref:     (3, 3, cin, cout)              bf16, resident (BN folded)
        # shift_ref: (1, cout)                      f32,  resident
        # o_ref:     (1, rows, cout)                bf16
        acc = jnp.zeros((rows, cout), jnp.float32)
        for di in range(3):
            for dj in range(3):
                ph = (di % stride) * stride + (dj % stride)
                start = (di // stride) * Ws + (dj // stride)
                xm = x_ref[ph, start:start + rows, :]        # (rows, cin) contiguous
                wt = w_ref[di, dj]                           # (cin, cout)
                if cin == 1:
                    # K = 1: outer product on the VPU instead of a degenerate
                    # MXU matmul.
                    acc = acc + xm.astype(jnp.float32) * wt.astype(jnp.float32)
                else:
                    acc = acc + jnp.dot(xm, wt,
                                        preferred_element_type=jnp.float32)
        y = acc + shift_ref[...]                             # bias (+ folded BN)
        y = jnp.where(y >= 0.0, y, NEG_SLOPE * y)            # LeakyReLU(0.2)
        o_ref[0] = y.astype(o_ref.dtype)

    return kernel


def conv3x3_bn_lrelu(x_nhwc, w_taps, shift, stride):
    """Conv2d(Cin, Cout, 3, stride, 1) [+ folded eval-BN] + LeakyReLU(0.2).

    x_nhwc : (B, H, W, Cin)   bf16
    w_taps : (3, 3, Cin, Cout) bf16  (BN scale already folded in)
    shift  : (1, Cout)         f32   (conv bias folded through BN)
    -> (B, Ho, Wo, Cout) bf16
    """
    assert stride in (1, 2)
    B, H, W, cin = x_nhwc.shape
    cout = w_taps.shape[-1]
    Ho = (H + 2 - 3) // stride + 1
    Wo = (W + 2 - 3) // stride + 1

    # pad=1 zero padding, done once per layer by XLA (cheap vs. the im2col
    # duplication it replaces).
    xp = jnp.pad(x_nhwc, ((0, 0), (1, 1), (1, 1), (0, 0)))
    Hp, Wp = H + 2, W + 2

    if stride == 2:
        # Phase planes P[a,b][u,v] = xp[2u+a, 2v+b]; each 3x3 tap then reads a
        # contiguous window of one plane (no strided loads inside the kernel).
        assert Hp % 2 == 0 and Wp % 2 == 0
        x_ph = xp.reshape(B, Hp // 2, 2, Wp // 2, 2, cin)
        x_ph = x_ph.transpose(0, 2, 4, 1, 3, 5)          # (B, 2, 2, Hs, Ws, C)
        n_ph, Hs, Ws = 4, Hp // 2, Wp // 2
        x_ph = x_ph.reshape(B * n_ph, Hs, Ws, cin)
        tail = 1                                          # max tap column offset
    else:
        n_ph, Hs, Ws = 1, Hp, Wp
        x_ph = xp
        tail = 2

    # Flatten the plane and append `tail` zero rows so every tap's contiguous
    # run stays in bounds (its last few elements wrap past the plane end; the
    # corresponding output columns are garbage and get sliced off below).
    x_flat = x_ph.reshape(B * n_ph, Hs * Ws, cin)
    x_flat = jnp.pad(x_flat, ((0, 0), (0, tail), (0, 0)))
    L = Hs * Ws + tail
    rows = Ho * Ws

    kernel = _make_conv_kernel(Ho, Ws, stride, cin, cout)
    out = pl.pallas_call(
        kernel,
        out_shape=jax.ShapeDtypeStruct((B, rows, cout), jnp.bfloat16),
        grid=(B,),                                            # one image per step
        in_specs=[
            pl.BlockSpec((n_ph, L, cin), lambda b: (b, 0, 0)),        # image
            pl.BlockSpec((3, 3, cin, cout), lambda b: (0, 0, 0, 0)),  # resident W
            pl.BlockSpec((1, cout), lambda b: (0, 0)),                # resident shift
        ],
        out_specs=pl.BlockSpec((1, rows, cout), lambda b: (b, 0, 0)),
        compiler_params=pltpu.CompilerParams(
            dimension_semantics=("parallel",),     # batch axis splits across TCs
            vmem_limit_bytes=_vmem_limit_bytes(),
        ),
    )(x_flat, w_taps, shift)

    # Drop the wrap-around columns; XLA fuses this with the next layer's pad.
    return out.reshape(B, Ho, Ws, cout)[:, :, :Wo, :]


# --------------------------- Linear(K, 1) + Sigmoid ------------------------------ #

def _linear_sigmoid_kernel(x_ref, w_ref, b_ref, o_ref, acc_ref):
    # K-tiled VPU reduction: acc[b] += sum_k x[b,k] * w[0,k]; sigmoid at the end.
    k = pl.program_id(0)

    @pl.when(k == 0)
    def _init():
        acc_ref[...] = jnp.zeros_like(acc_ref)

    x = x_ref[...].astype(jnp.float32)            # (B, tk)
    w = w_ref[...].astype(jnp.float32)            # (1, tk)
    acc_ref[...] += jnp.sum(x * w, axis=-1, keepdims=True)

    @pl.when(k == pl.num_programs(0) - 1)
    def _finalize():
        y = acc_ref[...] + b_ref[...]
        o_ref[...] = 1.0 / (1.0 + jnp.exp(-y))


def linear_sigmoid(x, w, b, *, tk=65536):
    """sigmoid(x @ w.T + b) with w stored as (1, K).  Large default K tile so
    typical sizes run in 1-2 grid steps (the head was step-overhead bound)."""
    B, K = x.shape
    tk = min(tk, K)
    while K % tk != 0:          # keep exact-divisor tiles; K is a multiple of 128
        tk -= 128
    return pl.pallas_call(
        _linear_sigmoid_kernel,
        out_shape=jax.ShapeDtypeStruct((B, 1), jnp.float32),
        grid=(K // tk,),
        in_specs=[
            pl.BlockSpec((B, tk), lambda k: (0, k)),
            pl.BlockSpec((1, tk), lambda k: (0, k)),
            pl.BlockSpec((1, 1), lambda k: (0, 0)),            # resident bias
        ],
        out_specs=pl.BlockSpec((B, 1), lambda k: (0, 0)),
        scratch_shapes=[pltpu.VMEM((B, 1), jnp.float32)],
        compiler_params=pltpu.CompilerParams(
            dimension_semantics=("arbitrary",),                # reduction axis
            vmem_limit_bytes=_vmem_limit_bytes(),
        ),
    )(x, w, b)


# ------------------------------- parameters / forward ---------------------------- #

def init_params(key, d_input_dim):
    assert d_input_dim % 8 == 0
    conv_cfg = [  # (Cin, Cout, stride, has_bn)
        (1, 16, 2, False),
        (16, 32, 2, True),
        (32, 64, 2, True),
        (64, 128, 1, True),
    ]
    params = {"convs": []}
    keys = jax.random.split(key, len(conv_cfg) + 1)

    for (ci, co, stride, has_bn), k_i in zip(conv_cfg, keys[:-1]):
        kw, kb = jax.random.split(k_i)
        fan_in = ci * 9
        bound = 1.0 / jnp.sqrt(float(fan_in))
        w = jax.random.uniform(kw, (co, ci, 3, 3), jnp.float32, -bound, bound)
        b = jax.random.uniform(kb, (co,), jnp.float32, -bound, bound)
        # (O, I, kh, kw) -> (kh, kw, I, O): per-tap (Cin, Cout) slabs.
        w_taps = jnp.transpose(w, (2, 3, 1, 0))
        if has_bn:
            # eval-mode BN(eps=0.8) with default running stats: pure scale.
            scale = 1.0 / jnp.sqrt(1.0 + BN_EPS)
            w_taps = w_taps * scale
            shift = b * scale
        else:
            shift = b
        params["convs"].append(
            (w_taps.astype(jnp.bfloat16),
             shift.reshape(1, co).astype(jnp.float32),
             stride))

    ds = d_input_dim // 8
    lin_in = 128 * ds * ds
    klw, klb = jax.random.split(keys[-1])
    lb = 1.0 / jnp.sqrt(float(lin_in))
    # lin_w rows generated directly in NHWC-flatten order; a real PyTorch
    # checkpoint (NCHW flatten) would be row-permuted (C,H,W)->(H,W,C) once here.
    lin_w = jax.random.uniform(klw, (1, lin_in), jnp.float32, -lb, lb)
    lin_b = jax.random.uniform(klb, (1, 1), jnp.float32, -lb, lb)
    params["lin_w"] = lin_w.astype(jnp.bfloat16)
    params["lin_b"] = lin_b
    return params


def discriminator_forward(x_nchw, params):
    # NCHW -> NHWC, bf16 activations end-to-end (halves HBM traffic, MXU-native).
    x = jnp.transpose(x_nchw, (0, 2, 3, 1)).astype(jnp.bfloat16)
    for (w_taps, shift, stride) in params["convs"]:
        x = conv3x3_bn_lrelu(x, w_taps, shift, stride)
        # Dropout2d(0.25) is identity in eval mode.
    B = x.shape[0]
    x = x.reshape(B, -1)     # NHWC flatten; lin_w rows are stored in this order
    return linear_sigmoid(x, params["lin_w"], params["lin_b"])


if __name__ == "__main__":
    d_input_dim = 16          # small test size (module default is 256); must be % 8
    batch = 2
    key = jax.random.PRNGKey(0)
    k_x, k_p = jax.random.split(key)
    x = jax.random.normal(k_x, (batch, 1, d_input_dim, d_input_dim), jnp.float32)
    params = init_params(k_p, d_input_dim)

    fwd = jax.jit(lambda xx: discriminator_forward(xx, params))
    out = jax.block_until_ready(fwd(x))
    assert out.shape == (batch, 1), out.shape
    assert bool(jnp.all(jnp.isfinite(out)))
    assert bool(jnp.all((out >= 0.0) & (out <= 1.0)))
    print("KERNEL_OK")
</pallas_src>

<mosaic_0001>
module attributes {stable_mosaic.version = 11 : i64} {
  func.func @kernel(%arg0: i32, %arg1: memref<4x82x1xbf16, #tpu.memory_space<vmem>>, %arg2: memref<3x3x1x16xbf16, #tpu.memory_space<vmem>>, %arg3: memref<1x16xf32, #tpu.memory_space<vmem>>, %arg4: memref<1x72x16xbf16, #tpu.memory_space<vmem>>) attributes {dimension_semantics = [#tpu.dimension_semantics<parallel>], iteration_bounds = array<i64: 2>, scalar_prefetch = 0 : i64, scratch_operands = 0 : i64, tpu.core_type = #tpu.core_type<tc>, window_params = [{transform_indices = @transform_0, window_bounds = array<i64: 4, 82, 1>}, {pipeline_mode = #tpu.pipeline_mode<synchronous>, transform_indices = @transform_1, window_bounds = array<i64: 3, 3, 1, 16>}, {pipeline_mode = #tpu.pipeline_mode<synchronous>, transform_indices = @transform_2, window_bounds = array<i64: 1, 16>}, {transform_indices = @transform_3, window_bounds = array<i64: 1, 72, 16>}]} {
    %cst = arith.constant 0.000000e+00 : f32
    %0 = vector.broadcast %cst : f32 to vector<72x16xf32>
    %c0 = arith.constant 0 : index
    %c0_0 = arith.constant 0 : index
    %c0_1 = arith.constant 0 : index
    %1 = vector.load %arg1[%c0, %c0_0, %c0_1] : memref<4x82x1xbf16, #tpu.memory_space<vmem>>, vector<1x72x1xbf16>
    %2 = vector.shape_cast %1 : vector<1x72x1xbf16> to vector<72x1xbf16>
    %c0_2 = arith.constant 0 : index
    %c0_3 = arith.constant 0 : index
    %c0_4 = arith.constant 0 : index
    %c0_5 = arith.constant 0 : index
    %3 = vector.load %arg2[%c0_2, %c0_3, %c0_4, %c0_5] : memref<3x3x1x16xbf16, #tpu.memory_space<vmem>>, vector<1x1x1x16xbf16>
    %4 = vector.shape_cast %3 : vector<1x1x1x16xbf16> to vector<1x16xbf16>
    %5 = arith.extf %2 : vector<72x1xbf16> to vector<72x1xf32>
    %6 = arith.extf %4 : vector<1x16xbf16> to vector<1x16xf32>
    %7 = vector.broadcast %5 : vector<72x1xf32> to vector<72x16xf32>
    %8 = vector.broadcast %6 : vector<1x16xf32> to vector<72x16xf32>
    %9 = arith.mulf %7, %8 : vector<72x16xf32>
    %10 = arith.addf %0, %9 : vector<72x16xf32>
    %c1 = arith.constant 1 : index
    %c0_6 = arith.constant 0 : index
    %c0_7 = arith.constant 0 : index
    %11 = vector.load %arg1[%c1, %c0_6, %c0_7] : memref<4x82x1xbf16, #tpu.memory_space<vmem>>, vector<1x72x1xbf16>
    %12 = vector.shape_cast %11 : vector<1x72x1xbf16> to vector<72x1xbf16>
    %c0_8 = arith.constant 0 : index
    %c1_9 = arith.constant 1 : index
    %c0_10 = arith.constant 0 : index
    %c0_11 = arith.constant 0 : index
    %13 = vector.load %arg2[%c0_8, %c1_9, %c0_10, %c0_11] : memref<3x3x1x16xbf16, #tpu.memory_space<vmem>>, vector<1x1x1x16xbf16>
    %14 = vector.shape_cast %13 : vector<1x1x1x16xbf16> to vector<1x16xbf16>
    %15 = arith.extf %12 : vector<72x1xbf16> to vector<72x1xf32>
    %16 = arith.extf %14 : vector<1x16xbf16> to vector<1x16xf32>
    %17 = vector.broadcast %15 : vector<72x1xf32> to vector<72x16xf32>
    %18 = vector.broadcast %16 : vector<1x16xf32> to vector<72x16xf32>
    %19 = arith.mulf %17, %18 : vector<72x16xf32>
    %20 = arith.addf %10, %19 : vector<72x16xf32>
    %c0_12 = arith.constant 0 : index
    %c1_13 = arith.constant 1 : index
    %c0_14 = arith.constant 0 : index
    %21 = vector.load %arg1[%c0_12, %c1_13, %c0_14] : memref<4x82x1xbf16, #tpu.memory_space<vmem>>, vector<1x72x1xbf16>
    %22 = vector.shape_cast %21 : vector<1x72x1xbf16> to vector<72x1xbf16>
    %c0_15 = arith.constant 0 : index
    %c2 = arith.constant 2 : index
    %c0_16 = arith.constant 0 : index
    %c0_17 = arith.constant 0 : index
    %23 = vector.load %arg2[%c0_15, %c2, %c0_16, %c0_17] : memref<3x3x1x16xbf16, #tpu.memory_space<vmem>>, vector<1x1x1x16xbf16>
    %24 = vector.shape_cast %23 : vector<1x1x1x16xbf16> to vector<1x16xbf16>
    %25 = arith.extf %22 : vector<72x1xbf16> to vector<72x1xf32>
    %26 = arith.extf %24 : vector<1x16xbf16> to vector<1x16xf32>
    %27 = vector.broadcast %25 : vector<72x1xf32> to vector<72x16xf32>
    %28 = vector.broadcast %26 : vector<1x16xf32> to vector<72x16xf32>
    %29 = arith.mulf %27, %28 : vector<72x16xf32>
    %30 = arith.addf %20, %29 : vector<72x16xf32>
    %c2_18 = arith.constant 2 : index
    %c0_19 = arith.constant 0 : index
    %c0_20 = arith.constant 0 : index
    %31 = vector.load %arg1[%c2_18, %c0_19, %c0_20] : memref<4x82x1xbf16, #tpu.memory_space<vmem>>, vector<1x72x1xbf16>
    %32 = vector.shape_cast %31 : vector<1x72x1xbf16> to vector<72x1xbf16>
    %c1_21 = arith.constant 1 : index
    %c0_22 = arith.constant 0 : index
    %c0_23 = arith.constant 0 : index
    %c0_24 = arith.constant 0 : index
    %33 = vector.load %arg2[%c1_21, %c0_22, %c0_23, %c0_24] : memref<3x3x1x16xbf16, #tpu.memory_space<vmem>>, vector<1x1x1x16xbf16>
    %34 = vector.shape_cast %33 : vector<1x1x1x16xbf16> to vector<1x16xbf16>
    %35 = arith.extf %32 : vector<72x1xbf16> to vector<72x1xf32>
    %36 = arith.extf %34 : vector<1x16xbf16> to vector<1x16xf32>
    %37 = vector.broadcast %35 : vector<72x1xf32> to vector<72x16xf32>
    %38 = vector.broadcast %36 : vector<1x16xf32> to vector<72x16xf32>
    %39 = arith.mulf %37, %38 : vector<72x16xf32>
    %40 = arith.addf %30, %39 : vector<72x16xf32>
    %c3 = arith.constant 3 : index
    %c0_25 = arith.constant 0 : index
    %c0_26 = arith.constant 0 : index
    %41 = vector.load %arg1[%c3, %c0_25, %c0_26] : memref<4x82x1xbf16, #tpu.memory_space<vmem>>, vector<1x72x1xbf16>
    %42 = vector.shape_cast %41 : vector<1x72x1xbf16> to vector<72x1xbf16>
    %c1_27 = arith.constant 1 : index
    %c1_28 = arith.constant 1 : index
    %c0_29 = arith.constant 0 : index
    %c0_30 = arith.constant 0 : index
    %43 = vector.load %arg2[%c1_27, %c1_28, %c0_29, %c0_30] : memref<3x3x1x16xbf16, #tpu.memory_space<vmem>>, vector<1x1x1x16xbf16>
    %44 = vector.shape_cast %43 : vector<1x1x1x16xbf16> to vector<1x16xbf16>
    %45 = arith.extf %42 : vector<72x1xbf16> to vector<72x1xf32>
    %46 = arith.extf %44 : vector<1x16xbf16> to vector<1x16xf32>
    %47 = vector.broadcast %45 : vector<72x1xf32> to vector<72x16xf32>
    %48 = vector.broadcast %46 : vector<1x16xf32> to vector<72x16xf32>
    %49 = arith.mulf %47, %48 : vector<72x16xf32>
    %50 = arith.addf %40, %49 : vector<72x16xf32>
    %c2_31 = arith.constant 2 : index
    %c1_32 = arith.constant 1 : index
    %c0_33 = arith.constant 0 : index
    %51 = vector.load %arg1[%c2_31, %c1_32, %c0_33] : memref<4x82x1xbf16, #tpu.memory_space<vmem>>, vector<1x72x1xbf16>
    %52 = vector.shape_cast %51 : vector<1x72x1xbf16> to vector<72x1xbf16>
    %c1_34 = arith.constant 1 : index
    %c2_35 = arith.constant 2 : index
    %c0_36 = arith.constant 0 : index
    %c0_37 = arith.constant 0 : index
    %53 = vector.load %arg2[%c1_34, %c2_35, %c0_36, %c0_37] : memref<3x3x1x16xbf16, #tpu.memory_space<vmem>>, vector<1x1x1x16xbf16>
    %54 = vector.shape_cast %53 : vector<1x1x1x16xbf16> to vector<1x16xbf16>
    %55 = arith.extf %52 : vector<72x1xbf16> to vector<72x1xf32>
    %56 = arith.extf %54 : vector<1x16xbf16> to vector<1x16xf32>
    %57 = vector.broadcast %55 : vector<72x1xf32> to vector<72x16xf32>
    %58 = vector.broadcast %56 : vector<1x16xf32> to vector<72x16xf32>
    %59 = arith.mulf %57, %58 : vector<72x16xf32>
    %60 = arith.addf %50, %59 : vector<72x16xf32>
    %c0_38 = arith.constant 0 : index
    %c9 = arith.constant 9 : index
    %c0_39 = arith.constant 0 : index
    %61 = vector.load %arg1[%c0_38, %c9, %c0_39] : memref<4x82x1xbf16, #tpu.memory_space<vmem>>, vector<1x72x1xbf16>
    %62 = vector.shape_cast %61 : vector<1x72x1xbf16> to vector<72x1xbf16>
    %c2_40 = arith.constant 2 : index
    %c0_41 = arith.constant 0 : index
    %c0_42 = arith.constant 0 : index
    %c0_43 = arith.constant 0 : index
    %63 = vector.load %arg2[%c2_40, %c0_41, %c0_42, %c0_43] : memref<3x3x1x16xbf16, #tpu.memory_space<vmem>>, vector<1x1x1x16xbf16>
    %64 = vector.shape_cast %63 : vector<1x1x1x16xbf16> to vector<1x16xbf16>
    %65 = arith.extf %62 : vector<72x1xbf16> to vector<72x1xf32>
    %66 = arith.extf %64 : vector<1x16xbf16> to vector<1x16xf32>
    %67 = vector.broadcast %65 : vector<72x1xf32> to vector<72x16xf32>
    %68 = vector.broadcast %66 : vector<1x16xf32> to vector<72x16xf32>
    %69 = arith.mulf %67, %68 : vector<72x16xf32>
    %70 = arith.addf %60, %69 : vector<72x16xf32>
    %c1_44 = arith.constant 1 : index
    %c9_45 = arith.constant 9 : index
    %c0_46 = arith.constant 0 : index
    %71 = vector.load %arg1[%c1_44, %c9_45, %c0_46] : memref<4x82x1xbf16, #tpu.memory_space<vmem>>, vector<1x72x1xbf16>
    %72 = vector.shape_cast %71 : vector<1x72x1xbf16> to vector<72x1xbf16>
    %c2_47 = arith.constant 2 : index
    %c1_48 = arith.constant 1 : index
    %c0_49 = arith.constant 0 : index
    %c0_50 = arith.constant 0 : index
    %73 = vector.load %arg2[%c2_47, %c1_48, %c0_49, %c0_50] : memref<3x3x1x16xbf16, #tpu.memory_space<vmem>>, vector<1x1x1x16xbf16>
    %74 = vector.shape_cast %73 : vector<1x1x1x16xbf16> to vector<1x16xbf16>
    %75 = arith.extf %72 : vector<72x1xbf16> to vector<72x1xf32>
    %76 = arith.extf %74 : vector<1x16xbf16> to vector<1x16xf32>
    %77 = vector.broadcast %75 : vector<72x1xf32> to vector<72x16xf32>
    %78 = vector.broadcast %76 : vector<1x16xf32> to vector<72x16xf32>
    %79 = arith.mulf %77, %78 : vector<72x16xf32>
    %80 = arith.addf %70, %79 : vector<72x16xf32>
    %c0_51 = arith.constant 0 : index
    %c10 = arith.constant 10 : index
    %c0_52 = arith.constant 0 : index
    %81 = vector.load %arg1[%c0_51, %c10, %c0_52] : memref<4x82x1xbf16, #tpu.memory_space<vmem>>, vector<1x72x1xbf16>
    %82 = vector.shape_cast %81 : vector<1x72x1xbf16> to vector<72x1xbf16>
    %c2_53 = arith.constant 2 : index
    %c2_54 = arith.constant 2 : index
    %c0_55 = arith.constant 0 : index
    %c0_56 = arith.constant 0 : index
    %83 = vector.load %arg2[%c2_53, %c2_54, %c0_55, %c0_56] : memref<3x3x1x16xbf16, #tpu.memory_space<vmem>>, vector<1x1x1x16xbf16>
    %84 = vector.shape_cast %83 : vector<1x1x1x16xbf16> to vector<1x16xbf16>
    %85 = arith.extf %82 : vector<72x1xbf16> to vector<72x1xf32>
    %86 = arith.extf %84 : vector<1x16xbf16> to vector<1x16xf32>
    %87 = vector.broadcast %85 : vector<72x1xf32> to vector<72x16xf32>
    %88 = vector.broadcast %86 : vector<1x16xf32> to vector<72x16xf32>
    %89 = arith.mulf %87, %88 : vector<72x16xf32>
    %90 = arith.addf %80, %89 : vector<72x16xf32>
    %c0_57 = arith.constant 0 : index
    %c0_58 = arith.constant 0 : index
    %91 = vector.load %arg3[%c0_57, %c0_58] : memref<1x16xf32, #tpu.memory_space<vmem>>, vector<1x16xf32>
    %92 = vector.broadcast %91 : vector<1x16xf32> to vector<72x16xf32>
    %93 = arith.addf %90, %92 : vector<72x16xf32>
    %cst_59 = arith.constant 0.000000e+00 : f32
    %94 = vector.broadcast %cst_59 : f32 to vector<72x16xf32>
    %95 = arith.cmpf oge, %93, %94 : vector<72x16xf32>
    %cst_60 = arith.constant 2.000000e-01 : f32
    %96 = vector.broadcast %cst_60 : f32 to vector<72x16xf32>
    %97 = arith.mulf %96, %93 : vector<72x16xf32>
    %98 = arith.select %95, %93, %97 : vector<72x16xi1>, vector<72x16xf32>
    %99 = arith.truncf %98 : vector<72x16xf32> to vector<72x16xbf16>
    %c0_61 = arith.constant 0 : index
    %c0_62 = arith.constant 0 : index
    %c0_63 = arith.constant 0 : index
    %100 = vector.load %arg4[%c0_61, %c0_62, %c0_63] : memref<1x72x16xbf16, #tpu.memory_space<vmem>>, vector<1x72x16xbf16>
    %101 = vector.shape_cast %100 : vector<1x72x16xbf16> to vector<72x16xbf16>
    %102 = vector.shape_cast %99 : vector<72x16xbf16> to vector<1x72x16xbf16>
    tpu.vector_store %arg4[%c0_61, %c0_62, %c0_63], %102 {strides = array<i32>} : memref<1x72x16xbf16, #tpu.memory_space<vmem>>, vector<1x72x16xbf16>,
    return
  }
  func.func @transform_0(%arg0: i32) -> (i32, i32, i32) {
    %c0_i32 = arith.constant 0 : i32
    %c0_i32_0 = arith.constant 0 : i32
    %c0_i32_1 = arith.constant 0 : i32
    return %arg0, %c0_i32, %c0_i32_0 : i32, i32, i32
  }
  func.func @transform_1(%arg0: i32) -> (i32, i32, i32, i32) {
    %c0_i32 = arith.constant 0 : i32
    %c0_i32_0 = arith.constant 0 : i32
    %c0_i32_1 = arith.constant 0 : i32
    %c0_i32_2 = arith.constant 0 : i32
    %c0_i32_3 = arith.constant 0 : i32
    return %c0_i32, %c0_i32_0, %c0_i32_1, %c0_i32_2 : i32, i32, i32, i32
  }
  func.func @transform_2(%arg0: i32) -> (i32, i32) {
    %c0_i32 = arith.constant 0 : i32
    %c0_i32_0 = arith.constant 0 : i32
    %c0_i32_1 = arith.constant 0 : i32
    return %c0_i32, %c0_i32_0 : i32, i32
  }
  func.func @transform_3(%arg0: i32) -> (i32, i32, i32) {
    %c0_i32 = arith.constant 0 : i32
    %c0_i32_0 = arith.constant 0 : i32
    %c0_i32_1 = arith.constant 0 : i32
    return %arg0, %c0_i32, %c0_i32_0 : i32, i32, i32
  }
}

module attributes {stable_mosaic.version = 11 : i64} {
  func.func @kernel(%arg0: i32, %arg1: memref<4x26x16xbf16, #tpu.memory_space<vmem>>, %arg2: memref<3x3x16x32xbf16, #tpu.memory_space<vmem>>, %arg3: memref<1x32xf32, #tpu.memory_space<vmem>>, %arg4: memref<1x20x32xbf16, #tpu.memory_space<vmem>>) attributes {dimension_semantics = [#tpu.dimension_semantics<parallel>], iteration_bounds = array<i64: 2>, scalar_prefetch = 0 : i64, scratch_operands = 0 : i64, tpu.core_type = #tpu.core_type<tc>, window_params = [{transform_indices = @transform_0, window_bounds = array<i64: 4, 26, 16>}, {pipeline_mode = #tpu.pipeline_mode<synchronous>, transform_indices = @transform_1, window_bounds = array<i64: 3, 3, 16, 32>}, {pipeline_mode = #tpu.pipeline_mode<synchronous>, transform_indices = @transform_2, window_bounds = array<i64: 1, 32>}, {transform_indices = @transform_3, window_bounds = array<i64: 1, 20, 32>}]} {
    %cst = arith.constant 0.000000e+00 : f32
    %0 = vector.broadcast %cst : f32 to vector<20x32xf32>
    %c0 = arith.constant 0 : index
    %c0_0 = arith.constant 0 : index
    %c0_1 = arith.constant 0 : index
    %1 = vector.load %arg1[%c0, %c0_0, %c0_1] : memref<4x26x16xbf16, #tpu.memory_space<vmem>>, vector<1x20x16xbf16>
    %2 = vector.shape_cast %1 : vector<1x20x16xbf16> to vector<20x16xbf16>
    %c0_2 = arith.constant 0 : index
    %c0_3 = arith.constant 0 : index
    %c0_4 = arith.constant 0 : index
    %c0_5 = arith.constant 0 : index
    %3 = vector.load %arg2[%c0_2, %c0_3, %c0_4, %c0_5] : memref<3x3x16x32xbf16, #tpu.memory_space<vmem>>, vector<1x1x16x32xbf16>
    %4 = vector.shape_cast %3 : vector<1x1x16x32xbf16> to vector<16x32xbf16>
    %cst_6 = arith.constant dense<0.000000e+00> : vector<20x32xf32>
    %5 = tpu.matmul %2, %4, %cst_6 {dimension_numbers = #tpu.dot_dimension_numbers<[1], [0], [0], [1], [0, 0, 1, 1], [], []>} : vector<20x16xbf16>, vector<16x32xbf16>, vector<20x32xf32> -> vector<20x32xf32>
    %6 = arith.addf %0, %5 : vector<20x32xf32>
    %c1 = arith.constant 1 : index
    %c0_7 = arith.constant 0 : index
    %c0_8 = arith.constant 0 : index
    %7 = vector.load %arg1[%c1, %c0_7, %c0_8] : memref<4x26x16xbf16, #tpu.memory_space<vmem>>, vector<1x20x16xbf16>
    %8 = vector.shape_cast %7 : vector<1x20x16xbf16> to vector<20x16xbf16>
    %c0_9 = arith.constant 0 : index
    %c1_10 = arith.constant 1 : index
    %c0_11 = arith.constant 0 : index
    %c0_12 = arith.constant 0 : index
    %9 = vector.load %arg2[%c0_9, %c1_10, %c0_11, %c0_12] : memref<3x3x16x32xbf16, #tpu.memory_space<vmem>>, vector<1x1x16x32xbf16>
    %10 = vector.shape_cast %9 : vector<1x1x16x32xbf16> to vector<16x32xbf16>
    %cst_13 = arith.constant dense<0.000000e+00> : vector<20x32xf32>
    %11 = tpu.matmul %8, %10, %cst_13 {dimension_numbers = #tpu.dot_dimension_numbers<[1], [0], [0], [1], [0, 0, 1, 1], [], []>} : vector<20x16xbf16>, vector<16x32xbf16>, vector<20x32xf32> -> vector<20x32xf32>
    %12 = arith.addf %6, %11 : vector<20x32xf32>
    %c0_14 = arith.constant 0 : index
    %c1_15 = arith.constant 1 : index
    %c0_16 = arith.constant 0 : index
    %13 = vector.load %arg1[%c0_14, %c1_15, %c0_16] : memref<4x26x16xbf16, #tpu.memory_space<vmem>>, vector<1x20x16xbf16>
    %14 = vector.shape_cast %13 : vector<1x20x16xbf16> to vector<20x16xbf16>
    %c0_17 = arith.constant 0 : index
    %c2 = arith.constant 2 : index
    %c0_18 = arith.constant 0 : index
    %c0_19 = arith.constant 0 : index
    %15 = vector.load %arg2[%c0_17, %c2, %c0_18, %c0_19] : memref<3x3x16x32xbf16, #tpu.memory_space<vmem>>, vector<1x1x16x32xbf16>
    %16 = vector.shape_cast %15 : vector<1x1x16x32xbf16> to vector<16x32xbf16>
    %cst_20 = arith.constant dense<0.000000e+00> : vector<20x32xf32>
    %17 = tpu.matmul %14, %16, %cst_20 {dimension_numbers = #tpu.dot_dimension_numbers<[1], [0], [0], [1], [0, 0, 1, 1], [], []>} : vector<20x16xbf16>, vector<16x32xbf16>, vector<20x32xf32> -> vector<20x32xf32>
    %18 = arith.addf %12, %17 : vector<20x32xf32>
    %c2_21 = arith.constant 2 : index
    %c0_22 = arith.constant 0 : index
    %c0_23 = arith.constant 0 : index
    %19 = vector.load %arg1[%c2_21, %c0_22, %c0_23] : memref<4x26x16xbf16, #tpu.memory_space<vmem>>, vector<1x20x16xbf16>
    %20 = vector.shape_cast %19 : vector<1x20x16xbf16> to vector<20x16xbf16>
    %c1_24 = arith.constant 1 : index
    %c0_25 = arith.constant 0 : index
    %c0_26 = arith.constant 0 : index
    %c0_27 = arith.constant 0 : index
    %21 = vector.load %arg2[%c1_24, %c0_25, %c0_26, %c0_27] : memref<3x3x16x32xbf16, #tpu.memory_space<vmem>>, vector<1x1x16x32xbf16>
    %22 = vector.shape_cast %21 : vector<1x1x16x32xbf16> to vector<16x32xbf16>
    %cst_28 = arith.constant dense<0.000000e+00> : vector<20x32xf32>
    %23 = tpu.matmul %20, %22, %cst_28 {dimension_numbers = #tpu.dot_dimension_numbers<[1], [0], [0], [1], [0, 0, 1, 1], [], []>} : vector<20x16xbf16>, vector<16x32xbf16>, vector<20x32xf32> -> vector<20x32xf32>
    %24 = arith.addf %18, %23 : vector<20x32xf32>
    %c3 = arith.constant 3 : index
    %c0_29 = arith.constant 0 : index
    %c0_30 = arith.constant 0 : index
    %25 = vector.load %arg1[%c3, %c0_29, %c0_30] : memref<4x26x16xbf16, #tpu.memory_space<vmem>>, vector<1x20x16xbf16>
    %26 = vector.shape_cast %25 : vector<1x20x16xbf16> to vector<20x16xbf16>
    %c1_31 = arith.constant 1 : index
    %c1_32 = arith.constant 1 : index
    %c0_33 = arith.constant 0 : index
    %c0_34 = arith.constant 0 : index
    %27 = vector.load %arg2[%c1_31, %c1_32, %c0_33, %c0_34] : memref<3x3x16x32xbf16, #tpu.memory_space<vmem>>, vector<1x1x16x32xbf16>
    %28 = vector.shape_cast %27 : vector<1x1x16x32xbf16> to vector<16x32xbf16>
    %cst_35 = arith.constant dense<0.000000e+00> : vector<20x32xf32>
    %29 = tpu.matmul %26, %28, %cst_35 {dimension_numbers = #tpu.dot_dimension_numbers<[1], [0], [0], [1], [0, 0, 1, 1], [], []>} : vector<20x16xbf16>, vector<16x32xbf16>, vector<20x32xf32> -> vector<20x32xf32>
    %30 = arith.addf %24, %29 : vector<20x32xf32>
    %c2_36 = arith.constant 2 : index
    %c1_37 = arith.constant 1 : index
    %c0_38 = arith.constant 0 : index
    %31 = vector.load %arg1[%c2_36, %c1_37, %c0_38] : memref<4x26x16xbf16, #tpu.memory_space<vmem>>, vector<1x20x16xbf16>
    %32 = vector.shape_cast %31 : vector<1x20x16xbf16> to vector<20x16xbf16>
    %c1_39 = arith.constant 1 : index
    %c2_40 = arith.constant 2 : index
    %c0_41 = arith.constant 0 : index
    %c0_42 = arith.constant 0 : index
    %33 = vector.load %arg2[%c1_39, %c2_40, %c0_41, %c0_42] : memref<3x3x16x32xbf16, #tpu.memory_space<vmem>>, vector<1x1x16x32xbf16>
    %34 = vector.shape_cast %33 : vector<1x1x16x32xbf16> to vector<16x32xbf16>
    %cst_43 = arith.constant dense<0.000000e+00> : vector<20x32xf32>
    %35 = tpu.matmul %32, %34, %cst_43 {dimension_numbers = #tpu.dot_dimension_numbers<[1], [0], [0], [1], [0, 0, 1, 1], [], []>} : vector<20x16xbf16>, vector<16x32xbf16>, vector<20x32xf32> -> vector<20x32xf32>
    %36 = arith.addf %30, %35 : vector<20x32xf32>
    %c0_44 = arith.constant 0 : index
    %c5 = arith.constant 5 : index
    %c0_45 = arith.constant 0 : index
    %37 = vector.load %arg1[%c0_44, %c5, %c0_45] : memref<4x26x16xbf16, #tpu.memory_space<vmem>>, vector<1x20x16xbf16>
    %38 = vector.shape_cast %37 : vector<1x20x16xbf16> to vector<20x16xbf16>
    %c2_46 = arith.constant 2 : index
    %c0_47 = arith.constant 0 : index
    %c0_48 = arith.constant 0 : index
    %c0_49 = arith.constant 0 : index
    %39 = vector.load %arg2[%c2_46, %c0_47, %c0_48, %c0_49] : memref<3x3x16x32xbf16, #tpu.memory_space<vmem>>, vector<1x1x16x32xbf16>
    %40 = vector.shape_cast %39 : vector<1x1x16x32xbf16> to vector<16x32xbf16>
    %cst_50 = arith.constant dense<0.000000e+00> : vector<20x32xf32>
    %41 = tpu.matmul %38, %40, %cst_50 {dimension_numbers = #tpu.dot_dimension_numbers<[1], [0], [0], [1], [0, 0, 1, 1], [], []>} : vector<20x16xbf16>, vector<16x32xbf16>, vector<20x32xf32> -> vector<20x32xf32>
    %42 = arith.addf %36, %41 : vector<20x32xf32>
    %c1_51 = arith.constant 1 : index
    %c5_52 = arith.constant 5 : index
    %c0_53 = arith.constant 0 : index
    %43 = vector.load %arg1[%c1_51, %c5_52, %c0_53] : memref<4x26x16xbf16, #tpu.memory_space<vmem>>, vector<1x20x16xbf16>
    %44 = vector.shape_cast %43 : vector<1x20x16xbf16> to vector<20x16xbf16>
    %c2_54 = arith.constant 2 : index
    %c1_55 = arith.constant 1 : index
    %c0_56 = arith.constant 0 : index
    %c0_57 = arith.constant 0 : index
    %45 = vector.load %arg2[%c2_54, %c1_55, %c0_56, %c0_57] : memref<3x3x16x32xbf16, #tpu.memory_space<vmem>>, vector<1x1x16x32xbf16>
    %46 = vector.shape_cast %45 : vector<1x1x16x32xbf16> to vector<16x32xbf16>
    %cst_58 = arith.constant dense<0.000000e+00> : vector<20x32xf32>
    %47 = tpu.matmul %44, %46, %cst_58 {dimension_numbers = #tpu.dot_dimension_numbers<[1], [0], [0], [1], [0, 0, 1, 1], [], []>} : vector<20x16xbf16>, vector<16x32xbf16>, vector<20x32xf32> -> vector<20x32xf32>
    %48 = arith.addf %42, %47 : vector<20x32xf32>
    %c0_59 = arith.constant 0 : index
    %c6 = arith.constant 6 : index
    %c0_60 = arith.constant 0 : index
    %49 = vector.load %arg1[%c0_59, %c6, %c0_60] : memref<4x26x16xbf16, #tpu.memory_space<vmem>>, vector<1x20x16xbf16>
    %50 = vector.shape_cast %49 : vector<1x20x16xbf16> to vector<20x16xbf16>
    %c2_61 = arith.constant 2 : index
    %c2_62 = arith.constant 2 : index
    %c0_63 = arith.constant 0 : index
    %c0_64 = arith.constant 0 : index
    %51 = vector.load %arg2[%c2_61, %c2_62, %c0_63, %c0_64] : memref<3x3x16x32xbf16, #tpu.memory_space<vmem>>, vector<1x1x16x32xbf16>
    %52 = vector.shape_cast %51 : vector<1x1x16x32xbf16> to vector<16x32xbf16>
    %cst_65 = arith.constant dense<0.000000e+00> : vector<20x32xf32>
    %53 = tpu.matmul %50, %52, %cst_65 {dimension_numbers = #tpu.dot_dimension_numbers<[1], [0], [0], [1], [0, 0, 1, 1], [], []>} : vector<20x16xbf16>, vector<16x32xbf16>, vector<20x32xf32> -> vector<20x32xf32>
    %54 = arith.addf %48, %53 : vector<20x32xf32>
    %c0_66 = arith.constant 0 : index
    %c0_67 = arith.constant 0 : index
    %55 = vector.load %arg3[%c0_66, %c0_67] : memref<1x32xf32, #tpu.memory_space<vmem>>, vector<1x32xf32>
    %56 = vector.broadcast %55 : vector<1x32xf32> to vector<20x32xf32>
    %57 = arith.addf %54, %56 : vector<20x32xf32>
    %cst_68 = arith.constant 0.000000e+00 : f32
    %58 = vector.broadcast %cst_68 : f32 to vector<20x32xf32>
    %59 = arith.cmpf oge, %57, %58 : vector<20x32xf32>
    %cst_69 = arith.constant 2.000000e-01 : f32
    %60 = vector.broadcast %cst_69 : f32 to vector<20x32xf32>
    %61 = arith.mulf %60, %57 : vector<20x32xf32>
    %62 = arith.select %59, %57, %61 : vector<20x32xi1>, vector<20x32xf32>
    %63 = arith.truncf %62 : vector<20x32xf32> to vector<20x32xbf16>
    %c0_70 = arith.constant 0 : index
    %c0_71 = arith.constant 0 : index
    %c0_72 = arith.constant 0 : index
    %64 = vector.load %arg4[%c0_70, %c0_71, %c0_72] : memref<1x20x32xbf16, #tpu.memory_space<vmem>>, vector<1x20x32xbf16>
    %65 = vector.shape_cast %64 : vector<1x20x32xbf16> to vector<20x32xbf16>
    %66 = vector.shape_cast %63 : vector<20x32xbf16> to vector<1x20x32xbf16>
    tpu.vector_store %arg4[%c0_70, %c0_71, %c0_72], %66 {strides = array<i32>} : memref<1x20x32xbf16, #tpu.memory_space<vmem>>, vector<1x20x32xbf16>,
    return
  }
  func.func @transform_0(%arg0: i32) -> (i32, i32, i32) {
    %c0_i32 = arith.constant 0 : i32
    %c0_i32_0 = arith.constant 0 : i32
    %c0_i32_1 = arith.constant 0 : i32
    return %arg0, %c0_i32, %c0_i32_0 : i32, i32, i32
  }
  func.func @transform_1(%arg0: i32) -> (i32, i32, i32, i32) {
    %c0_i32 = arith.constant 0 : i32
    %c0_i32_0 = arith.constant 0 : i32
    %c0_i32_1 = arith.constant 0 : i32
    %c0_i32_2 = arith.constant 0 : i32
    %c0_i32_3 = arith.constant 0 : i32
    return %c0_i32, %c0_i32_0, %c0_i32_1, %c0_i32_2 : i32, i32, i32, i32
  }
  func.func @transform_2(%arg0: i32) -> (i32, i32) {
    %c0_i32 = arith.constant 0 : i32
    %c0_i32_0 = arith.constant 0 : i32
    %c0_i32_1 = arith.constant 0 : i32
    return %c0_i32, %c0_i32_0 : i32, i32
  }
  func.func @transform_3(%arg0: i32) -> (i32, i32, i32) {
    %c0_i32 = arith.constant 0 : i32
    %c0_i32_0 = arith.constant 0 : i32
    %c0_i32_1 = arith.constant 0 : i32
    return %arg0, %c0_i32, %c0_i32_0 : i32, i32, i32
  }
}

module attributes {stable_mosaic.version = 11 : i64} {
  func.func @kernel(%arg0: i32, %arg1: memref<4x10x32xbf16, #tpu.memory_space<vmem>>, %arg2: memref<3x3x32x64xbf16, #tpu.memory_space<vmem>>, %arg3: memref<1x64xf32, #tpu.memory_space<vmem>>, %arg4: memref<1x6x64xbf16, #tpu.memory_space<vmem>>) attributes {dimension_semantics = [#tpu.dimension_semantics<parallel>], iteration_bounds = array<i64: 2>, scalar_prefetch = 0 : i64, scratch_operands = 0 : i64, tpu.core_type = #tpu.core_type<tc>, window_params = [{transform_indices = @transform_0, window_bounds = array<i64: 4, 10, 32>}, {pipeline_mode = #tpu.pipeline_mode<synchronous>, transform_indices = @transform_1, window_bounds = array<i64: 3, 3, 32, 64>}, {pipeline_mode = #tpu.pipeline_mode<synchronous>, transform_indices = @transform_2, window_bounds = array<i64: 1, 64>}, {transform_indices = @transform_3, window_bounds = array<i64: 1, 6, 64>}]} {
    %cst = arith.constant 0.000000e+00 : f32
    %0 = vector.broadcast %cst : f32 to vector<6x64xf32>
    %c0 = arith.constant 0 : index
    %c0_0 = arith.constant 0 : index
    %c0_1 = arith.constant 0 : index
    %1 = vector.load %arg1[%c0, %c0_0, %c0_1] : memref<4x10x32xbf16, #tpu.memory_space<vmem>>, vector<1x6x32xbf16>
    %2 = vector.shape_cast %1 : vector<1x6x32xbf16> to vector<6x32xbf16>
    %c0_2 = arith.constant 0 : index
    %c0_3 = arith.constant 0 : index
    %c0_4 = arith.constant 0 : index
    %c0_5 = arith.constant 0 : index
    %3 = vector.load %arg2[%c0_2, %c0_3, %c0_4, %c0_5] : memref<3x3x32x64xbf16, #tpu.memory_space<vmem>>, vector<1x1x32x64xbf16>
    %4 = vector.shape_cast %3 : vector<1x1x32x64xbf16> to vector<32x64xbf16>
    %cst_6 = arith.constant dense<0.000000e+00> : vector<6x64xf32>
    %5 = tpu.matmul %2, %4, %cst_6 {dimension_numbers = #tpu.dot_dimension_numbers<[1], [0], [0], [1], [0, 0, 1, 1], [], []>} : vector<6x32xbf16>, vector<32x64xbf16>, vector<6x64xf32> -> vector<6x64xf32>
    %6 = arith.addf %0, %5 : vector<6x64xf32>
    %c1 = arith.constant 1 : index
    %c0_7 = arith.constant 0 : index
    %c0_8 = arith.constant 0 : index
    %7 = vector.load %arg1[%c1, %c0_7, %c0_8] : memref<4x10x32xbf16, #tpu.memory_space<vmem>>, vector<1x6x32xbf16>
    %8 = vector.shape_cast %7 : vector<1x6x32xbf16> to vector<6x32xbf16>
    %c0_9 = arith.constant 0 : index
    %c1_10 = arith.constant 1 : index
    %c0_11 = arith.constant 0 : index
    %c0_12 = arith.constant 0 : index
    %9 = vector.load %arg2[%c0_9, %c1_10, %c0_11, %c0_12] : memref<3x3x32x64xbf16, #tpu.memory_space<vmem>>, vector<1x1x32x64xbf16>
    %10 = vector.shape_cast %9 : vector<1x1x32x64xbf16> to vector<32x64xbf16>
    %cst_13 = arith.constant dense<0.000000e+00> : vector<6x64xf32>
    %11 = tpu.matmul %8, %10, %cst_13 {dimension_numbers = #tpu.dot_dimension_numbers<[1], [0], [0], [1], [0, 0, 1, 1], [], []>} : vector<6x32xbf16>, vector<32x64xbf16>, vector<6x64xf32> -> vector<6x64xf32>
    %12 = arith.addf %6, %11 : vector<6x64xf32>
    %c0_14 = arith.constant 0 : index
    %c1_15 = arith.constant 1 : index
    %c0_16 = arith.constant 0 : index
    %13 = vector.load %arg1[%c0_14, %c1_15, %c0_16] : memref<4x10x32xbf16, #tpu.memory_space<vmem>>, vector<1x6x32xbf16>
    %14 = vector.shape_cast %13 : vector<1x6x32xbf16> to vector<6x32xbf16>
    %c0_17 = arith.constant 0 : index
    %c2 = arith.constant 2 : index
    %c0_18 = arith.constant 0 : index
    %c0_19 = arith.constant 0 : index
    %15 = vector.load %arg2[%c0_17, %c2, %c0_18, %c0_19] : memref<3x3x32x64xbf16, #tpu.memory_space<vmem>>, vector<1x1x32x64xbf16>
    %16 = vector.shape_cast %15 : vector<1x1x32x64xbf16> to vector<32x64xbf16>
    %cst_20 = arith.constant dense<0.000000e+00> : vector<6x64xf32>
    %17 = tpu.matmul %14, %16, %cst_20 {dimension_numbers = #tpu.dot_dimension_numbers<[1], [0], [0], [1], [0, 0, 1, 1], [], []>} : vector<6x32xbf16>, vector<32x64xbf16>, vector<6x64xf32> -> vector<6x64xf32>
    %18 = arith.addf %12, %17 : vector<6x64xf32>
    %c2_21 = arith.constant 2 : index
    %c0_22 = arith.constant 0 : index
    %c0_23 = arith.constant 0 : index
    %19 = vector.load %arg1[%c2_21, %c0_22, %c0_23] : memref<4x10x32xbf16, #tpu.memory_space<vmem>>, vector<1x6x32xbf16>
    %20 = vector.shape_cast %19 : vector<1x6x32xbf16> to vector<6x32xbf16>
    %c1_24 = arith.constant 1 : index
    %c0_25 = arith.constant 0 : index
    %c0_26 = arith.constant 0 : index
    %c0_27 = arith.constant 0 : index
    %21 = vector.load %arg2[%c1_24, %c0_25, %c0_26, %c0_27] : memref<3x3x32x64xbf16, #tpu.memory_space<vmem>>, vector<1x1x32x64xbf16>
    %22 = vector.shape_cast %21 : vector<1x1x32x64xbf16> to vector<32x64xbf16>
    %cst_28 = arith.constant dense<0.000000e+00> : vector<6x64xf32>
    %23 = tpu.matmul %20, %22, %cst_28 {dimension_numbers = #tpu.dot_dimension_numbers<[1], [0], [0], [1], [0, 0, 1, 1], [], []>} : vector<6x32xbf16>, vector<32x64xbf16>, vector<6x64xf32> -> vector<6x64xf32>
    %24 = arith.addf %18, %23 : vector<6x64xf32>
    %c3 = arith.constant 3 : index
    %c0_29 = arith.constant 0 : index
    %c0_30 = arith.constant 0 : index
    %25 = vector.load %arg1[%c3, %c0_29, %c0_30] : memref<4x10x32xbf16, #tpu.memory_space<vmem>>, vector<1x6x32xbf16>
    %26 = vector.shape_cast %25 : vector<1x6x32xbf16> to vector<6x32xbf16>
    %c1_31 = arith.constant 1 : index
    %c1_32 = arith.constant 1 : index
    %c0_33 = arith.constant 0 : index
    %c0_34 = arith.constant 0 : index
    %27 = vector.load %arg2[%c1_31, %c1_32, %c0_33, %c0_34] : memref<3x3x32x64xbf16, #tpu.memory_space<vmem>>, vector<1x1x32x64xbf16>
    %28 = vector.shape_cast %27 : vector<1x1x32x64xbf16> to vector<32x64xbf16>
    %cst_35 = arith.constant dense<0.000000e+00> : vector<6x64xf32>
    %29 = tpu.matmul %26, %28, %cst_35 {dimension_numbers = #tpu.dot_dimension_numbers<[1], [0], [0], [1], [0, 0, 1, 1], [], []>} : vector<6x32xbf16>, vector<32x64xbf16>, vector<6x64xf32> -> vector<6x64xf32>
    %30 = arith.addf %24, %29 : vector<6x64xf32>
    %c2_36 = arith.constant 2 : index
    %c1_37 = arith.constant 1 : index
    %c0_38 = arith.constant 0 : index
    %31 = vector.load %arg1[%c2_36, %c1_37, %c0_38] : memref<4x10x32xbf16, #tpu.memory_space<vmem>>, vector<1x6x32xbf16>
    %32 = vector.shape_cast %31 : vector<1x6x32xbf16> to vector<6x32xbf16>
    %c1_39 = arith.constant 1 : index
    %c2_40 = arith.constant 2 : index
    %c0_41 = arith.constant 0 : index
    %c0_42 = arith.constant 0 : index
    %33 = vector.load %arg2[%c1_39, %c2_40, %c0_41, %c0_42] : memref<3x3x32x64xbf16, #tpu.memory_space<vmem>>, vector<1x1x32x64xbf16>
    %34 = vector.shape_cast %33 : vector<1x1x32x64xbf16> to vector<32x64xbf16>
    %cst_43 = arith.constant dense<0.000000e+00> : vector<6x64xf32>
    %35 = tpu.matmul %32, %34, %cst_43 {dimension_numbers = #tpu.dot_dimension_numbers<[1], [0], [0], [1], [0, 0, 1, 1], [], []>} : vector<6x32xbf16>, vector<32x64xbf16>, vector<6x64xf32> -> vector<6x64xf32>
    %36 = arith.addf %30, %35 : vector<6x64xf32>
    %c0_44 = arith.constant 0 : index
    %c3_45 = arith.constant 3 : index
    %c0_46 = arith.constant 0 : index
    %37 = vector.load %arg1[%c0_44, %c3_45, %c0_46] : memref<4x10x32xbf16, #tpu.memory_space<vmem>>, vector<1x6x32xbf16>
    %38 = vector.shape_cast %37 : vector<1x6x32xbf16> to vector<6x32xbf16>
    %c2_47 = arith.constant 2 : index
    %c0_48 = arith.constant 0 : index
    %c0_49 = arith.constant 0 : index
    %c0_50 = arith.constant 0 : index
    %39 = vector.load %arg2[%c2_47, %c0_48, %c0_49, %c0_50] : memref<3x3x32x64xbf16, #tpu.memory_space<vmem>>, vector<1x1x32x64xbf16>
    %40 = vector.shape_cast %39 : vector<1x1x32x64xbf16> to vector<32x64xbf16>
    %cst_51 = arith.constant dense<0.000000e+00> : vector<6x64xf32>
    %41 = tpu.matmul %38, %40, %cst_51 {dimension_numbers = #tpu.dot_dimension_numbers<[1], [0], [0], [1], [0, 0, 1, 1], [], []>} : vector<6x32xbf16>, vector<32x64xbf16>, vector<6x64xf32> -> vector<6x64xf32>
    %42 = arith.addf %36, %41 : vector<6x64xf32>
    %c1_52 = arith.constant 1 : index
    %c3_53 = arith.constant 3 : index
    %c0_54 = arith.constant 0 : index
    %43 = vector.load %arg1[%c1_52, %c3_53, %c0_54] : memref<4x10x32xbf16, #tpu.memory_space<vmem>>, vector<1x6x32xbf16>
    %44 = vector.shape_cast %43 : vector<1x6x32xbf16> to vector<6x32xbf16>
    %c2_55 = arith.constant 2 : index
    %c1_56 = arith.constant 1 : index
    %c0_57 = arith.constant 0 : index
    %c0_58 = arith.constant 0 : index
    %45 = vector.load %arg2[%c2_55, %c1_56, %c0_57, %c0_58] : memref<3x3x32x64xbf16, #tpu.memory_space<vmem>>, vector<1x1x32x64xbf16>
    %46 = vector.shape_cast %45 : vector<1x1x32x64xbf16> to vector<32x64xbf16>
    %cst_59 = arith.constant dense<0.000000e+00> : vector<6x64xf32>
    %47 = tpu.matmul %44, %46, %cst_59 {dimension_numbers = #tpu.dot_dimension_numbers<[1], [0], [0], [1], [0, 0, 1, 1], [], []>} : vector<6x32xbf16>, vector<32x64xbf16>, vector<6x64xf32> -> vector<6x64xf32>
    %48 = arith.addf %42, %47 : vector<6x64xf32>
    %c0_60 = arith.constant 0 : index
    %c4 = arith.constant 4 : index
    %c0_61 = arith.constant 0 : index
    %49 = vector.load %arg1[%c0_60, %c4, %c0_61] : memref<4x10x32xbf16, #tpu.memory_space<vmem>>, vector<1x6x32xbf16>
    %50 = vector.shape_cast %49 : vector<1x6x32xbf16> to vector<6x32xbf16>
    %c2_62 = arith.constant 2 : index
    %c2_63 = arith.constant 2 : index
    %c0_64 = arith.constant 0 : index
    %c0_65 = arith.constant 0 : index
    %51 = vector.load %arg2[%c2_62, %c2_63, %c0_64, %c0_65] : memref<3x3x32x64xbf16, #tpu.memory_space<vmem>>, vector<1x1x32x64xbf16>
    %52 = vector.shape_cast %51 : vector<1x1x32x64xbf16> to vector<32x64xbf16>
    %cst_66 = arith.constant dense<0.000000e+00> : vector<6x64xf32>
    %53 = tpu.matmul %50, %52, %cst_66 {dimension_numbers = #tpu.dot_dimension_numbers<[1], [0], [0], [1], [0, 0, 1, 1], [], []>} : vector<6x32xbf16>, vector<32x64xbf16>, vector<6x64xf32> -> vector<6x64xf32>
    %54 = arith.addf %48, %53 : vector<6x64xf32>
    %c0_67 = arith.constant 0 : index
    %c0_68 = arith.constant 0 : index
    %55 = vector.load %arg3[%c0_67, %c0_68] : memref<1x64xf32, #tpu.memory_space<vmem>>, vector<1x64xf32>
    %56 = vector.broadcast %55 : vector<1x64xf32> to vector<6x64xf32>
    %57 = arith.addf %54, %56 : vector<6x64xf32>
    %cst_69 = arith.constant 0.000000e+00 : f32
    %58 = vector.broadcast %cst_69 : f32 to vector<6x64xf32>
    %59 = arith.cmpf oge, %57, %58 : vector<6x64xf32>
    %cst_70 = arith.constant 2.000000e-01 : f32
    %60 = vector.broadcast %cst_70 : f32 to vector<6x64xf32>
    %61 = arith.mulf %60, %57 : vector<6x64xf32>
    %62 = arith.select %59, %57, %61 : vector<6x64xi1>, vector<6x64xf32>
    %63 = arith.truncf %62 : vector<6x64xf32> to vector<6x64xbf16>
    %c0_71 = arith.constant 0 : index
    %c0_72 = arith.constant 0 : index
    %c0_73 = arith.constant 0 : index
    %64 = vector.load %arg4[%c0_71, %c0_72, %c0_73] : memref<1x6x64xbf16, #tpu.memory_space<vmem>>, vector<1x6x64xbf16>
    %65 = vector.shape_cast %64 : vector<1x6x64xbf16> to vector<6x64xbf16>
    %66 = vector.shape_cast %63 : vector<6x64xbf16> to vector<1x6x64xbf16>
    tpu.vector_store %arg4[%c0_71, %c0_72, %c0_73], %66 {strides = array<i32>} : memref<1x6x64xbf16, #tpu.memory_space<vmem>>, vector<1x6x64xbf16>,
    return
  }
  func.func @transform_0(%arg0: i32) -> (i32, i32, i32) {
    %c0_i32 = arith.constant 0 : i32
    %c0_i32_0 = arith.constant 0 : i32
    %c0_i32_1 = arith.constant 0 : i32
    return %arg0, %c0_i32, %c0_i32_0 : i32, i32, i32
  }
  func.func @transform_1(%arg0: i32) -> (i32, i32, i32, i32) {
    %c0_i32 = arith.constant 0 : i32
    %c0_i32_0 = arith.constant 0 : i32
    %c0_i32_1 = arith.constant 0 : i32
    %c0_i32_2 = arith.constant 0 : i32
    %c0_i32_3 = arith.constant 0 : i32
    return %c0_i32, %c0_i32_0, %c0_i32_1, %c0_i32_2 : i32, i32, i32, i32
  }
  func.func @transform_2(%arg0: i32) -> (i32, i32) {
    %c0_i32 = arith.constant 0 : i32
    %c0_i32_0 = arith.constant 0 : i32
    %c0_i32_1 = arith.constant 0 : i32
    return %c0_i32, %c0_i32_0 : i32, i32
  }
  func.func @transform_3(%arg0: i32) -> (i32, i32, i32) {
    %c0_i32 = arith.constant 0 : i32
    %c0_i32_0 = arith.constant 0 : i32
    %c0_i32_1 = arith.constant 0 : i32
    return %arg0, %c0_i32, %c0_i32_0 : i32, i32, i32
  }
}

module attributes {stable_mosaic.version = 11 : i64} {
  func.func @kernel(%arg0: i32, %arg1: memref<1x18x64xbf16, #tpu.memory_space<vmem>>, %arg2: memref<3x3x64x128xbf16, #tpu.memory_space<vmem>>, %arg3: memref<1x128xf32, #tpu.memory_space<vmem>>, %arg4: memref<1x8x128xbf16, #tpu.memory_space<vmem>>) attributes {dimension_semantics = [#tpu.dimension_semantics<parallel>], iteration_bounds = array<i64: 2>, scalar_prefetch = 0 : i64, scratch_operands = 0 : i64, tpu.core_type = #tpu.core_type<tc>, window_params = [{transform_indices = @transform_0, window_bounds = array<i64: 1, 18, 64>}, {pipeline_mode = #tpu.pipeline_mode<synchronous>, transform_indices = @transform_1, window_bounds = array<i64: 3, 3, 64, 128>}, {pipeline_mode = #tpu.pipeline_mode<synchronous>, transform_indices = @transform_2, window_bounds = array<i64: 1, 128>}, {transform_indices = @transform_3, window_bounds = array<i64: 1, 8, 128>}]} {
    %cst = arith.constant 0.000000e+00 : f32
    %0 = vector.broadcast %cst : f32 to vector<8x128xf32>
    %c0 = arith.constant 0 : index
    %c0_0 = arith.constant 0 : index
    %c0_1 = arith.constant 0 : index
    %1 = vector.load %arg1[%c0, %c0_0, %c0_1] : memref<1x18x64xbf16, #tpu.memory_space<vmem>>, vector<1x8x64xbf16>
    %2 = vector.shape_cast %1 : vector<1x8x64xbf16> to vector<8x64xbf16>
    %c0_2 = arith.constant 0 : index
    %c0_3 = arith.constant 0 : index
    %c0_4 = arith.constant 0 : index
    %c0_5 = arith.constant 0 : index
    %3 = vector.load %arg2[%c0_2, %c0_3, %c0_4, %c0_5] : memref<3x3x64x128xbf16, #tpu.memory_space<vmem>>, vector<1x1x64x128xbf16>
    %4 = vector.shape_cast %3 : vector<1x1x64x128xbf16> to vector<64x128xbf16>
    %cst_6 = arith.constant dense<0.000000e+00> : vector<8x128xf32>
    %5 = tpu.matmul %2, %4, %cst_6 {dimension_numbers = #tpu.dot_dimension_numbers<[1], [0], [0], [1], [0, 0, 1, 1], [], []>} : vector<8x64xbf16>, vector<64x128xbf16>, vector<8x128xf32> -> vector<8x128xf32>
    %6 = arith.addf %0, %5 : vector<8x128xf32>
    %c0_7 = arith.constant 0 : index
    %c1 = arith.constant 1 : index
    %c0_8 = arith.constant 0 : index
    %7 = vector.load %arg1[%c0_7, %c1, %c0_8] : memref<1x18x64xbf16, #tpu.memory_space<vmem>>, vector<1x8x64xbf16>
    %8 = vector.shape_cast %7 : vector<1x8x64xbf16> to vector<8x64xbf16>
    %c0_9 = arith.constant 0 : index
    %c1_10 = arith.constant 1 : index
    %c0_11 = arith.constant 0 : index
    %c0_12 = arith.constant 0 : index
    %9 = vector.load %arg2[%c0_9, %c1_10, %c0_11, %c0_12] : memref<3x3x64x128xbf16, #tpu.memory_space<vmem>>, vector<1x1x64x128xbf16>
    %10 = vector.shape_cast %9 : vector<1x1x64x128xbf16> to vector<64x128xbf16>
    %cst_13 = arith.constant dense<0.000000e+00> : vector<8x128xf32>
    %11 = tpu.matmul %8, %10, %cst_13 {dimension_numbers = #tpu.dot_dimension_numbers<[1], [0], [0], [1], [0, 0, 1, 1], [], []>} : vector<8x64xbf16>, vector<64x128xbf16>, vector<8x128xf32> -> vector<8x128xf32>
    %12 = arith.addf %6, %11 : vector<8x128xf32>
    %c0_14 = arith.constant 0 : index
    %c2 = arith.constant 2 : index
    %c0_15 = arith.constant 0 : index
    %13 = vector.load %arg1[%c0_14, %c2, %c0_15] : memref<1x18x64xbf16, #tpu.memory_space<vmem>>, vector<1x8x64xbf16>
    %14 = vector.shape_cast %13 : vector<1x8x64xbf16> to vector<8x64xbf16>
    %c0_16 = arith.constant 0 : index
    %c2_17 = arith.constant 2 : index
    %c0_18 = arith.constant 0 : index
    %c0_19 = arith.constant 0 : index
    %15 = vector.load %arg2[%c0_16, %c2_17, %c0_18, %c0_19] : memref<3x3x64x128xbf16, #tpu.memory_space<vmem>>, vector<1x1x64x128xbf16>
    %16 = vector.shape_cast %15 : vector<1x1x64x128xbf16> to vector<64x128xbf16>
    %cst_20 = arith.constant dense<0.000000e+00> : vector<8x128xf32>
    %17 = tpu.matmul %14, %16, %cst_20 {dimension_numbers = #tpu.dot_dimension_numbers<[1], [0], [0], [1], [0, 0, 1, 1], [], []>} : vector<8x64xbf16>, vector<64x128xbf16>, vector<8x128xf32> -> vector<8x128xf32>
    %18 = arith.addf %12, %17 : vector<8x128xf32>
    %c0_21 = arith.constant 0 : index
    %c4 = arith.constant 4 : index
    %c0_22 = arith.constant 0 : index
    %19 = vector.load %arg1[%c0_21, %c4, %c0_22] : memref<1x18x64xbf16, #tpu.memory_space<vmem>>, vector<1x8x64xbf16>
    %20 = vector.shape_cast %19 : vector<1x8x64xbf16> to vector<8x64xbf16>
    %c1_23 = arith.constant 1 : index
    %c0_24 = arith.constant 0 : index
    %c0_25 = arith.constant 0 : index
    %c0_26 = arith.constant 0 : index
    %21 = vector.load %arg2[%c1_23, %c0_24, %c0_25, %c0_26] : memref<3x3x64x128xbf16, #tpu.memory_space<vmem>>, vector<1x1x64x128xbf16>
    %22 = vector.shape_cast %21 : vector<1x1x64x128xbf16> to vector<64x128xbf16>
    %cst_27 = arith.constant dense<0.000000e+00> : vector<8x128xf32>
    %23 = tpu.matmul %20, %22, %cst_27 {dimension_numbers = #tpu.dot_dimension_numbers<[1], [0], [0], [1], [0, 0, 1, 1], [], []>} : vector<8x64xbf16>, vector<64x128xbf16>, vector<8x128xf32> -> vector<8x128xf32>
    %24 = arith.addf %18, %23 : vector<8x128xf32>
    %c0_28 = arith.constant 0 : index
    %c5 = arith.constant 5 : index
    %c0_29 = arith.constant 0 : index
    %25 = vector.load %arg1[%c0_28, %c5, %c0_29] : memref<1x18x64xbf16, #tpu.memory_space<vmem>>, vector<1x8x64xbf16>
    %26 = vector.shape_cast %25 : vector<1x8x64xbf16> to vector<8x64xbf16>
    %c1_30 = arith.constant 1 : index
    %c1_31 = arith.constant 1 : index
    %c0_32 = arith.constant 0 : index
    %c0_33 = arith.constant 0 : index
    %27 = vector.load %arg2[%c1_30, %c1_31, %c0_32, %c0_33] : memref<3x3x64x128xbf16, #tpu.memory_space<vmem>>, vector<1x1x64x128xbf16>
    %28 = vector.shape_cast %27 : vector<1x1x64x128xbf16> to vector<64x128xbf16>
    %cst_34 = arith.constant dense<0.000000e+00> : vector<8x128xf32>
    %29 = tpu.matmul %26, %28, %cst_34 {dimension_numbers = #tpu.dot_dimension_numbers<[1], [0], [0], [1], [0, 0, 1, 1], [], []>} : vector<8x64xbf16>, vector<64x128xbf16>, vector<8x128xf32> -> vector<8x128xf32>
    %30 = arith.addf %24, %29 : vector<8x128xf32>
    %c0_35 = arith.constant 0 : index
    %c6 = arith.constant 6 : index
    %c0_36 = arith.constant 0 : index
    %31 = vector.load %arg1[%c0_35, %c6, %c0_36] : memref<1x18x64xbf16, #tpu.memory_space<vmem>>, vector<1x8x64xbf16>
    %32 = vector.shape_cast %31 : vector<1x8x64xbf16> to vector<8x64xbf16>
    %c1_37 = arith.constant 1 : index
    %c2_38 = arith.constant 2 : index
    %c0_39 = arith.constant 0 : index
    %c0_40 = arith.constant 0 : index
    %33 = vector.load %arg2[%c1_37, %c2_38, %c0_39, %c0_40] : memref<3x3x64x128xbf16, #tpu.memory_space<vmem>>, vector<1x1x64x128xbf16>
    %34 = vector.shape_cast %33 : vector<1x1x64x128xbf16> to vector<64x128xbf16>
    %cst_41 = arith.constant dense<0.000000e+00> : vector<8x128xf32>
    %35 = tpu.matmul %32, %34, %cst_41 {dimension_numbers = #tpu.dot_dimension_numbers<[1], [0], [0], [1], [0, 0, 1, 1], [], []>} : vector<8x64xbf16>, vector<64x128xbf16>, vector<8x128xf32> -> vector<8x128xf32>
    %36 = arith.addf %30, %35 : vector<8x128xf32>
    %c0_42 = arith.constant 0 : index
    %c8 = arith.constant 8 : index
    %c0_43 = arith.constant 0 : index
    %37 = vector.load %arg1[%c0_42, %c8, %c0_43] : memref<1x18x64xbf16, #tpu.memory_space<vmem>>, vector<1x8x64xbf16>
    %38 = vector.shape_cast %37 : vector<1x8x64xbf16> to vector<8x64xbf16>
    %c2_44 = arith.constant 2 : index
    %c0_45 = arith.constant 0 : index
    %c0_46 = arith.constant 0 : index
    %c0_47 = arith.constant 0 : index
    %39 = vector.load %arg2[%c2_44, %c0_45, %c0_46, %c0_47] : memref<3x3x64x128xbf16, #tpu.memory_space<vmem>>, vector<1x1x64x128xbf16>
    %40 = vector.shape_cast %39 : vector<1x1x64x128xbf16> to vector<64x128xbf16>
    %cst_48 = arith.constant dense<0.000000e+00> : vector<8x128xf32>
    %41 = tpu.matmul %38, %40, %cst_48 {dimension_numbers = #tpu.dot_dimension_numbers<[1], [0], [0], [1], [0, 0, 1, 1], [], []>} : vector<8x64xbf16>, vector<64x128xbf16>, vector<8x128xf32> -> vector<8x128xf32>
    %42 = arith.addf %36, %41 : vector<8x128xf32>
    %c0_49 = arith.constant 0 : index
    %c9 = arith.constant 9 : index
    %c0_50 = arith.constant 0 : index
    %43 = vector.load %arg1[%c0_49, %c9, %c0_50] : memref<1x18x64xbf16, #tpu.memory_space<vmem>>, vector<1x8x64xbf16>
    %44 = vector.shape_cast %43 : vector<1x8x64xbf16> to vector<8x64xbf16>
    %c2_51 = arith.constant 2 : index
    %c1_52 = arith.constant 1 : index
    %c0_53 = arith.constant 0 : index
    %c0_54 = arith.constant 0 : index
    %45 = vector.load %arg2[%c2_51, %c1_52, %c0_53, %c0_54] : memref<3x3x64x128xbf16, #tpu.memory_space<vmem>>, vector<1x1x64x128xbf16>
    %46 = vector.shape_cast %45 : vector<1x1x64x128xbf16> to vector<64x128xbf16>
    %cst_55 = arith.constant dense<0.000000e+00> : vector<8x128xf32>
    %47 = tpu.matmul %44, %46, %cst_55 {dimension_numbers = #tpu.dot_dimension_numbers<[1], [0], [0], [1], [0, 0, 1, 1], [], []>} : vector<8x64xbf16>, vector<64x128xbf16>, vector<8x128xf32> -> vector<8x128xf32>
    %48 = arith.addf %42, %47 : vector<8x128xf32>
    %c0_56 = arith.constant 0 : index
    %c10 = arith.constant 10 : index
    %c0_57 = arith.constant 0 : index
    %49 = vector.load %arg1[%c0_56, %c10, %c0_57] : memref<1x18x64xbf16, #tpu.memory_space<vmem>>, vector<1x8x64xbf16>
    %50 = vector.shape_cast %49 : vector<1x8x64xbf16> to vector<8x64xbf16>
    %c2_58 = arith.constant 2 : index
    %c2_59 = arith.constant 2 : index
    %c0_60 = arith.constant 0 : index
    %c0_61 = arith.constant 0 : index
    %51 = vector.load %arg2[%c2_58, %c2_59, %c0_60, %c0_61] : memref<3x3x64x128xbf16, #tpu.memory_space<vmem>>, vector<1x1x64x128xbf16>
    %52 = vector.shape_cast %51 : vector<1x1x64x128xbf16> to vector<64x128xbf16>
    %cst_62 = arith.constant dense<0.000000e+00> : vector<8x128xf32>
    %53 = tpu.matmul %50, %52, %cst_62 {dimension_numbers = #tpu.dot_dimension_numbers<[1], [0], [0], [1], [0, 0, 1, 1], [], []>} : vector<8x64xbf16>, vector<64x128xbf16>, vector<8x128xf32> -> vector<8x128xf32>
    %54 = arith.addf %48, %53 : vector<8x128xf32>
    %c0_63 = arith.constant 0 : index
    %c0_64 = arith.constant 0 : index
    %55 = vector.load %arg3[%c0_63, %c0_64] : memref<1x128xf32, #tpu.memory_space<vmem>>, vector<1x128xf32>
    %56 = vector.broadcast %55 : vector<1x128xf32> to vector<8x128xf32>
    %57 = arith.addf %54, %56 : vector<8x128xf32>
    %cst_65 = arith.constant 0.000000e+00 : f32
    %58 = vector.broadcast %cst_65 : f32 to vector<8x128xf32>
    %59 = arith.cmpf oge, %57, %58 : vector<8x128xf32>
    %cst_66 = arith.constant 2.000000e-01 : f32
    %60 = vector.broadcast %cst_66 : f32 to vector<8x128xf32>
    %61 = arith.mulf %60, %57 : vector<8x128xf32>
    %62 = arith.select %59, %57, %61 : vector<8x128xi1>, vector<8x128xf32>
    %63 = arith.truncf %62 : vector<8x128xf32> to vector<8x128xbf16>
    %c0_67 = arith.constant 0 : index
    %c0_68 = arith.constant 0 : index
    %c0_69 = arith.constant 0 : index
    %64 = vector.load %arg4[%c0_67, %c0_68, %c0_69] : memref<1x8x128xbf16, #tpu.memory_space<vmem>>, vector<1x8x128xbf16>
    %65 = vector.shape_cast %64 : vector<1x8x128xbf16> to vector<8x128xbf16>
    %66 = vector.shape_cast %63 : vector<8x128xbf16> to vector<1x8x128xbf16>
    tpu.vector_store %arg4[%c0_67, %c0_68, %c0_69], %66 {strides = array<i32>} : memref<1x8x128xbf16, #tpu.memory_space<vmem>>, vector<1x8x128xbf16>,
    return
  }
  func.func @transform_0(%arg0: i32) -> (i32, i32, i32) {
    %c0_i32 = arith.constant 0 : i32
    %c0_i32_0 = arith.constant 0 : i32
    %c0_i32_1 = arith.constant 0 : i32
    return %arg0, %c0_i32, %c0_i32_0 : i32, i32, i32
  }
  func.func @transform_1(%arg0: i32) -> (i32, i32, i32, i32) {
    %c0_i32 = arith.constant 0 : i32
    %c0_i32_0 = arith.constant 0 : i32
    %c0_i32_1 = arith.constant 0 : i32
    %c0_i32_2 = arith.constant 0 : i32
    %c0_i32_3 = arith.constant 0 : i32
    return %c0_i32, %c0_i32_0, %c0_i32_1, %c0_i32_2 : i32, i32, i32, i32
  }
  func.func @transform_2(%arg0: i32) -> (i32, i32) {
    %c0_i32 = arith.constant 0 : i32
    %c0_i32_0 = arith.constant 0 : i32
    %c0_i32_1 = arith.constant 0 : i32
    return %c0_i32, %c0_i32_0 : i32, i32
  }
  func.func @transform_3(%arg0: i32) -> (i32, i32, i32) {
    %c0_i32 = arith.constant 0 : i32
    %c0_i32_0 = arith.constant 0 : i32
    %c0_i32_1 = arith.constant 0 : i32
    return %arg0, %c0_i32, %c0_i32_0 : i32, i32, i32
  }
}

module attributes {stable_mosaic.version = 11 : i64} {
  func.func @_linear_sigmoid_kernel(%arg0: i32, %arg1: memref<2x512xbf16, #tpu.memory_space<vmem>>, %arg2: memref<1x512xbf16, #tpu.memory_space<vmem>>, %arg3: memref<1x1xf32, #tpu.memory_space<vmem>>, %arg4: memref<2x1xf32, #tpu.memory_space<vmem>>, %arg5: memref<2x1xf32, #tpu.memory_space<vmem>>) attributes {dimension_semantics = [#tpu.dimension_semantics<arbitrary>], iteration_bounds = array<i64: 1>, scalar_prefetch = 0 : i64, scratch_operands = 1 : i64, tpu.core_type = #tpu.core_type<tc>, window_params = [{transform_indices = @transform_0, window_bounds = array<i64: 2, 512>}, {transform_indices = @transform_1, window_bounds = array<i64: 1, 512>}, {pipeline_mode = #tpu.pipeline_mode<synchronous>, transform_indices = @transform_2, window_bounds = array<i64: 1, 1>}, {pipeline_mode = #tpu.pipeline_mode<synchronous>, transform_indices = @transform_3, window_bounds = array<i64: 2, 1>}]} {
    %c0_i32 = arith.constant 0 : i32
    %0 = arith.cmpi eq, %arg0, %c0_i32 : i32
    %1 = arith.extui %0 : i1 to i32
    %c0_i32_0 = arith.constant 0 : i32
    %2 = arith.cmpi ne, %1, %c0_i32_0 : i32
    scf.if %2 {
      %cst_10 = arith.constant 0.000000e+00 : f32
      %17 = vector.broadcast %cst_10 : f32 to vector<2x1xf32>
      %c0_11 = arith.constant 0 : index
      %c0_12 = arith.constant 0 : index
      %18 = vector.load %arg5[%c0_11, %c0_12] : memref<2x1xf32, #tpu.memory_space<vmem>>, vector<2x1xf32>
      tpu.vector_store %arg5[%c0_11, %c0_12], %17 {strides = array<i32>} : memref<2x1xf32, #tpu.memory_space<vmem>>, vector<2x1xf32>,
    } else {
    }
    %c0 = arith.constant 0 : index
    %c0_1 = arith.constant 0 : index
    %3 = vector.load %arg1[%c0, %c0_1] : memref<2x512xbf16, #tpu.memory_space<vmem>>, vector<2x512xbf16>
    %4 = arith.extf %3 : vector<2x512xbf16> to vector<2x512xf32>
    %c0_2 = arith.constant 0 : index
    %c0_3 = arith.constant 0 : index
    %5 = vector.load %arg2[%c0_2, %c0_3] : memref<1x512xbf16, #tpu.memory_space<vmem>>, vector<1x512xbf16>
    %6 = arith.extf %5 : vector<1x512xbf16> to vector<1x512xf32>
    %c0_4 = arith.constant 0 : index
    %c0_5 = arith.constant 0 : index
    %7 = vector.load %arg5[%c0_4, %c0_5] : memref<2x1xf32, #tpu.memory_space<vmem>>, vector<2x1xf32>
    %8 = vector.broadcast %6 : vector<1x512xf32> to vector<2x512xf32>
    %9 = arith.mulf %4, %8 : vector<2x512xf32>
    %cst = arith.constant dense<0.000000e+00> : vector<2xf32>
    %10 = vector.multi_reduction <add>, %9, %cst [1] : vector<2x512xf32> to vector<2xf32>
    %11 = vector.shape_cast %10 : vector<2xf32> to vector<2x1xf32>
    %12 = arith.addf %7, %11 : vector<2x1xf32>
    %c0_6 = arith.constant 0 : index
    %c0_7 = arith.constant 0 : index
    %13 = vector.load %arg5[%c0_6, %c0_7] : memref<2x1xf32, #tpu.memory_space<vmem>>, vector<2x1xf32>
    tpu.vector_store %arg5[%c0_6, %c0_7], %12 {strides = array<i32>} : memref<2x1xf32, #tpu.memory_space<vmem>>, vector<2x1xf32>,
    %c0_i32_8 = arith.constant 0 : i32
    %14 = arith.cmpi eq, %arg0, %c0_i32_8 : i32
    %15 = arith.extui %14 : i1 to i32
    %c0_i32_9 = arith.constant 0 : i32
    %16 = arith.cmpi ne, %15, %c0_i32_9 : i32
    scf.if %16 {
      %c0_10 = arith.constant 0 : index
      %c0_11 = arith.constant 0 : index
      %17 = vector.load %arg5[%c0_10, %c0_11] : memref<2x1xf32, #tpu.memory_space<vmem>>, vector<2x1xf32>
      %c0_12 = arith.constant 0 : index
      %c0_13 = arith.constant 0 : index
      %18 = vector.load %arg3[%c0_12, %c0_13] : memref<1x1xf32, #tpu.memory_space<vmem>>, vector<1x1xf32>
      %19 = vector.broadcast %18 : vector<1x1xf32> to vector<2x1xf32>
      %20 = arith.addf %17, %19 : vector<2x1xf32>
      %cst_14 = arith.constant 0.000000e+00 : f32
      %21 = vector.broadcast %cst_14 : f32 to vector<2x1xf32>
      %22 = arith.subf %21, %20 : vector<2x1xf32>
      %23 = math.exp %22 : vector<2x1xf32>
      %cst_15 = arith.constant 1.000000e+00 : f32
      %24 = vector.broadcast %cst_15 : f32 to vector<2x1xf32>
      %25 = arith.addf %24, %23 : vector<2x1xf32>
      %cst_16 = arith.constant 1.000000e+00 : f32
      %26 = vector.broadcast %cst_16 : f32 to vector<2x1xf32>
      %27 = arith.divf %26, %25 : vector<2x1xf32>
      %c0_17 = arith.constant 0 : index
      %c0_18 = arith.constant 0 : index
      %28 = vector.load %arg4[%c0_17, %c0_18] : memref<2x1xf32, #tpu.memory_space<vmem>>, vector<2x1xf32>
      tpu.vector_store %arg4[%c0_17, %c0_18], %27 {strides = array<i32>} : memref<2x1xf32, #tpu.memory_space<vmem>>, vector<2x1xf32>,
    } else {
    }
    return
  }
  func.func @transform_0(%arg0: i32) -> (i32, i32) {
    %c0_i32 = arith.constant 0 : i32
    %c0_i32_0 = arith.constant 0 : i32
    return %c0_i32, %arg0 : i32, i32
  }
  func.func @transform_1(%arg0: i32) -> (i32, i32) {
    %c0_i32 = arith.constant 0 : i32
    %c0_i32_0 = arith.constant 0 : i32
    return %c0_i32, %arg0 : i32, i32
  }
  func.func @transform_2(%arg0: i32) -> (i32, i32) {
    %c0_i32 = arith.constant 0 : i32
    %c0_i32_0 = arith.constant 0 : i32
    %c0_i32_1 = arith.constant 0 : i32
    return %c0_i32, %c0_i32_0 : i32, i32
  }
  func.func @transform_3(%arg0: i32) -> (i32, i32) {
    %c0_i32 = arith.constant 0 : i32
    %c0_i32_0 = arith.constant 0 : i32
    %c0_i32_1 = arith.constant 0 : i32
    return %c0_i32, %c0_i32_0 : i32, i32
  }
}

</mosaic_0001>

<llo_original>
// kernel: _lambda_.5
$region0: #{_lambda_.5}
  #allocation0 [shape = 'u32[]', space=smem, size = 0x4, offset = 0x4, fixed_abs, tag = 'smem constant byte address 0x4 - core index']
  #allocation1 [shape = 'u32[72,128]{1,0:T(1,128)}', space=vmem, size = 0x9000, scoped, tag = 'internal scratch']
  %s0 = inlined_call_operand.vmem [shape: bf16[8,82,1], index: 0, kind: input, shape index: {}]
  %s1 = inlined_call_operand.vmem [shape: bf16[3,3,1,16], index: 1, kind: input, shape index: {}]
  %s2 = inlined_call_operand.vmem [shape: f32[1,16], index: 2, kind: input, shape index: {}]
  %s3 = inlined_call_operand.vmem [shape: bf16[2,72,16], index: 3, kind: output, shape index: {}]
  %s4 = sld [smem:[#allocation0]]
  $region45: #{_lambda_.5} parent=0
    _
  %s6 = ssub.s32 1, %s4
  %s7 = scalar_select 0, %s6, %s4
  loop: start=0, step=1, limit=4
  $region2: #{_lambda_.5} parent=0 // loop_pre_header
    _
  $region3: #{_lambda_.5} parent=0 // loop_header
    %s9 = sphi 0, %s13
    %p10 = scmp.ge.s32.totalorder %s9, 4
    %s19 = sphi 0, %s21
    %s22 = sphi 0, %s19
    %s23 = sphi 0, %s22
    %s39 = sphi 0, %s23
    %s43 = sphi 0, %s43
    %s45 = sphi 0, %s43
    %s46 = sphi 0, %s45
    %s60 = sphi 0, %s46
    %s64 = sphi 0, %s64
    %s66 = sphi 0, %s64
    %s67 = sphi 0, %s66
    %s81 = sphi 0, %s67
    %s87 = sphi 0, %s89
    %s90 = sphi 0, %s87
    %s91 = sphi 0, %s90
    %s107 = sphi 0, %s91
  $region4: #{_lambda_.5} parent=0 // loop_header_branch
    %12 = sbr.rel (%p10) target = $region8
  $region5: #{_lambda_.5} parent=0 // loop_body
    %s14 = ssub.s32 %s9, 1
    %s15 = ssub.s32 %s9, 2
    %s16 = sadd.s32 %s9, 1
    %s17 = ssub.s32 %s9, %s16
    %p18 = scmp.eq.s32.totalorder %s17, 0
    %s20 = sadd.s32 %s19, 1
    %s21 = scalar_select %p18, %s19, %s20
    %p24 = pneg %p18
    %p25 = scmp.eq.s32.totalorder %s9, 1
    %p26 = por %p24, %p25
    %p27 = scmp.ne.s32.totalorder %s19, %s22
    %p28 = scmp.eq.s32.totalorder %s9, 0
    %p29 = por %p27, %p28
    %p30 = scmp.ne.s32.totalorder %s19, %s22
    %p31 = scmp.eq.s32.totalorder %s14, 1
    %p32 = por %p30, %p31
    %p33 = scmp.ne.s32.totalorder %s22, %s23
    %p34 = scmp.eq.s32.totalorder %s14, 0
    %p35 = por %p33, %p34
    %p36 = scmp.ne.s32.totalorder %s22, %s23
    %p37 = scmp.eq.s32.totalorder %s15, 1
    %p38 = por %p36, %p37
    %p40 = scmp.ne.s32.totalorder %s23, %s39
    %p41 = scmp.eq.s32.totalorder %s15, 0
    %p42 = por %p40, %p41
    %s44 = sadd.s32 %s43, 1
    %p47 = scmp.eq.s32.totalorder %s9, 1
    %p48 = scmp.ne.s32.totalorder %s43, %s45
    %p49 = scmp.eq.s32.totalorder %s9, 0
    %p50 = por %p48, %p49
    %p51 = scmp.ne.s32.totalorder %s43, %s45
    %p52 = scmp.eq.s32.totalorder %s14, 1
    %p53 = por %p51, %p52
    %p54 = scmp.ne.s32.totalorder %s45, %s46
    %p55 = scmp.eq.s32.totalorder %s14, 0
    %p56 = por %p54, %p55
    %p57 = scmp.ne.s32.totalorder %s45, %s46
    %p58 = scmp.eq.s32.totalorder %s15, 1
    %p59 = por %p57, %p58
    %p61 = scmp.ne.s32.totalorder %s46, %s60
    %p62 = scmp.eq.s32.totalorder %s15, 0
    %p63 = por %p61, %p62
    %s65 = sadd.s32 %s64, 1
    %p68 = scmp.eq.s32.totalorder %s9, 1
    %p69 = scmp.ne.s32.totalorder %s64, %s66
    %p70 = scmp.eq.s32.totalorder %s9, 0
    %p71 = por %p69, %p70
    %p72 = scmp.ne.s32.totalorder %s64, %s66
    %p73 = scmp.eq.s32.totalorder %s14, 1
    %p74 = por %p72, %p73
    %p75 = scmp.ne.s32.totalorder %s66, %s67
    %p76 = scmp.eq.s32.totalorder %s14, 0
    %p77 = por %p75, %p76
    %p78 = scmp.ne.s32.totalorder %s66, %s67
    %p79 = scmp.eq.s32.totalorder %s15, 1
    %p80 = por %p78, %p79
    %p82 = scmp.ne.s32.totalorder %s67, %s81
    %p83 = scmp.eq.s32.totalorder %s15, 0
    %p84 = por %p82, %p83
    %s85 = ssub.s32 %s9, %s16
    %p86 = scmp.eq.s32.totalorder %s85, 0
    %s88 = sadd.s32 %s87, 1
    %s89 = scalar_select %p86, %s87, %s88
    %p92 = pneg %p86
    %p93 = scmp.eq.s32.totalorder %s9, 1
    %p94 = por %p92, %p93
    %p95 = scmp.ne.s32.totalorder %s87, %s90
    %p96 = scmp.eq.s32.totalorder %s9, 0
    %p97 = por %p95, %p96
    %p98 = scmp.ne.s32.totalorder %s87, %s90
    %p99 = scmp.eq.s32.totalorder %s14, 1
    %p100 = por %p98, %p99
    %p101 = scmp.ne.s32.totalorder %s90, %s91
    %p102 = scmp.eq.s32.totalorder %s14, 0
    %p103 = por %p101, %p102
    %p104 = scmp.ne.s32.totalorder %s90, %s91
    %p105 = scmp.eq.s32.totalorder %s15, 1
    %p106 = por %p104, %p105
    %p108 = scmp.ne.s32.totalorder %s91, %s107
    %p109 = scmp.eq.s32.totalorder %s15, 0
    %p110 = por %p108, %p109
    %p111 = scmp.le.s32.totalorder 1, %s9
    %p112 = scmp.lt.s32.totalorder %s9, 3
    %p113 = pnand %p111, %p112
    %p114 = pneg %p113
    // Predicated region
    $region9: #{_lambda_.5} parent=5 // pred_check
      _
    $region10: #{_lambda_.5} parent=5 // pred_check_branch
      %116 = sbr.rel (%p113) target = $region12
    $region11: #{_lambda_.5} parent=5 // pred_region
      %s117 = ssub.s32 %s9, 1
      // Predicated region
      $region13: #{_lambda_.5} parent=11 // pred_check
        %p118 = pneg %p56
      $region14: #{_lambda_.5} parent=11 // pred_check_branch
        %120 = sbr.rel (%p118) target = $region16
      $region15: #{_lambda_.5} parent=11 // pred_region
        _
      $region16: #{_lambda_.5} parent=11 // pred_fallthru
        _
      // Predicated region
      $region17: #{_lambda_.5} parent=11 // pred_check
        %p121 = pneg %p77
      $region18: #{_lambda_.5} parent=11 // pred_check_branch
        %123 = sbr.rel (%p121) target = $region20
      $region19: #{_lambda_.5} parent=11 // pred_region
        _
      $region20: #{_lambda_.5} parent=11 // pred_fallthru
        _
    $region12: #{_lambda_.5} parent=5 // pred_fallthru
      _
    %p124 = scmp.lt.s32.totalorder %s9, 2
    // Predicated region
    $region21: #{_lambda_.5} parent=5 // pred_check
      %p125 = pneg %p124
    $region22: #{_lambda_.5} parent=5 // pred_check_branch
      %127 = sbr.rel (%p125) target = $region24
    $region23: #{_lambda_.5} parent=5 // pred_region
      // Predicated region
      $region25: #{_lambda_.5} parent=23 // pred_check
        %p128 = pneg %p29
      $region26: #{_lambda_.5} parent=23 // pred_check_branch
        %130 = sbr.rel (%p128) target = $region28
      $region27: #{_lambda_.5} parent=23 // pred_region
        %s131 = smul.u32 4, %s9
        %p132 = scmp.lt.s32.totalorder %s131, 7
        %s133 = scalar_select %p132, %s131, 7
        %s134 = smul.addr %s133, 11
        %s135 = smul.addr %s134, 4
        %s136 = scalar_lea.vmem %s0, %s135
        %s137 = smul.u32 4, %s9
      $region28: #{_lambda_.5} parent=23 // pred_fallthru
        _
    $region24: #{_lambda_.5} parent=5 // pred_fallthru
      _
    %p138 = scmp.le.s32.totalorder 1, %s9
    %p139 = scmp.lt.s32.totalorder %s9, 3
    %p140 = pnand %p138, %p139
    %p141 = pneg %p140
    // Predicated region
    $region29: #{_lambda_.5} parent=5 // pred_check
      _
    $region30: #{_lambda_.5} parent=5 // pred_check_branch
      %143 = sbr.rel (%p140) target = $region32
    $region31: #{_lambda_.5} parent=5 // pred_region
      %s144 = ssub.s32 %s9, 1
      %s145 = smul.u32 4, %s14
      %p146 = scmp.lt.s32.totalorder %s145, 7
      %s147 = scalar_select %p146, %s145, 7
      %s148 = smul.addr %s147, 11
      %s149 = smul.addr %s148, 4
      %s150 = scalar_lea.vmem %s0, %s149
      %p151 = pneg %p35
      %p152 = pneg %p32
      %p153 = pneg %p56
      %p154 = pneg %p53
      %p155 = pneg %p77
      %p156 = pneg %p74
      %p157 = pneg %p103
      %p158 = pneg %p100
      %p159 = scmp.lt.s32.totalorder %s14, 1
      %s160 = scalar_select %p159, %s14, 1
      %s161 = smul.addr %s160, 9
      %s162 = smul.addr %s161, 4
      %s163 = scalar_lea.vmem %s3, %s162
      %s164 = smul.u32 4, %s14
      %p165 = scmp.lt.s32.totalorder %s164, 7
      %s166 = scalar_select %p165, %s164, 7
      %s167 = smul.addr %s166, 11
      %s168 = smul.addr %s167, 4
      %s169 = scalar_lea.vmem %s0, %s168
      %s170 = smul.u32 4, %s14
      %p171 = scmp.lt.s32.totalorder %s14, 1
      %s172 = scalar_select %p171, %s14, 1
      %s173 = smul.addr %s172, 9
      %s174 = smul.addr %s173, 4
      %s175 = scalar_lea.vmem %s3, %s174
      %v176 = vld [vmem:[%s169] sm:$0xf]
      %v177 = vld [vmem:[%s169 + $0x4] sm:$0xf]
      %v178 = vld [vmem:[%s169 + $0x8] sm:$0xf]
      %v179 = vld [vmem:[%s169 + $0xc] sm:$0xf]
      %v180 = vld [vmem:[%s169 + $0x10] sm:$0xf]
      %v181 = vld [vmem:[%s169 + $0x14] sm:$0xf]
      %v182 = vld [vmem:[%s169 + $0x18] sm:$0xf]
      %v183 = vld [vmem:[%s169 + $0x1c] sm:$0xf]
      %v184 = vld [vmem:[%s169 + $0x20] sm:$0xf]
      %v185 = vld [vmem:[%s1] sm:$0x1]
      %v186 = vunpack.c.l.bf16 %v176
      %v187 = vunpack.c.l.bf16 %v177
      %v188 = vunpack.c.l.bf16 %v178
      %v189 = vunpack.c.l.bf16 %v179
      %v190 = vunpack.c.l.bf16 %v180
      %v191 = vunpack.c.l.bf16 %v181
      %v192 = vunpack.c.l.bf16 %v182
      %v193 = vunpack.c.l.bf16 %v183
      %v194 = vunpack.c.l.bf16 %v184
      %v195 = vunpack.c.l.bf16 %v185
      %197 = vset.pattern.permute.xlu0 0
      %198 = vperm.xlu0 %197, %v186
      %v199 = vpop.permute.xlu0 %198
      %202 = vset.pattern.permute.xlu0 0
      %203 = vperm.xlu0 %202, %v187
      %v204 = vpop.permute.xlu0 %203
      %207 = vset.pattern.permute.xlu0 0
      %208 = vperm.xlu0 %207, %v188
      %v209 = vpop.permute.xlu0 %208
      %212 = vset.pattern.permute.xlu0 0
      %213 = vperm.xlu0 %212, %v189
      %v214 = vpop.permute.xlu0 %213
      %217 = vset.pattern.permute.xlu0 0
      %218 = vperm.xlu0 %217, %v190
      %v219 = vpop.permute.xlu0 %218
      %222 = vset.pattern.permute.xlu0 0
      %223 = vperm.xlu0 %222, %v191
      %v224 = vpop.permute.xlu0 %223
      %227 = vset.pattern.permute.xlu0 0
      %228 = vperm.xlu0 %227, %v192
      %v229 = vpop.permute.xlu0 %228
      %232 = vset.pattern.permute.xlu0 0
      %233 = vperm.xlu0 %232, %v193
      %v234 = vpop.permute.xlu0 %233
      %237 = vset.pattern.permute.xlu0 0
      %238 = vperm.xlu0 %237, %v194
      %v239 = vpop.permute.xlu0 %238
      %v241 = vperm.slane %v195, 0
      %v242 = vmul.f32 %v199, %v241
      %v243 = vmul.f32 %v204, %v241
      %v244 = vmul.f32 %v209, %v241
      %v245 = vmul.f32 %v214, %v241
      %v246 = vmul.f32 %v219, %v241
      %v247 = vmul.f32 %v224, %v241
      %v248 = vmul.f32 %v229, %v241
      %v249 = vmul.f32 %v234, %v241
      %v250 = vmul.f32 %v239, %v241
      %v251 = vadd.f32 %v242, 0.0
      %v252 = vadd.f32 %v243, 0.0
      %v253 = vadd.f32 %v244, 0.0
      %v254 = vadd.f32 %v245, 0.0
      %v255 = vadd.f32 %v246, 0.0
      %v256 = vadd.f32 %v247, 0.0
      %v257 = vadd.f32 %v248, 0.0
      %v258 = vadd.f32 %v249, 0.0
      %v259 = vadd.f32 %v250, 0.0
      %s260 = scalar_lea.vmem %s169, 44
      %v261 = vld [vmem:[%s260] sm:$0xf]
      %v262 = vld [vmem:[%s260 + $0x4] sm:$0xf]
      %v263 = vld [vmem:[%s260 + $0x8] sm:$0xf]
      %v264 = vld [vmem:[%s260 + $0xc] sm:$0xf]
      %v265 = vld [vmem:[%s260 + $0x10] sm:$0xf]
      %v266 = vld [vmem:[%s260 + $0x14] sm:$0xf]
      %v267 = vld [vmem:[%s260 + $0x18] sm:$0xf]
      %v268 = vld [vmem:[%s260 + $0x1c] sm:$0xf]
      %v269 = vld [vmem:[%s260 + $0x20] sm:$0xf]
      %s270 = scalar_lea.vmem %s1, 1
      %v271 = vld [vmem:[%s270] sm:$0x1]
      %v272 = vunpack.c.l.bf16 %v261
      %v273 = vunpack.c.l.bf16 %v262
      %v274 = vunpack.c.l.bf16 %v263
      %v275 = vunpack.c.l.bf16 %v264
      %v276 = vunpack.c.l.bf16 %v265
      %v277 = vunpack.c.l.bf16 %v266
      %v278 = vunpack.c.l.bf16 %v267
      %v279 = vunpack.c.l.bf16 %v268
      %v280 = vunpack.c.l.bf16 %v269
      %v281 = vunpack.c.l.bf16 %v271
      %283 = vset.pattern.permute.xlu0 0
      %284 = vperm.xlu0 %283, %v272
      %v285 = vpop.permute.xlu0 %284
      %288 = vset.pattern.permute.xlu0 0
      %289 = vperm.xlu0 %288, %v273
      %v290 = vpop.permute.xlu0 %289
      %293 = vset.pattern.permute.xlu0 0
      %294 = vperm.xlu0 %293, %v274
      %v295 = vpop.permute.xlu0 %294
      %298 = vset.pattern.permute.xlu0 0
      %299 = vperm.xlu0 %298, %v275
      %v300 = vpop.permute.xlu0 %299
      %303 = vset.pattern.permute.xlu0 0
      %304 = vperm.xlu0 %303, %v276
      %v305 = vpop.permute.xlu0 %304
      %308 = vset.pattern.permute.xlu0 0
      %309 = vperm.xlu0 %308, %v277
      %v310 = vpop.permute.xlu0 %309
      %313 = vset.pattern.permute.xlu0 0
      %314 = vperm.xlu0 %313, %v278
      %v315 = vpop.permute.xlu0 %314
      %318 = vset.pattern.permute.xlu0 0
      %319 = vperm.xlu0 %318, %v279
      %v320 = vpop.permute.xlu0 %319
      %323 = vset.pattern.permute.xlu0 0
      %324 = vperm.xlu0 %323, %v280
      %v325 = vpop.permute.xlu0 %324
      %v327 = vperm.slane %v281, 0
      %v328 = vmul.f32 %v285, %v327
      %v329 = vmul.f32 %v290, %v327
      %v330 = vmul.f32 %v295, %v327
      %v331 = vmul.f32 %v300, %v327
      %v332 = vmul.f32 %v305, %v327
      %v333 = vmul.f32 %v310, %v327
      %v334 = vmul.f32 %v315, %v327
      %v335 = vmul.f32 %v320, %v327
      %v336 = vmul.f32 %v325, %v327
      %v337 = vadd.f32 %v251, %v328
      %v338 = vadd.f32 %v252, %v329
      %v339 = vadd.f32 %v253, %v330
      %v340 = vadd.f32 %v254, %v331
      %v341 = vadd.f32 %v255, %v332
      %v342 = vadd.f32 %v256, %v333
      %v343 = vadd.f32 %v257, %v334
      %v344 = vadd.f32 %v258, %v335
      %v345 = vadd.f32 %v259, %v336
      %v346 = vld [vmem:[%s169] sm:$0xf]
      %v347 = vld [vmem:[%s169 + $0x4] sm:$0xf]
      %v348 = vld [vmem:[%s169 + $0x8] sm:$0xf]
      %v349 = vld [vmem:[%s169 + $0xc] sm:$0xf]
      %v350 = vld [vmem:[%s169 + $0x10] sm:$0xf]
      %v351 = vld [vmem:[%s169 + $0x14] sm:$0xf]
      %v352 = vld [vmem:[%s169 + $0x18] sm:$0xf]
      %v353 = vld [vmem:[%s169 + $0x1c] sm:$0xf]
      %v354 = vld [vmem:[%s169 + $0x20] sm:$0xf]
      %v355 = vld [vmem:[%s169 + $0x24] sm:$0x1]
      %s356 = scalar_lea.vmem %s1, 2
      %v357 = vld [vmem:[%s356] sm:$0x1]
      %v358 = vunpack.c.l.bf16 %v346
      %v359 = vunpack.c.l.bf16 %v347
      %v360 = vunpack.c.l.bf16 %v348
      %v361 = vunpack.c.l.bf16 %v349
      %v362 = vunpack.c.l.bf16 %v350
      %v363 = vunpack.c.l.bf16 %v351
      %v364 = vunpack.c.l.bf16 %v352
      %v365 = vunpack.c.l.bf16 %v353
      %v366 = vunpack.c.l.bf16 %v354
      %v367 = vunpack.c.l.bf16 %v355
      %v368 = vunpack.c.l.bf16 %v357
      %370 = vset.pattern.permute.xlu0 0
      %371 = vperm.xlu0 %370, %v358
      %v372 = vpop.permute.xlu0 %371
      %375 = vset.pattern.permute.xlu0 0
      %376 = vperm.xlu0 %375, %v359
      %v377 = vpop.permute.xlu0 %376
      %380 = vset.pattern.permute.xlu0 0
      %381 = vperm.xlu0 %380, %v360
      %v382 = vpop.permute.xlu0 %381
      %385 = vset.pattern.permute.xlu0 0
      %386 = vperm.xlu0 %385, %v361
      %v387 = vpop.permute.xlu0 %386
      %390 = vset.pattern.permute.xlu0 0
      %391 = vperm.xlu0 %390, %v362
      %v392 = vpop.permute.xlu0 %391
      %395 = vset.pattern.permute.xlu0 0
      %396 = vperm.xlu0 %395, %v363
      %v397 = vpop.permute.xlu0 %396
      %400 = vset.pattern.permute.xlu0 0
      %401 = vperm.xlu0 %400, %v364
      %v402 = vpop.permute.xlu0 %401
      %405 = vset.pattern.permute.xlu0 0
      %406 = vperm.xlu0 %405, %v365
      %v407 = vpop.permute.xlu0 %406
      %410 = vset.pattern.permute.xlu0 0
      %411 = vperm.xlu0 %410, %v366
      %v412 = vpop.permute.xlu0 %411
      %415 = vset.pattern.permute.xlu0 0
      %416 = vperm.xlu0 %415, %v367
      %v417 = vpop.permute.xlu0 %416
      %v419 = vperm.slane %v368, 0
      %v420 = vmul.f32 %v372, %v419
      %v421 = vmul.f32 %v377, %v419
      %v422 = vmul.f32 %v382, %v419
      %v423 = vmul.f32 %v387, %v419
      %v424 = vmul.f32 %v392, %v419
      %v425 = vmul.f32 %v397, %v419
      %v426 = vmul.f32 %v402, %v419
      %v427 = vmul.f32 %v407, %v419
      %v428 = vmul.f32 %v412, %v419
      %v429 = vmul.f32 %v417, %v419
      %vm440 = vcmask 1046528
      %v441 = vrot.slane %v420, 1
      %v442 = vrot.slane %v421, 1
      %v443 = vsel %vm440, %v441, %v442
      %v444 = vrot.slane %v422, 1
      %v445 = vsel %vm440, %v442, %v444
      %v446 = vrot.slane %v423, 1
      %v447 = vsel %vm440, %v444, %v446
      %v448 = vrot.slane %v424, 1
      %v449 = vsel %vm440, %v446, %v448
      %v450 = vrot.slane %v425, 1
      %v451 = vsel %vm440, %v448, %v450
      %v452 = vrot.slane %v426, 1
      %v453 = vsel %vm440, %v450, %v452
      %v454 = vrot.slane %v427, 1
      %v455 = vsel %vm440, %v452, %v454
      %v456 = vrot.slane %v428, 1
      %v457 = vsel %vm440, %v454, %v456
      %v458 = vrot.slane %v429, 1
      %v459 = vsel %vm440, %v456, %v458
      %v469 = vadd.f32 %v337, %v443
      %v470 = vadd.f32 %v338, %v445
      %v471 = vadd.f32 %v339, %v447
      %v472 = vadd.f32 %v340, %v449
      %v473 = vadd.f32 %v341, %v451
      %v474 = vadd.f32 %v342, %v453
      %v475 = vadd.f32 %v343, %v455
      %v476 = vadd.f32 %v344, %v457
      %v477 = vadd.f32 %v345, %v459
      %s478 = scalar_lea.vmem %s169, 88
      %v479 = vld [vmem:[%s478] sm:$0xf]
      %v480 = vld [vmem:[%s478 + $0x4] sm:$0xf]
      %v481 = vld [vmem:[%s478 + $0x8] sm:$0xf]
      %v482 = vld [vmem:[%s478 + $0xc] sm:$0xf]
      %v483 = vld [vmem:[%s478 + $0x10] sm:$0xf]
      %v484 = vld [vmem:[%s478 + $0x14] sm:$0xf]
      %v485 = vld [vmem:[%s478 + $0x18] sm:$0xf]
      %v486 = vld [vmem:[%s478 + $0x1c] sm:$0xf]
      %v487 = vld [vmem:[%s478 + $0x20] sm:$0xf]
      %s488 = scalar_lea.vmem %s1, 3
      %v489 = vld [vmem:[%s488] sm:$0x1]
      %v490 = vunpack.c.l.bf16 %v479
      %v491 = vunpack.c.l.bf16 %v480
      %v492 = vunpack.c.l.bf16 %v481
      %v493 = vunpack.c.l.bf16 %v482
      %v494 = vunpack.c.l.bf16 %v483
      %v495 = vunpack.c.l.bf16 %v484
      %v496 = vunpack.c.l.bf16 %v485
      %v497 = vunpack.c.l.bf16 %v486
      %v498 = vunpack.c.l.bf16 %v487
      %v499 = vunpack.c.l.bf16 %v489
      %501 = vset.pattern.permute.xlu0 0
      %502 = vperm.xlu0 %501, %v490
      %v503 = vpop.permute.xlu0 %502
      %506 = vset.pattern.permute.xlu0 0
      %507 = vperm.xlu0 %506, %v491
      %v508 = vpop.permute.xlu0 %507
      %511 = vset.pattern.permute.xlu0 0
      %512 = vperm.xlu0 %511, %v492
      %v513 = vpop.permute.xlu0 %512
      %516 = vset.pattern.permute.xlu0 0
      %517 = vperm.xlu0 %516, %v493
      %v518 = vpop.permute.xlu0 %517
      %521 = vset.pattern.permute.xlu0 0
      %522 = vperm.xlu0 %521, %v494
      %v523 = vpop.permute.xlu0 %522
      %526 = vset.pattern.permute.xlu0 0
      %527 = vperm.xlu0 %526, %v495
      %v528 = vpop.permute.xlu0 %527
      %531 = vset.pattern.permute.xlu0 0
      %532 = vperm.xlu0 %531, %v496
      %v533 = vpop.permute.xlu0 %532
      %536 = vset.pattern.permute.xlu0 0
      %537 = vperm.xlu0 %536, %v497
      %v538 = vpop.permute.xlu0 %537
      %541 = vset.pattern.permute.xlu0 0
      %542 = vperm.xlu0 %541, %v498
      %v543 = vpop.permute.xlu0 %542
      %v545 = vperm.slane %v499, 0
      %v546 = vmul.f32 %v503, %v545
      %v547 = vmul.f32 %v508, %v545
      %v548 = vmul.f32 %v513, %v545
      %v549 = vmul.f32 %v518, %v545
      %v550 = vmul.f32 %v523, %v545
      %v551 = vmul.f32 %v528, %v545
      %v552 = vmul.f32 %v533, %v545
      %v553 = vmul.f32 %v538, %v545
      %v554 = vmul.f32 %v543, %v545
      %v555 = vadd.f32 %v469, %v546
      %v556 = vadd.f32 %v470, %v547
      %v557 = vadd.f32 %v471, %v548
      %v558 = vadd.f32 %v472, %v549
      %v559 = vadd.f32 %v473, %v550
      %v560 = vadd.f32 %v474, %v551
      %v561 = vadd.f32 %v475, %v552
      %v562 = vadd.f32 %v476, %v553
      %v563 = vadd.f32 %v477, %v554
      %s564 = scalar_lea.vmem %s169, 132
      %v565 = vld [vmem:[%s564] sm:$0xf]
      %v566 = vld [vmem:[%s564 + $0x4] sm:$0xf]
      %v567 = vld [vmem:[%s564 + $0x8] sm:$0xf]
      %v568 = vld [vmem:[%s564 + $0xc] sm:$0xf]
      %v569 = vld [vmem:[%s564 + $0x10] sm:$0xf]
      %v570 = vld [vmem:[%s564 + $0x14] sm:$0xf]
      %v571 = vld [vmem:[%s564 + $0x18] sm:$0xf]
      %v572 = vld [vmem:[%s564 + $0x1c] sm:$0xf]
      %v573 = vld [vmem:[%s564 + $0x20] sm:$0xf]
      %s574 = scalar_lea.vmem %s1, 4
      %v575 = vld [vmem:[%s574] sm:$0x1]
      %v576 = vunpack.c.l.bf16 %v565
      %v577 = vunpack.c.l.bf16 %v566
      %v578 = vunpack.c.l.bf16 %v567
      %v579 = vunpack.c.l.bf16 %v568
      %v580 = vunpack.c.l.bf16 %v569
      %v581 = vunpack.c.l.bf16 %v570
      %v582 = vunpack.c.l.bf16 %v571
      %v583 = vunpack.c.l.bf16 %v572
      %v584 = vunpack.c.l.bf16 %v573
      %v585 = vunpack.c.l.bf16 %v575
      %587 = vset.pattern.permute.xlu0 0
      %588 = vperm.xlu0 %587, %v576
      %v589 = vpop.permute.xlu0 %588
      %592 = vset.pattern.permute.xlu0 0
      %593 = vperm.xlu0 %592, %v577
      %v594 = vpop.permute.xlu0 %593
      %597 = vset.pattern.permute.xlu0 0
      %598 = vperm.xlu0 %597, %v578
      %v599 = vpop.permute.xlu0 %598
      %602 = vset.pattern.permute.xlu0 0
      %603 = vperm.xlu0 %602, %v579
      %v604 = vpop.permute.xlu0 %603
      %607 = vset.pattern.permute.xlu0 0
      %608 = vperm.xlu0 %607, %v580
      %v609 = vpop.permute.xlu0 %608
      %612 = vset.pattern.permute.xlu0 0
      %613 = vperm.xlu0 %612, %v581
      %v614 = vpop.permute.xlu0 %613
      %617 = vset.pattern.permute.xlu0 0
      %618 = vperm.xlu0 %617, %v582
      %v619 = vpop.permute.xlu0 %618
      %622 = vset.pattern.permute.xlu0 0
      %623 = vperm.xlu0 %622, %v583
      %v624 = vpop.permute.xlu0 %623
      %627 = vset.pattern.permute.xlu0 0
      %628 = vperm.xlu0 %627, %v584
      %v629 = vpop.permute.xlu0 %628
      %v631 = vperm.slane %v585, 0
      %v632 = vmul.f32 %v589, %v631
      %v633 = vmul.f32 %v594, %v631
      %v634 = vmul.f32 %v599, %v631
      %v635 = vmul.f32 %v604, %v631
      %v636 = vmul.f32 %v609, %v631
      %v637 = vmul.f32 %v614, %v631
      %v638 = vmul.f32 %v619, %v631
      %v639 = vmul.f32 %v624, %v631
      %v640 = vmul.f32 %v629, %v631
      %v641 = vadd.f32 %v555, %v632
      %v642 = vadd.f32 %v556, %v633
      %v643 = vadd.f32 %v557, %v634
      %v644 = vadd.f32 %v558, %v635
      %v645 = vadd.f32 %v559, %v636
      %v646 = vadd.f32 %v560, %v637
      %v647 = vadd.f32 %v561, %v638
      %v648 = vadd.f32 %v562, %v639
      %v649 = vadd.f32 %v563, %v640
      %v650 = vld [vmem:[%s478] sm:$0xf]
      %v651 = vld [vmem:[%s478 + $0x4] sm:$0xf]
      %v652 = vld [vmem:[%s478 + $0x8] sm:$0xf]
      %v653 = vld [vmem:[%s478 + $0xc] sm:$0xf]
      %v654 = vld [vmem:[%s478 + $0x10] sm:$0xf]
      %v655 = vld [vmem:[%s478 + $0x14] sm:$0xf]
      %v656 = vld [vmem:[%s478 + $0x18] sm:$0xf]
      %v657 = vld [vmem:[%s478 + $0x1c] sm:$0xf]
      %v658 = vld [vmem:[%s478 + $0x20] sm:$0xf]
      %v659 = vld [vmem:[%s478 + $0x24] sm:$0x1]
      %s660 = scalar_lea.vmem %s1, 5
      %v661 = vld [vmem:[%s660] sm:$0x1]
      %v662 = vunpack.c.l.bf16 %v650
      %v663 = vunpack.c.l.bf16 %v651
      %v664 = vunpack.c.l.bf16 %v652
      %v665 = vunpack.c.l.bf16 %v653
      %v666 = vunpack.c.l.bf16 %v654
      %v667 = vunpack.c.l.bf16 %v655
      %v668 = vunpack.c.l.bf16 %v656
      %v669 = vunpack.c.l.bf16 %v657
      %v670 = vunpack.c.l.bf16 %v658
      %v671 = vunpack.c.l.bf16 %v659
      %v672 = vunpack.c.l.bf16 %v661
      %674 = vset.pattern.permute.xlu0 0
      %675 = vperm.xlu0 %674, %v662
      %v676 = vpop.permute.xlu0 %675
      %679 = vset.pattern.permute.xlu0 0
      %680 = vperm.xlu0 %679, %v663
      %v681 = vpop.permute.xlu0 %680
      %684 = vset.pattern.permute.xlu0 0
      %685 = vperm.xlu0 %684, %v664
      %v686 = vpop.permute.xlu0 %685
      %689 = vset.pattern.permute.xlu0 0
      %690 = vperm.xlu0 %689, %v665
      %v691 = vpop.permute.xlu0 %690
      %694 = vset.pattern.permute.xlu0 0
      %695 = vperm.xlu0 %694, %v666
      %v696 = vpop.permute.xlu0 %695
      %699 = vset.pattern.permute.xlu0 0
      %700 = vperm.xlu0 %699, %v667
      %v701 = vpop.permute.xlu0 %700
      %704 = vset.pattern.permute.xlu0 0
      %705 = vperm.xlu0 %704, %v668
      %v706 = vpop.permute.xlu0 %705
      %709 = vset.pattern.permute.xlu0 0
      %710 = vperm.xlu0 %709, %v669
      %v711 = vpop.permute.xlu0 %710
      %714 = vset.pattern.permute.xlu0 0
      %715 = vperm.xlu0 %714, %v670
      %v716 = vpop.permute.xlu0 %715
      %719 = vset.pattern.permute.xlu0 0
      %720 = vperm.xlu0 %719, %v671
      %v721 = vpop.permute.xlu0 %720
      %v723 = vperm.slane %v672, 0
      %v724 = vmul.f32 %v676, %v723
      %v725 = vmul.f32 %v681, %v723
      %v726 = vmul.f32 %v686, %v723
      %v727 = vmul.f32 %v691, %v723
      %v728 = vmul.f32 %v696, %v723
      %v729 = vmul.f32 %v701, %v723
      %v730 = vmul.f32 %v706, %v723
      %v731 = vmul.f32 %v711, %v723
      %v732 = vmul.f32 %v716, %v723
      %v733 = vmul.f32 %v721, %v723
      %v744 = vrot.slane %v724, 1
      %v745 = vrot.slane %v725, 1
      %v746 = vsel %vm440, %v744, %v745
      %v747 = vrot.slane %v726, 1
      %v748 = vsel %vm440, %v745, %v747
      %v749 = vrot.slane %v727, 1
      %v750 = vsel %vm440, %v747, %v749
      %v751 = vrot.slane %v728, 1
      %v752 = vsel %vm440, %v749, %v751
      %v753 = vrot.slane %v729, 1
      %v754 = vsel %vm440, %v751, %v753
      %v755 = vrot.slane %v730, 1
      %v756 = vsel %vm440, %v753, %v755
      %v757 = vrot.slane %v731, 1
      %v758 = vsel %vm440, %v755, %v757
      %v759 = vrot.slane %v732, 1
      %v760 = vsel %vm440, %v757, %v759
      %v761 = vrot.slane %v733, 1
      %v762 = vsel %vm440, %v759, %v761
      %v772 = vadd.f32 %v641, %v746
      %v773 = vadd.f32 %v642, %v748
      %v774 = vadd.f32 %v643, %v750
      %v775 = vadd.f32 %v644, %v752
      %v776 = vadd.f32 %v645, %v754
      %v777 = vadd.f32 %v646, %v756
      %v778 = vadd.f32 %v647, %v758
      %v779 = vadd.f32 %v648, %v760
      %v780 = vadd.f32 %v649, %v762
      %v781 = vld [vmem:[%s169 + $0x4] sm:$0xf]
      %v782 = vld [vmem:[%s169 + $0x8] sm:$0xf]
      %v783 = vld [vmem:[%s169 + $0xc] sm:$0xf]
      %v784 = vld [vmem:[%s169 + $0x10] sm:$0xf]
      %v785 = vld [vmem:[%s169 + $0x14] sm:$0xf]
      %v786 = vld [vmem:[%s169 + $0x18] sm:$0xf]
      %v787 = vld [vmem:[%s169 + $0x1c] sm:$0xf]
      %v788 = vld [vmem:[%s169 + $0x20] sm:$0xf]
      %v789 = vld [vmem:[%s169 + $0x24] sm:$0xf]
      %v790 = vld [vmem:[%s169 + $0x28] sm:$0x1]
      %s791 = scalar_lea.vmem %s1, 6
      %v792 = vld [vmem:[%s791] sm:$0x1]
      %v793 = vunpack.c.l.bf16 %v781
      %v794 = vunpack.c.l.bf16 %v782
      %v795 = vunpack.c.l.bf16 %v783
      %v796 = vunpack.c.l.bf16 %v784
      %v797 = vunpack.c.l.bf16 %v785
      %v798 = vunpack.c.l.bf16 %v786
      %v799 = vunpack.c.l.bf16 %v787
      %v800 = vunpack.c.l.bf16 %v788
      %v801 = vunpack.c.l.bf16 %v789
      %v802 = vunpack.c.l.bf16 %v790
      %v803 = vunpack.c.l.bf16 %v792
      %805 = vset.pattern.permute.xlu0 0
      %806 = vperm.xlu0 %805, %v793
      %v807 = vpop.permute.xlu0 %806
      %810 = vset.pattern.permute.xlu0 0
      %811 = vperm.xlu0 %810, %v794
      %v812 = vpop.permute.xlu0 %811
      %815 = vset.pattern.permute.xlu0 0
      %816 = vperm.xlu0 %815, %v795
      %v817 = vpop.permute.xlu0 %816
      %820 = vset.pattern.permute.xlu0 0
      %821 = vperm.xlu0 %820, %v796
      %v822 = vpop.permute.xlu0 %821
      %825 = vset.pattern.permute.xlu0 0
      %826 = vperm.xlu0 %825, %v797
      %v827 = vpop.permute.xlu0 %826
      %830 = vset.pattern.permute.xlu0 0
      %831 = vperm.xlu0 %830, %v798
      %v832 = vpop.permute.xlu0 %831
      %835 = vset.pattern.permute.xlu0 0
      %836 = vperm.xlu0 %835, %v799
      %v837 = vpop.permute.xlu0 %836
      %840 = vset.pattern.permute.xlu0 0
      %841 = vperm.xlu0 %840, %v800
      %v842 = vpop.permute.xlu0 %841
      %845 = vset.pattern.permute.xlu0 0
      %846 = vperm.xlu0 %845, %v801
      %v847 = vpop.permute.xlu0 %846
      %850 = vset.pattern.permute.xlu0 0
      %851 = vperm.xlu0 %850, %v802
      %v852 = vpop.permute.xlu0 %851
      %v854 = vperm.slane %v803, 0
      %v855 = vmul.f32 %v807, %v854
      %v856 = vmul.f32 %v812, %v854
      %v857 = vmul.f32 %v817, %v854
      %v858 = vmul.f32 %v822, %v854
      %v859 = vmul.f32 %v827, %v854
      %v860 = vmul.f32 %v832, %v854
      %v861 = vmul.f32 %v837, %v854
      %v862 = vmul.f32 %v842, %v854
      %v863 = vmul.f32 %v847, %v854
      %v864 = vmul.f32 %v852, %v854
      %v875 = vrot.slane %v855, 1
      %v876 = vrot.slane %v856, 1
      %v877 = vsel %vm440, %v875, %v876
      %v878 = vrot.slane %v857, 1
      %v879 = vsel %vm440, %v876, %v878
      %v880 = vrot.slane %v858, 1
      %v881 = vsel %vm440, %v878, %v880
      %v882 = vrot.slane %v859, 1
      %v883 = vsel %vm440, %v880, %v882
      %v884 = vrot.slane %v860, 1
      %v885 = vsel %vm440, %v882, %v884
      %v886 = vrot.slane %v861, 1
      %v887 = vsel %vm440, %v884, %v886
      %v888 = vrot.slane %v862, 1
      %v889 = vsel %vm440, %v886, %v888
      %v890 = vrot.slane %v863, 1
      %v891 = vsel %vm440, %v888, %v890
      %v892 = vrot.slane %v864, 1
      %v893 = vsel %vm440, %v890, %v892
      %v903 = vadd.f32 %v772, %v877
      %v904 = vadd.f32 %v773, %v879
      %v905 = vadd.f32 %v774, %v881
      %v906 = vadd.f32 %v775, %v883
      %v907 = vadd.f32 %v776, %v885
      %v908 = vadd.f32 %v777, %v887
      %v909 = vadd.f32 %v778, %v889
      %v910 = vadd.f32 %v779, %v891
      %v911 = vadd.f32 %v780, %v893
      %v912 = vld [vmem:[%s260 + $0x4] sm:$0xf]
      %v913 = vld [vmem:[%s260 + $0x8] sm:$0xf]
      %v914 = vld [vmem:[%s260 + $0xc] sm:$0xf]
      %v915 = vld [vmem:[%s260 + $0x10] sm:$0xf]
      %v916 = vld [vmem:[%s260 + $0x14] sm:$0xf]
      %v917 = vld [vmem:[%s260 + $0x18] sm:$0xf]
      %v918 = vld [vmem:[%s260 + $0x1c] sm:$0xf]
      %v919 = vld [vmem:[%s260 + $0x20] sm:$0xf]
      %v920 = vld [vmem:[%s260 + $0x24] sm:$0xf]
      %v921 = vld [vmem:[%s260 + $0x28] sm:$0x1]
      %s922 = scalar_lea.vmem %s1, 7
      %v923 = vld [vmem:[%s922] sm:$0x1]
      %v924 = vunpack.c.l.bf16 %v912
      %v925 = vunpack.c.l.bf16 %v913
      %v926 = vunpack.c.l.bf16 %v914
      %v927 = vunpack.c.l.bf16 %v915
      %v928 = vunpack.c.l.bf16 %v916
      %v929 = vunpack.c.l.bf16 %v917
      %v930 = vunpack.c.l.bf16 %v918
      %v931 = vunpack.c.l.bf16 %v919
      %v932 = vunpack.c.l.bf16 %v920
      %v933 = vunpack.c.l.bf16 %v921
      %v934 = vunpack.c.l.bf16 %v923
      %936 = vset.pattern.permute.xlu0 0
      %937 = vperm.xlu0 %936, %v924
      %v938 = vpop.permute.xlu0 %937
      %941 = vset.pattern.permute.xlu0 0
      %942 = vperm.xlu0 %941, %v925
      %v943 = vpop.permute.xlu0 %942
      %946 = vset.pattern.permute.xlu0 0
      %947 = vperm.xlu0 %946, %v926
      %v948 = vpop.permute.xlu0 %947
      %951 = vset.pattern.permute.xlu0 0
      %952 = vperm.xlu0 %951, %v927
      %v953 = vpop.permute.xlu0 %952
      %956 = vset.pattern.permute.xlu0 0
      %957 = vperm.xlu0 %956, %v928
      %v958 = vpop.permute.xlu0 %957
      %961 = vset.pattern.permute.xlu0 0
      %962 = vperm.xlu0 %961, %v929
      %v963 = vpop.permute.xlu0 %962
      %966 = vset.pattern.permute.xlu0 0
      %967 = vperm.xlu0 %966, %v930
      %v968 = vpop.permute.xlu0 %967
      %971 = vset.pattern.permute.xlu0 0
      %972 = vperm.xlu0 %971, %v931
      %v973 = vpop.permute.xlu0 %972
      %976 = vset.pattern.permute.xlu0 0
      %977 = vperm.xlu0 %976, %v932
      %v978 = vpop.permute.xlu0 %977
      %981 = vset.pattern.permute.xlu0 0
      %982 = vperm.xlu0 %981, %v933
      %v983 = vpop.permute.xlu0 %982
      %v985 = vperm.slane %v934, 0
      %v986 = vmul.f32 %v938, %v985
      %v987 = vmul.f32 %v943, %v985
      %v988 = vmul.f32 %v948, %v985
      %v989 = vmul.f32 %v953, %v985
      %v990 = vmul.f32 %v958, %v985
      %v991 = vmul.f32 %v963, %v985
      %v992 = vmul.f32 %v968, %v985
      %v993 = vmul.f32 %v973, %v985
      %v994 = vmul.f32 %v978, %v985
      %v995 = vmul.f32 %v983, %v985
      %v1006 = vrot.slane %v986, 1
      %v1007 = vrot.slane %v987, 1
      %v1008 = vsel %vm440, %v1006, %v1007
      %v1009 = vrot.slane %v988, 1
      %v1010 = vsel %vm440, %v1007, %v1009
      %v1011 = vrot.slane %v989, 1
      %v1012 = vsel %vm440, %v1009, %v1011
      %v1013 = vrot.slane %v990, 1
      %v1014 = vsel %vm440, %v1011, %v1013
      %v1015 = vrot.slane %v991, 1
      %v1016 = vsel %vm440, %v1013, %v1015
      %v1017 = vrot.slane %v992, 1
      %v1018 = vsel %vm440, %v1015, %v1017
      %v1019 = vrot.slane %v993, 1
      %v1020 = vsel %vm440, %v1017, %v1019
      %v1021 = vrot.slane %v994, 1
      %v1022 = vsel %vm440, %v1019, %v1021
      %v1023 = vrot.slane %v995, 1
      %v1024 = vsel %vm440, %v1021, %v1023
      %v1034 = vadd.f32 %v903, %v1008
      %v1035 = vadd.f32 %v904, %v1010
      %v1036 = vadd.f32 %v905, %v1012
      %v1037 = vadd.f32 %v906, %v1014
      %v1038 = vadd.f32 %v907, %v1016
      %v1039 = vadd.f32 %v908, %v1018
      %v1040 = vadd.f32 %v909, %v1020
      %v1041 = vadd.f32 %v910, %v1022
      %v1042 = vadd.f32 %v911, %v1024
      %v1043 = vld [vmem:[%s169 + $0x4] sm:$0xe]
      %s1044 = scalar_lea.vmem %s1, 8
      %v1045 = vld [vmem:[%s1044] sm:$0x1]
      %v1046 = vunpack.c.l.bf16 %v1043
      %v1047 = vunpack.c.l.bf16 %v1045
      %1049 = vset.pattern.permute.xlu0 0
      %1050 = vperm.xlu0 %1049, %v1046
      %v1051 = vpop.permute.xlu0 %1050
      %v1053 = vperm.slane %v1047, 0
      %v1054 = vmul.f32 %v1051, %v1053
      %v1055 = vmul.f32 %v812, %v1053
      %v1056 = vmul.f32 %v817, %v1053
      %v1057 = vmul.f32 %v822, %v1053
      %v1058 = vmul.f32 %v827, %v1053
      %v1059 = vmul.f32 %v832, %v1053
      %v1060 = vmul.f32 %v837, %v1053
      %v1061 = vmul.f32 %v842, %v1053
      %v1062 = vmul.f32 %v847, %v1053
      %v1063 = vmul.f32 %v852, %v1053
      %vm1074 = vcmask 1045504
      %v1075 = vrot.slane %v1054, 2
      %v1076 = vrot.slane %v1055, 2
      %v1077 = vsel %vm1074, %v1075, %v1076
      %v1078 = vrot.slane %v1056, 2
      %v1079 = vsel %vm1074, %v1076, %v1078
      %v1080 = vrot.slane %v1057, 2
      %v1081 = vsel %vm1074, %v1078, %v1080
      %v1082 = vrot.slane %v1058, 2
      %v1083 = vsel %vm1074, %v1080, %v1082
      %v1084 = vrot.slane %v1059, 2
      %v1085 = vsel %vm1074, %v1082, %v1084
      %v1086 = vrot.slane %v1060, 2
      %v1087 = vsel %vm1074, %v1084, %v1086
      %v1088 = vrot.slane %v1061, 2
      %v1089 = vsel %vm1074, %v1086, %v1088
      %v1090 = vrot.slane %v1062, 2
      %v1091 = vsel %vm1074, %v1088, %v1090
      %v1092 = vrot.slane %v1063, 2
      %v1093 = vsel %vm1074, %v1090, %v1092
      %v1103 = vadd.f32 %v1034, %v1077
      %v1104 = vadd.f32 %v1035, %v1079
      %v1105 = vadd.f32 %v1036, %v1081
      %v1106 = vadd.f32 %v1037, %v1083
      %v1107 = vadd.f32 %v1038, %v1085
      %v1108 = vadd.f32 %v1039, %v1087
      %v1109 = vadd.f32 %v1040, %v1089
      %v1110 = vadd.f32 %v1041, %v1091
      %v1111 = vadd.f32 %v1042, %v1093
      %v1112 = vld [vmem:[%s2] sm:$0x1]
      %v1114 = vperm.slane %v1112, 0
      %v1116 = vadd.f32 %v1103, %v1114
      %v1117 = vadd.f32 %v1104, %v1114
      %v1118 = vadd.f32 %v1105, %v1114
      %v1119 = vadd.f32 %v1106, %v1114
      %v1120 = vadd.f32 %v1107, %v1114
      %v1121 = vadd.f32 %v1108, %v1114
      %v1122 = vadd.f32 %v1109, %v1114
      %v1123 = vadd.f32 %v1110, %v1114
      %v1124 = vadd.f32 %v1111, %v1114
      %vm1125 = vcmp.ge.f32.partialorder %v1116, 0.0
      %vm1126 = vcmp.ge.f32.partialorder %v1117, 0.0
      %vm1127 = vcmp.ge.f32.partialorder %v1118, 0.0
      %vm1128 = vcmp.ge.f32.partialorder %v1119, 0.0
      %vm1129 = vcmp.ge.f32.partialorder %v1120, 0.0
      %vm1130 = vcmp.ge.f32.partialorder %v1121, 0.0
      %vm1131 = vcmp.ge.f32.partialorder %v1122, 0.0
      %vm1132 = vcmp.ge.f32.partialorder %v1123, 0.0
      %vm1133 = vcmp.ge.f32.partialorder %v1124, 0.0
      %v1134 = vmul.f32 %v1116, 0.2
      %v1135 = vmul.f32 %v1117, 0.2
      %v1136 = vmul.f32 %v1118, 0.2
      %v1137 = vmul.f32 %v1119, 0.2
      %v1138 = vmul.f32 %v1120, 0.2
      %v1139 = vmul.f32 %v1121, 0.2
      %v1140 = vmul.f32 %v1122, 0.2
      %v1141 = vmul.f32 %v1123, 0.2
      %v1142 = vmul.f32 %v1124, 0.2
      %v1143 = vsel %vm1125, %v1116, %v1134
      %v1144 = vsel %vm1126, %v1117, %v1135
      %v1145 = vsel %vm1127, %v1118, %v1136
      %v1146 = vsel %vm1128, %v1119, %v1137
      %v1147 = vsel %vm1129, %v1120, %v1138
      %v1148 = vsel %vm1130, %v1121, %v1139
      %v1149 = vsel %vm1131, %v1122, %v1140
      %v1150 = vsel %vm1132, %v1123, %v1141
      %v1151 = vsel %vm1133, %v1124, %v1142
      %v1152 = vpack.c.bf16 %v1143, %v1143
      %v1153 = vpack.c.bf16 %v1144, %v1144
      %v1154 = vpack.c.bf16 %v1145, %v1145
      %v1155 = vpack.c.bf16 %v1146, %v1146
      %v1156 = vpack.c.bf16 %v1147, %v1147
      %v1157 = vpack.c.bf16 %v1148, %v1148
      %v1158 = vpack.c.bf16 %v1149, %v1149
      %v1159 = vpack.c.bf16 %v1150, %v1150
      %v1160 = vpack.c.bf16 %v1151, %v1151
      %vm1161 = vcmask 125952
      %1162 = vst.msk [vmem:[%s175] sm:$0xf] %vm1161, %v1152
      %1163 = vst.msk [vmem:[%s175 + $0x4] sm:$0xf] %vm1161, %v1153
      %1164 = vst.msk [vmem:[%s175 + $0x8] sm:$0xf] %vm1161, %v1154
      %1165 = vst.msk [vmem:[%s175 + $0xc] sm:$0xf] %vm1161, %v1155
      %1166 = vst.msk [vmem:[%s175 + $0x10] sm:$0xf] %vm1161, %v1156
      %1167 = vst.msk [vmem:[%s175 + $0x14] sm:$0xf] %vm1161, %v1157
      %1168 = vst.msk [vmem:[%s175 + $0x18] sm:$0xf] %vm1161, %v1158
      %1169 = vst.msk [vmem:[%s175 + $0x1c] sm:$0xf] %vm1161, %v1159
      %1170 = vst.msk [vmem:[%s175 + $0x20] sm:$0xf] %vm1161, %v1160
      %p1171 = scmp.lt.s32.totalorder %s14, 1
      %s1172 = scalar_select %p1171, %s14, 1
      %s1173 = smul.addr %s1172, 9
      %s1174 = smul.addr %s1173, 4
      %s1175 = scalar_lea.vmem %s3, %s1174
      // Predicated region
      $region33: #{_lambda_.5} parent=31 // pred_check
        %p1176 = pneg %p100
      $region34: #{_lambda_.5} parent=31 // pred_check_branch
        %1178 = sbr.rel (%p1176) target = $region36
      $region35: #{_lambda_.5} parent=31 // pred_region
        _
      $region36: #{_lambda_.5} parent=31 // pred_fallthru
        _
    $region32: #{_lambda_.5} parent=5 // pred_fallthru
      _
    %p1179 = scmp.le.s32.totalorder 2, %s9
    // Predicated region
    $region37: #{_lambda_.5} parent=5 // pred_check
      %p1180 = pneg %p1179
    $region38: #{_lambda_.5} parent=5 // pred_check_branch
      %1182 = sbr.rel (%p1180) target = $region40
    $region39: #{_lambda_.5} parent=5 // pred_region
      %s1183 = ssub.s32 %s9, 2
      // Predicated region
      $region41: #{_lambda_.5} parent=39 // pred_check
        %p1184 = pneg %p106
      $region42: #{_lambda_.5} parent=39 // pred_check_branch
        %1186 = sbr.rel (%p1184) target = $region44
      $region43: #{_lambda_.5} parent=39 // pred_region
        %p1187 = scmp.lt.s32.totalorder %s15, 1
        %s1188 = scalar_select %p1187, %s15, 1
        %s1189 = smul.addr %s1188, 9
        %s1190 = smul.addr %s1189, 4
        %s1191 = scalar_lea.vmem %s3, %s1190
      $region44: #{_lambda_.5} parent=39 // pred_fallthru
        _
    $region40: #{_lambda_.5} parent=5 // pred_fallthru
      _
  $region6: #{_lambda_.5} parent=0 // loop_footer
    %s13 = sadd.s32 1, %s9
  $region7: #{_lambda_.5} parent=0 // loop_footer_branch
    %8 = sbr.rel target = $region3
  $region8: #{_lambda_.5} parent=0 // loop_exit
    _

// kernel: _lambda_.6
$region0: #{_lambda_.6}
  #allocation0 [shape = 'u32[]', space=smem, size = 0x4, offset = 0x4, fixed_abs, tag = 'smem constant byte address 0x4 - core index']
  #allocation1 [shape = 'u32[72,128]{1,0:T(1,128)}', space=vmem, size = 0x9000, scoped, tag = 'internal scratch']
  %s0 = inlined_call_operand.vmem [shape: bf16[8,26,16], index: 0, kind: input, shape index: {}]
  %s1 = inlined_call_operand.vmem [shape: bf16[3,3,16,32], index: 1, kind: input, shape index: {}]
  %s2 = inlined_call_operand.vmem [shape: f32[1,32], index: 2, kind: input, shape index: {}]
  %s3 = inlined_call_operand.vmem [shape: bf16[2,20,32], index: 3, kind: output, shape index: {}]
  %s4 = sld [smem:[#allocation0]]
  $region45: #{_lambda_.6} parent=0
    _
  %s6 = ssub.s32 1, %s4
  %s7 = scalar_select 0, %s6, %s4
  loop: start=0, step=1, limit=4
  $region2: #{_lambda_.6} parent=0 // loop_pre_header
    _
  $region3: #{_lambda_.6} parent=0 // loop_header
    %s9 = sphi 0, %s13
    %p10 = scmp.ge.s32.totalorder %s9, 4
    %s19 = sphi 0, %s21
    %s22 = sphi 0, %s19
    %s23 = sphi 0, %s22
    %s39 = sphi 0, %s23
    %s43 = sphi 0, %s43
    %s45 = sphi 0, %s43
    %s46 = sphi 0, %s45
    %s60 = sphi 0, %s46
    %s64 = sphi 0, %s64
    %s66 = sphi 0, %s64
    %s67 = sphi 0, %s66
    %s81 = sphi 0, %s67
    %s87 = sphi 0, %s89
    %s90 = sphi 0, %s87
    %s91 = sphi 0, %s90
    %s107 = sphi 0, %s91
  $region4: #{_lambda_.6} parent=0 // loop_header_branch
    %12 = sbr.rel (%p10) target = $region8
  $region5: #{_lambda_.6} parent=0 // loop_body
    %s14 = ssub.s32 %s9, 1
    %s15 = ssub.s32 %s9, 2
    %s16 = sadd.s32 %s9, 1
    %s17 = ssub.s32 %s9, %s16
    %p18 = scmp.eq.s32.totalorder %s17, 0
    %s20 = sadd.s32 %s19, 1
    %s21 = scalar_select %p18, %s19, %s20
    %p24 = pneg %p18
    %p25 = scmp.eq.s32.totalorder %s9, 1
    %p26 = por %p24, %p25
    %p27 = scmp.ne.s32.totalorder %s19, %s22
    %p28 = scmp.eq.s32.totalorder %s9, 0
    %p29 = por %p27, %p28
    %p30 = scmp.ne.s32.totalorder %s19, %s22
    %p31 = scmp.eq.s32.totalorder %s14, 1
    %p32 = por %p30, %p31
    %p33 = scmp.ne.s32.totalorder %s22, %s23
    %p34 = scmp.eq.s32.totalorder %s14, 0
    %p35 = por %p33, %p34
    %p36 = scmp.ne.s32.totalorder %s22, %s23
    %p37 = scmp.eq.s32.totalorder %s15, 1
    %p38 = por %p36, %p37
    %p40 = scmp.ne.s32.totalorder %s23, %s39
    %p41 = scmp.eq.s32.totalorder %s15, 0
    %p42 = por %p40, %p41
    %s44 = sadd.s32 %s43, 1
    %p47 = scmp.eq.s32.totalorder %s9, 1
    %p48 = scmp.ne.s32.totalorder %s43, %s45
    %p49 = scmp.eq.s32.totalorder %s9, 0
    %p50 = por %p48, %p49
    %p51 = scmp.ne.s32.totalorder %s43, %s45
    %p52 = scmp.eq.s32.totalorder %s14, 1
    %p53 = por %p51, %p52
    %p54 = scmp.ne.s32.totalorder %s45, %s46
    %p55 = scmp.eq.s32.totalorder %s14, 0
    %p56 = por %p54, %p55
    %p57 = scmp.ne.s32.totalorder %s45, %s46
    %p58 = scmp.eq.s32.totalorder %s15, 1
    %p59 = por %p57, %p58
    %p61 = scmp.ne.s32.totalorder %s46, %s60
    %p62 = scmp.eq.s32.totalorder %s15, 0
    %p63 = por %p61, %p62
    %s65 = sadd.s32 %s64, 1
    %p68 = scmp.eq.s32.totalorder %s9, 1
    %p69 = scmp.ne.s32.totalorder %s64, %s66
    %p70 = scmp.eq.s32.totalorder %s9, 0
    %p71 = por %p69, %p70
    %p72 = scmp.ne.s32.totalorder %s64, %s66
    %p73 = scmp.eq.s32.totalorder %s14, 1
    %p74 = por %p72, %p73
    %p75 = scmp.ne.s32.totalorder %s66, %s67
    %p76 = scmp.eq.s32.totalorder %s14, 0
    %p77 = por %p75, %p76
    %p78 = scmp.ne.s32.totalorder %s66, %s67
    %p79 = scmp.eq.s32.totalorder %s15, 1
    %p80 = por %p78, %p79
    %p82 = scmp.ne.s32.totalorder %s67, %s81
    %p83 = scmp.eq.s32.totalorder %s15, 0
    %p84 = por %p82, %p83
    %s85 = ssub.s32 %s9, %s16
    %p86 = scmp.eq.s32.totalorder %s85, 0
    %s88 = sadd.s32 %s87, 1
    %s89 = scalar_select %p86, %s87, %s88
    %p92 = pneg %p86
    %p93 = scmp.eq.s32.totalorder %s9, 1
    %p94 = por %p92, %p93
    %p95 = scmp.ne.s32.totalorder %s87, %s90
    %p96 = scmp.eq.s32.totalorder %s9, 0
    %p97 = por %p95, %p96
    %p98 = scmp.ne.s32.totalorder %s87, %s90
    %p99 = scmp.eq.s32.totalorder %s14, 1
    %p100 = por %p98, %p99
    %p101 = scmp.ne.s32.totalorder %s90, %s91
    %p102 = scmp.eq.s32.totalorder %s14, 0
    %p103 = por %p101, %p102
    %p104 = scmp.ne.s32.totalorder %s90, %s91
    %p105 = scmp.eq.s32.totalorder %s15, 1
    %p106 = por %p104, %p105
    %p108 = scmp.ne.s32.totalorder %s91, %s107
    %p109 = scmp.eq.s32.totalorder %s15, 0
    %p110 = por %p108, %p109
    %p111 = scmp.le.s32.totalorder 1, %s9
    %p112 = scmp.lt.s32.totalorder %s9, 3
    %p113 = pnand %p111, %p112
    %p114 = pneg %p113
    // Predicated region
    $region9: #{_lambda_.6} parent=5 // pred_check
      _
    $region10: #{_lambda_.6} parent=5 // pred_check_branch
      %116 = sbr.rel (%p113) target = $region12
    $region11: #{_lambda_.6} parent=5 // pred_region
      %s117 = ssub.s32 %s9, 1
      // Predicated region
      $region13: #{_lambda_.6} parent=11 // pred_check
        %p118 = pneg %p56
      $region14: #{_lambda_.6} parent=11 // pred_check_branch
        %120 = sbr.rel (%p118) target = $region16
      $region15: #{_lambda_.6} parent=11 // pred_region
        _
      $region16: #{_lambda_.6} parent=11 // pred_fallthru
        _
      // Predicated region
      $region17: #{_lambda_.6} parent=11 // pred_check
        %p121 = pneg %p77
      $region18: #{_lambda_.6} parent=11 // pred_check_branch
        %123 = sbr.rel (%p121) target = $region20
      $region19: #{_lambda_.6} parent=11 // pred_region
        _
      $region20: #{_lambda_.6} parent=11 // pred_fallthru
        _
    $region12: #{_lambda_.6} parent=5 // pred_fallthru
      _
    %p124 = scmp.lt.s32.totalorder %s9, 2
    // Predicated region
    $region21: #{_lambda_.6} parent=5 // pred_check
      %p125 = pneg %p124
    $region22: #{_lambda_.6} parent=5 // pred_check_branch
      %127 = sbr.rel (%p125) target = $region24
    $region23: #{_lambda_.6} parent=5 // pred_region
      // Predicated region
      $region25: #{_lambda_.6} parent=23 // pred_check
        %p128 = pneg %p29
      $region26: #{_lambda_.6} parent=23 // pred_check_branch
        %130 = sbr.rel (%p128) target = $region28
      $region27: #{_lambda_.6} parent=23 // pred_region
        %s131 = smul.u32 4, %s9
        %p132 = scmp.lt.s32.totalorder %s131, 7
        %s133 = scalar_select %p132, %s131, 7
        %s134 = smul.addr %s133, 4
        %s135 = smul.addr %s134, 4
        %s136 = scalar_lea.vmem %s0, %s135
        %s137 = smul.u32 4, %s9
      $region28: #{_lambda_.6} parent=23 // pred_fallthru
        _
    $region24: #{_lambda_.6} parent=5 // pred_fallthru
      _
    %p138 = scmp.le.s32.totalorder 1, %s9
    %p139 = scmp.lt.s32.totalorder %s9, 3
    %p140 = pnand %p138, %p139
    %p141 = pneg %p140
    // Predicated region
    $region29: #{_lambda_.6} parent=5 // pred_check
      _
    $region30: #{_lambda_.6} parent=5 // pred_check_branch
      %143 = sbr.rel (%p140) target = $region32
    $region31: #{_lambda_.6} parent=5 // pred_region
      %s144 = ssub.s32 %s9, 1
      %s145 = smul.u32 4, %s14
      %p146 = scmp.lt.s32.totalorder %s145, 7
      %s147 = scalar_select %p146, %s145, 7
      %s148 = smul.addr %s147, 4
      %s149 = smul.addr %s148, 4
      %s150 = scalar_lea.vmem %s0, %s149
      %p151 = pneg %p35
      %p152 = pneg %p32
      %p153 = pneg %p56
      %p154 = pneg %p53
      %p155 = pneg %p77
      %p156 = pneg %p74
      %p157 = pneg %p103
      %p158 = pneg %p100
      %p159 = scmp.lt.s32.totalorder %s14, 1
      %s160 = scalar_select %p159, %s14, 1
      %s161 = smul.addr %s160, 3
      %s162 = smul.addr %s161, 4
      %s163 = scalar_lea.vmem %s3, %s162
      %s164 = smul.u32 4, %s14
      %p165 = scmp.lt.s32.totalorder %s164, 7
      %s166 = scalar_select %p165, %s164, 7
      %s167 = smul.addr %s166, 4
      %s168 = smul.addr %s167, 4
      %s169 = scalar_lea.vmem %s0, %s168
      %s170 = smul.u32 4, %s14
      %p171 = scmp.lt.s32.totalorder %s14, 1
      %s172 = scalar_select %p171, %s14, 1
      %s173 = smul.addr %s172, 3
      %s174 = smul.addr %s173, 4
      %s175 = scalar_lea.vmem %s3, %s174
      %v177 = vld [vmem:[%s169] sm:$0xf]
      %v178 = vld [vmem:[%s169 + $0x4] sm:$0xf]
      %v179 = vld [vmem:[%s169 + $0x8] sm:$0x3]
      %v180 = vld [vmem:[%s1] sm:$0xf]
      %v181 = vld [vmem:[%s1 + $0x4] sm:$0xf]
      %s182 = scalar_lea.vmem %s169, 16
      %v183 = vld [vmem:[%s182] sm:$0xf]
      %v184 = vld [vmem:[%s182 + $0x4] sm:$0xf]
      %v185 = vld [vmem:[%s182 + $0x8] sm:$0x3]
      %s186 = scalar_lea.vmem %s1, 8
      %v187 = vld [vmem:[%s186] sm:$0xf]
      %v188 = vld [vmem:[%s186 + $0x4] sm:$0xf]
      %v192 = vunpack.c.l.b16 %v183
      %v193 = vunpack.c.l.b16 %v184
      %v194 = vunpack.c.l.b16 %v185
      %v195 = vpack.c.b16 %v193, %v192
      %v196 = vpack.c.b16 %v194, %v194
      %v199 = vunpack.c.l.b16 %v187
      %v200 = vunpack.c.l.b16 %v188
      %v201 = vpack.c.b16 %v200, %v199
      %vm203 = vcmask 130048
      %v205 = vsel %vm203, %v195, 0
      %v208 = vsel %vm203, %v196, 0
      %210 = vmatpush.bf16.msra.mxu0 0
      %211 = vmatpush.bf16.msra.mxu0 0
      %212 = vmatpush.bf16.msra.mxu0 0
      %213 = vmatpush.bf16.msra.mxu0 0
      %214 = vmatpush.bf16.msra.mxu0 0
      %215 = vmatpush.bf16.msra.mxu0 0
      %216 = vmatpush.bf16.msra.mxu0 0
      %217 = vmatpush.bf16.msra.mxu0 %v201
      %218 = vmatmul.bf16.gmra.mxu0 %v205
      %v219 = vpop.f32.mrf.mxu0
      %v220 = vadd.f32 0.0, %v219
      %v221 = vpop.f32.mrf.mxu0
      %v222 = vadd.f32 0.0, %v221
      %223 = vmatmul.bf16.gmra.mxu0 %v208
      %v224 = vpop.f32.mrf.mxu0
      %v225 = vadd.f32 0.0, %v224
      %v226 = vpop.f32.mrf.mxu0
      %227 = vdwg.mxu0
      %v231 = vunpack.c.l.b16 %v177
      %v232 = vunpack.c.l.b16 %v178
      %v233 = vunpack.c.l.b16 %v179
      %v234 = vpack.c.b16 %v232, %v231
      %v235 = vpack.c.b16 %v233, %v233
      %v238 = vunpack.c.l.b16 %v180
      %v239 = vunpack.c.l.b16 %v181
      %v240 = vpack.c.b16 %v239, %v238
      %v243 = vsel %vm203, %v234, 0
      %v246 = vsel %vm203, %v235, 0
      %248 = vmatpush.bf16.msra.mxu0 0
      %249 = vmatpush.bf16.msra.mxu0 0
      %250 = vmatpush.bf16.msra.mxu0 0
      %251 = vmatpush.bf16.msra.mxu0 0
      %252 = vmatpush.bf16.msra.mxu0 0
      %253 = vmatpush.bf16.msra.mxu0 0
      %254 = vmatpush.bf16.msra.mxu0 0
      %255 = vmatpush.bf16.msra.mxu0 %v240
      %256 = vmatmul.bf16.gmra.mxu0 %v243
      %v257 = vpop.f32.mrf.mxu0
      %v258 = vadd.f32 %v220, %v257
      %v259 = vpop.f32.mrf.mxu0
      %v260 = vadd.f32 %v222, %v259
      %261 = vmatmul.bf16.gmra.mxu0 %v246
      %v262 = vpop.f32.mrf.mxu0
      %v263 = vadd.f32 %v225, %v262
      %v264 = vpop.f32.mrf.mxu0
      %265 = vdwg.mxu0
      %v266 = vld [vmem:[%s169 + $0x8] sm:$0x7]
      %s267 = scalar_lea.vmem %s1, 16
      %v268 = vld [vmem:[%s267] sm:$0xf]
      %v269 = vld [vmem:[%s267 + $0x4] sm:$0xf]
      %v271 = vunpack.c.l.b16 %v266
      %v272 = vpack.c.b16 %v271, %v271
      %vm273 = vsmask.f32 7424
      %v274 = vshrl.u32 %v234, 16
      %v276 = vshll.u32 %v234, 16
      %v278 = vrot.slane %v276, 1
      %v279 = vor.u32 %v274, %v278
      %v281 = vshll.u32 %v272, 16
      %v283 = vrot.slane %v281, 1
      %v284 = vsel %vm273, %v279, %v283
      %v285 = vshrl.u32 %v272, 16
      %v287 = vor.u32 %v285, %v283
      %v290 = vunpack.c.l.b16 %v268
      %v291 = vunpack.c.l.b16 %v269
      %v292 = vpack.c.b16 %v291, %v290
      %v295 = vsel %vm203, %v284, 0
      %v298 = vsel %vm203, %v287, 0
      %300 = vmatpush.bf16.msra.mxu0 0
      %301 = vmatpush.bf16.msra.mxu0 0
      %302 = vmatpush.bf16.msra.mxu0 0
      %303 = vmatpush.bf16.msra.mxu0 0
      %304 = vmatpush.bf16.msra.mxu0 0
      %305 = vmatpush.bf16.msra.mxu0 0
      %306 = vmatpush.bf16.msra.mxu0 0
      %307 = vmatpush.bf16.msra.mxu0 %v292
      %308 = vmatmul.bf16.gmra.mxu0 %v295
      %v309 = vpop.f32.mrf.mxu0
      %v310 = vadd.f32 0.0, %v309
      %v311 = vpop.f32.mrf.mxu0
      %v312 = vadd.f32 0.0, %v311
      %313 = vmatmul.bf16.gmra.mxu0 %v298
      %v314 = vpop.f32.mrf.mxu0
      %v315 = vadd.f32 0.0, %v314
      %v316 = vpop.f32.mrf.mxu0
      %317 = vdwg.mxu0
      %v318 = vadd.f32 %v258, %v310
      %v319 = vadd.f32 %v260, %v312
      %v320 = vadd.f32 %v263, %v315
      %s321 = scalar_lea.vmem %s169, 32
      %v322 = vld [vmem:[%s321] sm:$0xf]
      %v323 = vld [vmem:[%s321 + $0x4] sm:$0xf]
      %v324 = vld [vmem:[%s321 + $0x8] sm:$0x3]
      %s325 = scalar_lea.vmem %s1, 24
      %v326 = vld [vmem:[%s325] sm:$0xf]
      %v327 = vld [vmem:[%s325 + $0x4] sm:$0xf]
      %v331 = vunpack.c.l.b16 %v322
      %v332 = vunpack.c.l.b16 %v323
      %v333 = vunpack.c.l.b16 %v324
      %v334 = vpack.c.b16 %v332, %v331
      %v335 = vpack.c.b16 %v333, %v333
      %v338 = vunpack.c.l.b16 %v326
      %v339 = vunpack.c.l.b16 %v327
      %v340 = vpack.c.b16 %v339, %v338
      %v343 = vsel %vm203, %v334, 0
      %v346 = vsel %vm203, %v335, 0
      %348 = vmatpush.bf16.msra.mxu0 0
      %349 = vmatpush.bf16.msra.mxu0 0
      %350 = vmatpush.bf16.msra.mxu0 0
      %351 = vmatpush.bf16.msra.mxu0 0
      %352 = vmatpush.bf16.msra.mxu0 0
      %353 = vmatpush.bf16.msra.mxu0 0
      %354 = vmatpush.bf16.msra.mxu0 0
      %355 = vmatpush.bf16.msra.mxu0 %v340
      %356 = vmatmul.bf16.gmra.mxu0 %v343
      %v357 = vpop.f32.mrf.mxu0
      %v358 = vadd.f32 0.0, %v357
      %v359 = vpop.f32.mrf.mxu0
      %v360 = vadd.f32 0.0, %v359
      %361 = vmatmul.bf16.gmra.mxu0 %v346
      %v362 = vpop.f32.mrf.mxu0
      %v363 = vadd.f32 0.0, %v362
      %v364 = vpop.f32.mrf.mxu0
      %365 = vdwg.mxu0
      %v366 = vadd.f32 %v318, %v358
      %v367 = vadd.f32 %v319, %v360
      %v368 = vadd.f32 %v320, %v363
      %s369 = scalar_lea.vmem %s169, 48
      %v370 = vld [vmem:[%s369] sm:$0xf]
      %v371 = vld [vmem:[%s369 + $0x4] sm:$0xf]
      %v372 = vld [vmem:[%s369 + $0x8] sm:$0x3]
      %s373 = scalar_lea.vmem %s1, 32
      %v374 = vld [vmem:[%s373] sm:$0xf]
      %v375 = vld [vmem:[%s373 + $0x4] sm:$0xf]
      %v379 = vunpack.c.l.b16 %v370
      %v380 = vunpack.c.l.b16 %v371
      %v381 = vunpack.c.l.b16 %v372
      %v382 = vpack.c.b16 %v380, %v379
      %v383 = vpack.c.b16 %v381, %v381
      %v386 = vunpack.c.l.b16 %v374
      %v387 = vunpack.c.l.b16 %v375
      %v388 = vpack.c.b16 %v387, %v386
      %v391 = vsel %vm203, %v382, 0
      %v394 = vsel %vm203, %v383, 0
      %396 = vmatpush.bf16.msra.mxu0 0
      %397 = vmatpush.bf16.msra.mxu0 0
      %398 = vmatpush.bf16.msra.mxu0 0
      %399 = vmatpush.bf16.msra.mxu0 0
      %400 = vmatpush.bf16.msra.mxu0 0
      %401 = vmatpush.bf16.msra.mxu0 0
      %402 = vmatpush.bf16.msra.mxu0 0
      %403 = vmatpush.bf16.msra.mxu0 %v388
      %404 = vmatmul.bf16.gmra.mxu0 %v391
      %v405 = vpop.f32.mrf.mxu0
      %v406 = vadd.f32 0.0, %v405
      %v407 = vpop.f32.mrf.mxu0
      %v408 = vadd.f32 0.0, %v407
      %409 = vmatmul.bf16.gmra.mxu0 %v394
      %v410 = vpop.f32.mrf.mxu0
      %v411 = vadd.f32 0.0, %v410
      %v412 = vpop.f32.mrf.mxu0
      %413 = vdwg.mxu0
      %v414 = vadd.f32 %v366, %v406
      %v415 = vadd.f32 %v367, %v408
      %v416 = vadd.f32 %v368, %v411
      %v417 = vld [vmem:[%s321 + $0x8] sm:$0x7]
      %s418 = scalar_lea.vmem %s1, 40
      %v419 = vld [vmem:[%s418] sm:$0xf]
      %v420 = vld [vmem:[%s418 + $0x4] sm:$0xf]
      %v422 = vunpack.c.l.b16 %v417
      %v423 = vpack.c.b16 %v422, %v422
      %v424 = vshrl.u32 %v334, 16
      %v426 = vshll.u32 %v334, 16
      %v428 = vrot.slane %v426, 1
      %v429 = vor.u32 %v424, %v428
      %v431 = vshll.u32 %v423, 16
      %v433 = vrot.slane %v431, 1
      %v434 = vsel %vm273, %v429, %v433
      %v435 = vshrl.u32 %v423, 16
      %v437 = vor.u32 %v435, %v433
      %v440 = vunpack.c.l.b16 %v419
      %v441 = vunpack.c.l.b16 %v420
      %v442 = vpack.c.b16 %v441, %v440
      %v445 = vsel %vm203, %v434, 0
      %v448 = vsel %vm203, %v437, 0
      %450 = vmatpush.bf16.msra.mxu0 0
      %451 = vmatpush.bf16.msra.mxu0 0
      %452 = vmatpush.bf16.msra.mxu0 0
      %453 = vmatpush.bf16.msra.mxu0 0
      %454 = vmatpush.bf16.msra.mxu0 0
      %455 = vmatpush.bf16.msra.mxu0 0
      %456 = vmatpush.bf16.msra.mxu0 0
      %457 = vmatpush.bf16.msra.mxu0 %v442
      %458 = vmatmul.bf16.gmra.mxu0 %v445
      %v459 = vpop.f32.mrf.mxu0
      %v460 = vadd.f32 0.0, %v459
      %v461 = vpop.f32.mrf.mxu0
      %v462 = vadd.f32 0.0, %v461
      %463 = vmatmul.bf16.gmra.mxu0 %v448
      %v464 = vpop.f32.mrf.mxu0
      %v465 = vadd.f32 0.0, %v464
      %v466 = vpop.f32.mrf.mxu0
      %467 = vdwg.mxu0
      %v468 = vadd.f32 %v414, %v460
      %v469 = vadd.f32 %v415, %v462
      %v470 = vadd.f32 %v416, %v465
      %v471 = vld [vmem:[%s169] sm:$0xc]
      %v472 = vld [vmem:[%s169 + $0x4] sm:$0xf]
      %v473 = vld [vmem:[%s169 + $0x8] sm:$0xf]
      %v474 = vld [vmem:[%s169 + $0xc] sm:$0x1]
      %s475 = scalar_lea.vmem %s1, 48
      %v476 = vld [vmem:[%s475] sm:$0xf]
      %v477 = vld [vmem:[%s475 + $0x4] sm:$0xf]
      %v482 = vunpack.c.l.b16 %v471
      %v483 = vunpack.c.l.b16 %v472
      %v484 = vunpack.c.l.b16 %v473
      %v485 = vunpack.c.l.b16 %v474
      %v486 = vpack.c.b16 %v483, %v482
      %v487 = vpack.c.b16 %v485, %v484
      %vm488 = vsmask.f32 5376
      %v490 = vshrl.u32 %v486, 16
      %v492 = vrot.slane %v490, 2
      %v493 = vshll.u32 %v486, 16
      %v495 = vrot.slane %v493, 3
      %v496 = vor.u32 %v492, %v495
      %v498 = vshrl.u32 %v487, 16
      %v500 = vrot.slane %v498, 2
      %v501 = vshll.u32 %v487, 16
      %v503 = vrot.slane %v501, 3
      %v504 = vor.u32 %v500, %v503
      %v505 = vsel %vm488, %v496, %v504
      %v508 = vunpack.c.l.b16 %v476
      %v509 = vunpack.c.l.b16 %v477
      %v510 = vpack.c.b16 %v509, %v508
      %v513 = vsel %vm203, %v505, 0
      %v516 = vsel %vm203, %v504, 0
      %518 = vmatpush.bf16.msra.mxu0 0
      %519 = vmatpush.bf16.msra.mxu0 0
      %520 = vmatpush.bf16.msra.mxu0 0
      %521 = vmatpush.bf16.msra.mxu0 0
      %522 = vmatpush.bf16.msra.mxu0 0
      %523 = vmatpush.bf16.msra.mxu0 0
      %524 = vmatpush.bf16.msra.mxu0 0
      %525 = vmatpush.bf16.msra.mxu0 %v510
      %526 = vmatmul.bf16.gmra.mxu0 %v513
      %v527 = vpop.f32.mrf.mxu0
      %v528 = vadd.f32 0.0, %v527
      %v529 = vpop.f32.mrf.mxu0
      %v530 = vadd.f32 0.0, %v529
      %531 = vmatmul.bf16.gmra.mxu0 %v516
      %v532 = vpop.f32.mrf.mxu0
      %v533 = vadd.f32 0.0, %v532
      %v534 = vpop.f32.mrf.mxu0
      %535 = vdwg.mxu0
      %v536 = vadd.f32 %v468, %v528
      %v537 = vadd.f32 %v469, %v530
      %v538 = vadd.f32 %v470, %v533
      %v539 = vld [vmem:[%s182] sm:$0xc]
      %v540 = vld [vmem:[%s182 + $0x4] sm:$0xf]
      %v541 = vld [vmem:[%s182 + $0x8] sm:$0xf]
      %v542 = vld [vmem:[%s182 + $0xc] sm:$0x1]
      %s543 = scalar_lea.vmem %s1, 56
      %v544 = vld [vmem:[%s543] sm:$0xf]
      %v545 = vld [vmem:[%s543 + $0x4] sm:$0xf]
      %v550 = vunpack.c.l.b16 %v539
      %v551 = vunpack.c.l.b16 %v540
      %v552 = vunpack.c.l.b16 %v541
      %v553 = vunpack.c.l.b16 %v542
      %v554 = vpack.c.b16 %v551, %v550
      %v555 = vpack.c.b16 %v553, %v552
      %v557 = vshrl.u32 %v554, 16
      %v559 = vrot.slane %v557, 2
      %v560 = vshll.u32 %v554, 16
      %v562 = vrot.slane %v560, 3
      %v563 = vor.u32 %v559, %v562
      %v565 = vshrl.u32 %v555, 16
      %v567 = vrot.slane %v565, 2
      %v568 = vshll.u32 %v555, 16
      %v570 = vrot.slane %v568, 3
      %v571 = vor.u32 %v567, %v570
      %v572 = vsel %vm488, %v563, %v571
      %v575 = vunpack.c.l.b16 %v544
      %v576 = vunpack.c.l.b16 %v545
      %v577 = vpack.c.b16 %v576, %v575
      %v580 = vsel %vm203, %v572, 0
      %v583 = vsel %vm203, %v571, 0
      %585 = vmatpush.bf16.msra.mxu0 0
      %586 = vmatpush.bf16.msra.mxu0 0
      %587 = vmatpush.bf16.msra.mxu0 0
      %588 = vmatpush.bf16.msra.mxu0 0
      %589 = vmatpush.bf16.msra.mxu0 0
      %590 = vmatpush.bf16.msra.mxu0 0
      %591 = vmatpush.bf16.msra.mxu0 0
      %592 = vmatpush.bf16.msra.mxu0 %v577
      %593 = vmatmul.bf16.gmra.mxu0 %v580
      %v594 = vpop.f32.mrf.mxu0
      %v595 = vadd.f32 0.0, %v594
      %v596 = vpop.f32.mrf.mxu0
      %v597 = vadd.f32 0.0, %v596
      %598 = vmatmul.bf16.gmra.mxu0 %v583
      %v599 = vpop.f32.mrf.mxu0
      %v600 = vadd.f32 0.0, %v599
      %v601 = vpop.f32.mrf.mxu0
      %602 = vdwg.mxu0
      %v603 = vadd.f32 %v536, %v595
      %v604 = vadd.f32 %v537, %v597
      %v605 = vadd.f32 %v538, %v600
      %v606 = vld [vmem:[%s169] sm:$0x8]
      %s607 = scalar_lea.vmem %s1, 64
      %v608 = vld [vmem:[%s607] sm:$0xf]
      %v609 = vld [vmem:[%s607 + $0x4] sm:$0xf]
      %v611 = vunpack.c.l.b16 %v606
      %v612 = vpack.c.b16 %v483, %v611
      %vm613 = vcmask 1044480
      %v614 = vrot.slane %v612, 3
      %v615 = vrot.slane %v487, 3
      %v616 = vsel %vm613, %v614, %v615
      %v619 = vunpack.c.l.b16 %v608
      %v620 = vunpack.c.l.b16 %v609
      %v621 = vpack.c.b16 %v620, %v619
      %v624 = vsel %vm203, %v616, 0
      %v627 = vsel %vm203, %v615, 0
      %629 = vmatpush.bf16.msra.mxu0 0
      %630 = vmatpush.bf16.msra.mxu0 0
      %631 = vmatpush.bf16.msra.mxu0 0
      %632 = vmatpush.bf16.msra.mxu0 0
      %633 = vmatpush.bf16.msra.mxu0 0
      %634 = vmatpush.bf16.msra.mxu0 0
      %635 = vmatpush.bf16.msra.mxu0 0
      %636 = vmatpush.bf16.msra.mxu0 %v621
      %637 = vmatmul.bf16.gmra.mxu0 %v624
      %v638 = vpop.f32.mrf.mxu0
      %v639 = vadd.f32 0.0, %v638
      %v640 = vpop.f32.mrf.mxu0
      %v641 = vadd.f32 0.0, %v640
      %642 = vmatmul.bf16.gmra.mxu0 %v627
      %v643 = vpop.f32.mrf.mxu0
      %v644 = vadd.f32 0.0, %v643
      %v645 = vpop.f32.mrf.mxu0
      %646 = vdwg.mxu0
      %v647 = vadd.f32 %v603, %v639
      %v648 = vadd.f32 %v604, %v641
      %v649 = vadd.f32 %v605, %v644
      %v650 = vld [vmem:[%s2] sm:$0x1]
      %v652 = vperm.slane %v650, 0
      %v654 = vadd.f32 %v647, %v652
      %v655 = vadd.f32 %v648, %v652
      %v656 = vadd.f32 %v649, %v652
      %vm657 = vcmp.ge.f32.partialorder %v654, 0.0
      %vm658 = vcmp.ge.f32.partialorder %v655, 0.0
      %vm659 = vcmp.ge.f32.partialorder %v656, 0.0
      %v660 = vmul.f32 %v654, 0.2
      %v661 = vmul.f32 %v655, 0.2
      %v662 = vmul.f32 %v656, 0.2
      %v663 = vsel %vm657, %v654, %v660
      %v664 = vsel %vm658, %v655, %v661
      %v665 = vsel %vm659, %v656, %v662
      %v666 = vpack.c.bf16 %v663, %v663
      %v667 = vpack.c.bf16 %v664, %v664
      %v668 = vpack.c.bf16 %v665, %v665
      %vm669 = vcmask 257024
      %670 = vst.msk [vmem:[%s175] sm:$0xf] %vm669, %v666
      %671 = vst.msk [vmem:[%s175 + $0x4] sm:$0xf] %vm669, %v667
      %vm672 = vcmask 254976
      %673 = vst.msk [vmem:[%s175 + $0x8] sm:$0x3] %vm672, %v668
      %p674 = scmp.lt.s32.totalorder %s14, 1
      %s675 = scalar_select %p674, %s14, 1
      %s676 = smul.addr %s675, 3
      %s677 = smul.addr %s676, 4
      %s678 = scalar_lea.vmem %s3, %s677
      // Predicated region
      $region33: #{_lambda_.6} parent=31 // pred_check
        %p679 = pneg %p100
      $region34: #{_lambda_.6} parent=31 // pred_check_branch
        %681 = sbr.rel (%p679) target = $region36
      $region35: #{_lambda_.6} parent=31 // pred_region
        _
      $region36: #{_lambda_.6} parent=31 // pred_fallthru
        _
    $region32: #{_lambda_.6} parent=5 // pred_fallthru
      _
    %p682 = scmp.le.s32.totalorder 2, %s9
    // Predicated region
    $region37: #{_lambda_.6} parent=5 // pred_check
      %p683 = pneg %p682
    $region38: #{_lambda_.6} parent=5 // pred_check_branch
      %685 = sbr.rel (%p683) target = $region40
    $region39: #{_lambda_.6} parent=5 // pred_region
      %s686 = ssub.s32 %s9, 2
      // Predicated region
      $region41: #{_lambda_.6} parent=39 // pred_check
        %p687 = pneg %p106
      $region42: #{_lambda_.6} parent=39 // pred_check_branch
        %689 = sbr.rel (%p687) target = $region44
      $region43: #{_lambda_.6} parent=39 // pred_region
        %p690 = scmp.lt.s32.totalorder %s15, 1
        %s691 = scalar_select %p690, %s15, 1
        %s692 = smul.addr %s691, 3
        %s693 = smul.addr %s692, 4
        %s694 = scalar_lea.vmem %s3, %s693
      $region44: #{_lambda_.6} parent=39 // pred_fallthru
        _
    $region40: #{_lambda_.6} parent=5 // pred_fallthru
      _
  $region6: #{_lambda_.6} parent=0 // loop_footer
    %s13 = sadd.s32 1, %s9
  $region7: #{_lambda_.6} parent=0 // loop_footer_branch
    %8 = sbr.rel target = $region3
  $region8: #{_lambda_.6} parent=0 // loop_exit
    _

// kernel: _lambda_.7
$region0: #{_lambda_.7}
  #allocation0 [shape = 'u32[]', space=smem, size = 0x4, offset = 0x4, fixed_abs, tag = 'smem constant byte address 0x4 - core index']
  #allocation1 [shape = 'u32[72,128]{1,0:T(1,128)}', space=vmem, size = 0x9000, scoped, tag = 'internal scratch']
  %s0 = inlined_call_operand.vmem [shape: bf16[8,10,32], index: 0, kind: input, shape index: {}]
  %s1 = inlined_call_operand.vmem [shape: bf16[3,3,32,64], index: 1, kind: input, shape index: {}]
  %s2 = inlined_call_operand.vmem [shape: f32[1,64], index: 2, kind: input, shape index: {}]
  %s3 = inlined_call_operand.vmem [shape: bf16[2,6,64], index: 3, kind: output, shape index: {}]
  %s4 = sld [smem:[#allocation0]]
  $region45: #{_lambda_.7} parent=0
    _
  %s6 = ssub.s32 1, %s4
  %s7 = scalar_select 0, %s6, %s4
  loop: start=0, step=1, limit=4
  $region2: #{_lambda_.7} parent=0 // loop_pre_header
    _
  $region3: #{_lambda_.7} parent=0 // loop_header
    %s9 = sphi 0, %s13
    %p10 = scmp.ge.s32.totalorder %s9, 4
    %s19 = sphi 0, %s21
    %s22 = sphi 0, %s19
    %s23 = sphi 0, %s22
    %s39 = sphi 0, %s23
    %s43 = sphi 0, %s43
    %s45 = sphi 0, %s43
    %s46 = sphi 0, %s45
    %s60 = sphi 0, %s46
    %s64 = sphi 0, %s64
    %s66 = sphi 0, %s64
    %s67 = sphi 0, %s66
    %s81 = sphi 0, %s67
    %s87 = sphi 0, %s89
    %s90 = sphi 0, %s87
    %s91 = sphi 0, %s90
    %s107 = sphi 0, %s91
  $region4: #{_lambda_.7} parent=0 // loop_header_branch
    %12 = sbr.rel (%p10) target = $region8
  $region5: #{_lambda_.7} parent=0 // loop_body
    %s14 = ssub.s32 %s9, 1
    %s15 = ssub.s32 %s9, 2
    %s16 = sadd.s32 %s9, 1
    %s17 = ssub.s32 %s9, %s16
    %p18 = scmp.eq.s32.totalorder %s17, 0
    %s20 = sadd.s32 %s19, 1
    %s21 = scalar_select %p18, %s19, %s20
    %p24 = pneg %p18
    %p25 = scmp.eq.s32.totalorder %s9, 1
    %p26 = por %p24, %p25
    %p27 = scmp.ne.s32.totalorder %s19, %s22
    %p28 = scmp.eq.s32.totalorder %s9, 0
    %p29 = por %p27, %p28
    %p30 = scmp.ne.s32.totalorder %s19, %s22
    %p31 = scmp.eq.s32.totalorder %s14, 1
    %p32 = por %p30, %p31
    %p33 = scmp.ne.s32.totalorder %s22, %s23
    %p34 = scmp.eq.s32.totalorder %s14, 0
    %p35 = por %p33, %p34
    %p36 = scmp.ne.s32.totalorder %s22, %s23
    %p37 = scmp.eq.s32.totalorder %s15, 1
    %p38 = por %p36, %p37
    %p40 = scmp.ne.s32.totalorder %s23, %s39
    %p41 = scmp.eq.s32.totalorder %s15, 0
    %p42 = por %p40, %p41
    %s44 = sadd.s32 %s43, 1
    %p47 = scmp.eq.s32.totalorder %s9, 1
    %p48 = scmp.ne.s32.totalorder %s43, %s45
    %p49 = scmp.eq.s32.totalorder %s9, 0
    %p50 = por %p48, %p49
    %p51 = scmp.ne.s32.totalorder %s43, %s45
    %p52 = scmp.eq.s32.totalorder %s14, 1
    %p53 = por %p51, %p52
    %p54 = scmp.ne.s32.totalorder %s45, %s46
    %p55 = scmp.eq.s32.totalorder %s14, 0
    %p56 = por %p54, %p55
    %p57 = scmp.ne.s32.totalorder %s45, %s46
    %p58 = scmp.eq.s32.totalorder %s15, 1
    %p59 = por %p57, %p58
    %p61 = scmp.ne.s32.totalorder %s46, %s60
    %p62 = scmp.eq.s32.totalorder %s15, 0
    %p63 = por %p61, %p62
    %s65 = sadd.s32 %s64, 1
    %p68 = scmp.eq.s32.totalorder %s9, 1
    %p69 = scmp.ne.s32.totalorder %s64, %s66
    %p70 = scmp.eq.s32.totalorder %s9, 0
    %p71 = por %p69, %p70
    %p72 = scmp.ne.s32.totalorder %s64, %s66
    %p73 = scmp.eq.s32.totalorder %s14, 1
    %p74 = por %p72, %p73
    %p75 = scmp.ne.s32.totalorder %s66, %s67
    %p76 = scmp.eq.s32.totalorder %s14, 0
    %p77 = por %p75, %p76
    %p78 = scmp.ne.s32.totalorder %s66, %s67
    %p79 = scmp.eq.s32.totalorder %s15, 1
    %p80 = por %p78, %p79
    %p82 = scmp.ne.s32.totalorder %s67, %s81
    %p83 = scmp.eq.s32.totalorder %s15, 0
    %p84 = por %p82, %p83
    %s85 = ssub.s32 %s9, %s16
    %p86 = scmp.eq.s32.totalorder %s85, 0
    %s88 = sadd.s32 %s87, 1
    %s89 = scalar_select %p86, %s87, %s88
    %p92 = pneg %p86
    %p93 = scmp.eq.s32.totalorder %s9, 1
    %p94 = por %p92, %p93
    %p95 = scmp.ne.s32.totalorder %s87, %s90
    %p96 = scmp.eq.s32.totalorder %s9, 0
    %p97 = por %p95, %p96
    %p98 = scmp.ne.s32.totalorder %s87, %s90
    %p99 = scmp.eq.s32.totalorder %s14, 1
    %p100 = por %p98, %p99
    %p101 = scmp.ne.s32.totalorder %s90, %s91
    %p102 = scmp.eq.s32.totalorder %s14, 0
    %p103 = por %p101, %p102
    %p104 = scmp.ne.s32.totalorder %s90, %s91
    %p105 = scmp.eq.s32.totalorder %s15, 1
    %p106 = por %p104, %p105
    %p108 = scmp.ne.s32.totalorder %s91, %s107
    %p109 = scmp.eq.s32.totalorder %s15, 0
    %p110 = por %p108, %p109
    %p111 = scmp.le.s32.totalorder 1, %s9
    %p112 = scmp.lt.s32.totalorder %s9, 3
    %p113 = pnand %p111, %p112
    %p114 = pneg %p113
    // Predicated region
    $region9: #{_lambda_.7} parent=5 // pred_check
      _
    $region10: #{_lambda_.7} parent=5 // pred_check_branch
      %116 = sbr.rel (%p113) target = $region12
    $region11: #{_lambda_.7} parent=5 // pred_region
      %s117 = ssub.s32 %s9, 1
      // Predicated region
      $region13: #{_lambda_.7} parent=11 // pred_check
        %p118 = pneg %p56
      $region14: #{_lambda_.7} parent=11 // pred_check_branch
        %120 = sbr.rel (%p118) target = $region16
      $region15: #{_lambda_.7} parent=11 // pred_region
        _
      $region16: #{_lambda_.7} parent=11 // pred_fallthru
        _
      // Predicated region
      $region17: #{_lambda_.7} parent=11 // pred_check
        %p121 = pneg %p77
      $region18: #{_lambda_.7} parent=11 // pred_check_branch
        %123 = sbr.rel (%p121) target = $region20
      $region19: #{_lambda_.7} parent=11 // pred_region
        _
      $region20: #{_lambda_.7} parent=11 // pred_fallthru
        _
    $region12: #{_lambda_.7} parent=5 // pred_fallthru
      _
    %p124 = scmp.lt.s32.totalorder %s9, 2
    // Predicated region
    $region21: #{_lambda_.7} parent=5 // pred_check
      %p125 = pneg %p124
    $region22: #{_lambda_.7} parent=5 // pred_check_branch
      %127 = sbr.rel (%p125) target = $region24
    $region23: #{_lambda_.7} parent=5 // pred_region
      // Predicated region
      $region25: #{_lambda_.7} parent=23 // pred_check
        %p128 = pneg %p29
      $region26: #{_lambda_.7} parent=23 // pred_check_branch
        %130 = sbr.rel (%p128) target = $region28
      $region27: #{_lambda_.7} parent=23 // pred_region
        %s131 = smul.u32 4, %s9
        %p132 = scmp.lt.s32.totalorder %s131, 7
        %s133 = scalar_select %p132, %s131, 7
        %s134 = smul.addr %s133, 2
        %s135 = smul.addr %s134, 4
        %s136 = scalar_lea.vmem %s0, %s135
        %s137 = smul.u32 4, %s9
      $region28: #{_lambda_.7} parent=23 // pred_fallthru
        _
    $region24: #{_lambda_.7} parent=5 // pred_fallthru
      _
    %p138 = scmp.le.s32.totalorder 1, %s9
    %p139 = scmp.lt.s32.totalorder %s9, 3
    %p140 = pnand %p138, %p139
    %p141 = pneg %p140
    // Predicated region
    $region29: #{_lambda_.7} parent=5 // pred_check
      _
    $region30: #{_lambda_.7} parent=5 // pred_check_branch
      %143 = sbr.rel (%p140) target = $region32
    $region31: #{_lambda_.7} parent=5 // pred_region
      %s144 = ssub.s32 %s9, 1
      %s145 = smul.u32 4, %s14
      %p146 = scmp.lt.s32.totalorder %s145, 7
      %s147 = scalar_select %p146, %s145, 7
      %s148 = smul.addr %s147, 2
      %s149 = smul.addr %s148, 4
      %s150 = scalar_lea.vmem %s0, %s149
      %p151 = pneg %p35
      %p152 = pneg %p32
      %p153 = pneg %p56
      %p154 = pneg %p53
      %p155 = pneg %p77
      %p156 = pneg %p74
      %p157 = pneg %p103
      %p158 = pneg %p100
      %p159 = scmp.lt.s32.totalorder %s14, 1
      %s160 = scalar_select %p159, %s14, 1
      %s161 = smul.addr %s160, 4
      %s162 = scalar_lea.vmem %s3, %s161
      %s163 = smul.u32 4, %s14
      %p164 = scmp.lt.s32.totalorder %s163, 7
      %s165 = scalar_select %p164, %s163, 7
      %s166 = smul.addr %s165, 2
      %s167 = smul.addr %s166, 4
      %s168 = scalar_lea.vmem %s0, %s167
      %s169 = smul.u32 4, %s14
      %p170 = scmp.lt.s32.totalorder %s14, 1
      %s171 = scalar_select %p170, %s14, 1
      %s172 = smul.addr %s171, 4
      %s173 = scalar_lea.vmem %s3, %s172
      %v175 = vld [vmem:[%s168] sm:$0x7]
      %v176 = vld [vmem:[%s1] sm:$0xf]
      %v177 = vld [vmem:[%s1 + $0x4] sm:$0xf]
      %v178 = vld [vmem:[%s1 + $0x8] sm:$0xf]
      %v179 = vld [vmem:[%s1 + $0xc] sm:$0xf]
      %s180 = scalar_lea.vmem %s168, 8
      %v181 = vld [vmem:[%s180] sm:$0x7]
      %s182 = scalar_lea.vmem %s1, 16
      %v183 = vld [vmem:[%s182] sm:$0xf]
      %v184 = vld [vmem:[%s182 + $0x4] sm:$0xf]
      %v185 = vld [vmem:[%s182 + $0x8] sm:$0xf]
      %v186 = vld [vmem:[%s182 + $0xc] sm:$0xf]
      %v191 = vunpack.c.l.b16 %v183
      %v192 = vunpack.c.l.b16 %v184
      %v193 = vunpack.c.l.b16 %v185
      %v194 = vunpack.c.l.b16 %v186
      %v195 = vpack.c.b16 %v192, %v191
      %v196 = vpack.c.b16 %v194, %v193
      %vm199 = vcmask 261120
      %v201 = vsel %vm199, %v181, 0
      %203 = vmatpush.bf16.msra.mxu0 0
      %204 = vmatpush.bf16.msra.mxu0 0
      %205 = vmatpush.bf16.msra.mxu0 0
      %206 = vmatpush.bf16.msra.mxu0 0
      %207 = vmatpush.bf16.msra.mxu0 0
      %208 = vmatpush.bf16.msra.mxu0 0
      %209 = vmatpush.bf16.msra.mxu0 %v196
      %210 = vmatpush.bf16.msra.mxu0 %v195
      %211 = vmatmul.bf16.gmra.mxu0 %v201
      %v212 = vpop.f32.mrf.mxu0
      %v213 = vadd.f32 0.0, %v212
      %v214 = vpop.f32.mrf.mxu0
      %215 = vdwg.mxu0
      %v220 = vunpack.c.l.b16 %v176
      %v221 = vunpack.c.l.b16 %v177
      %v222 = vunpack.c.l.b16 %v178
      %v223 = vunpack.c.l.b16 %v179
      %v224 = vpack.c.b16 %v221, %v220
      %v225 = vpack.c.b16 %v223, %v222
      %v229 = vsel %vm199, %v175, 0
      %231 = vmatpush.bf16.msra.mxu0 0
      %232 = vmatpush.bf16.msra.mxu0 0
      %233 = vmatpush.bf16.msra.mxu0 0
      %234 = vmatpush.bf16.msra.mxu0 0
      %235 = vmatpush.bf16.msra.mxu0 0
      %236 = vmatpush.bf16.msra.mxu0 0
      %237 = vmatpush.bf16.msra.mxu0 %v225
      %238 = vmatpush.bf16.msra.mxu0 %v224
      %239 = vmatmul.bf16.gmra.mxu0 %v229
      %v240 = vpop.f32.mrf.mxu0
      %v241 = vadd.f32 %v213, %v240
      %v242 = vpop.f32.mrf.mxu0
      %243 = vdwg.mxu0
      %v244 = vld [vmem:[%s168] sm:$0xf]
      %s245 = scalar_lea.vmem %s1, 32
      %v246 = vld [vmem:[%s245] sm:$0xf]
      %v247 = vld [vmem:[%s245 + $0x4] sm:$0xf]
      %v248 = vld [vmem:[%s245 + $0x8] sm:$0xf]
      %v249 = vld [vmem:[%s245 + $0xc] sm:$0xf]
      %v251 = vunpack.c.l.b16 %v244
      %v252 = vpack.c.b16 %v251, %v251
      %v254 = vshrl.u32 %v252, 16
      %v256 = vshll.u32 %v252, 16
      %v258 = vrot.slane %v256, 1
      %v259 = vor.u32 %v254, %v258
      %v264 = vunpack.c.l.b16 %v246
      %v265 = vunpack.c.l.b16 %v247
      %v266 = vunpack.c.l.b16 %v248
      %v267 = vunpack.c.l.b16 %v249
      %v268 = vpack.c.b16 %v265, %v264
      %v269 = vpack.c.b16 %v267, %v266
      %v273 = vsel %vm199, %v259, 0
      %275 = vmatpush.bf16.msra.mxu0 0
      %276 = vmatpush.bf16.msra.mxu0 0
      %277 = vmatpush.bf16.msra.mxu0 0
      %278 = vmatpush.bf16.msra.mxu0 0
      %279 = vmatpush.bf16.msra.mxu0 0
      %280 = vmatpush.bf16.msra.mxu0 0
      %281 = vmatpush.bf16.msra.mxu0 %v269
      %282 = vmatpush.bf16.msra.mxu0 %v268
      %283 = vmatmul.bf16.gmra.mxu0 %v273
      %v284 = vpop.f32.mrf.mxu0
      %v285 = vadd.f32 0.0, %v284
      %v286 = vpop.f32.mrf.mxu0
      %287 = vdwg.mxu0
      %v288 = vadd.f32 %v241, %v285
      %s289 = scalar_lea.vmem %s168, 16
      %v290 = vld [vmem:[%s289] sm:$0x7]
      %s291 = scalar_lea.vmem %s1, 48
      %v292 = vld [vmem:[%s291] sm:$0xf]
      %v293 = vld [vmem:[%s291 + $0x4] sm:$0xf]
      %v294 = vld [vmem:[%s291 + $0x8] sm:$0xf]
      %v295 = vld [vmem:[%s291 + $0xc] sm:$0xf]
      %v300 = vunpack.c.l.b16 %v292
      %v301 = vunpack.c.l.b16 %v293
      %v302 = vunpack.c.l.b16 %v294
      %v303 = vunpack.c.l.b16 %v295
      %v304 = vpack.c.b16 %v301, %v300
      %v305 = vpack.c.b16 %v303, %v302
      %v309 = vsel %vm199, %v290, 0
      %311 = vmatpush.bf16.msra.mxu0 0
      %312 = vmatpush.bf16.msra.mxu0 0
      %313 = vmatpush.bf16.msra.mxu0 0
      %314 = vmatpush.bf16.msra.mxu0 0
      %315 = vmatpush.bf16.msra.mxu0 0
      %316 = vmatpush.bf16.msra.mxu0 0
      %317 = vmatpush.bf16.msra.mxu0 %v305
      %318 = vmatpush.bf16.msra.mxu0 %v304
      %319 = vmatmul.bf16.gmra.mxu0 %v309
      %v320 = vpop.f32.mrf.mxu0
      %v321 = vadd.f32 0.0, %v320
      %v322 = vpop.f32.mrf.mxu0
      %323 = vdwg.mxu0
      %v324 = vadd.f32 %v288, %v321
      %s325 = scalar_lea.vmem %s168, 24
      %v326 = vld [vmem:[%s325] sm:$0x7]
      %s327 = scalar_lea.vmem %s1, 64
      %v328 = vld [vmem:[%s327] sm:$0xf]
      %v329 = vld [vmem:[%s327 + $0x4] sm:$0xf]
      %v330 = vld [vmem:[%s327 + $0x8] sm:$0xf]
      %v331 = vld [vmem:[%s327 + $0xc] sm:$0xf]
      %v336 = vunpack.c.l.b16 %v328
      %v337 = vunpack.c.l.b16 %v329
      %v338 = vunpack.c.l.b16 %v330
      %v339 = vunpack.c.l.b16 %v331
      %v340 = vpack.c.b16 %v337, %v336
      %v341 = vpack.c.b16 %v339, %v338
      %v345 = vsel %vm199, %v326, 0
      %347 = vmatpush.bf16.msra.mxu0 0
      %348 = vmatpush.bf16.msra.mxu0 0
      %349 = vmatpush.bf16.msra.mxu0 0
      %350 = vmatpush.bf16.msra.mxu0 0
      %351 = vmatpush.bf16.msra.mxu0 0
      %352 = vmatpush.bf16.msra.mxu0 0
      %353 = vmatpush.bf16.msra.mxu0 %v341
      %354 = vmatpush.bf16.msra.mxu0 %v340
      %355 = vmatmul.bf16.gmra.mxu0 %v345
      %v356 = vpop.f32.mrf.mxu0
      %v357 = vadd.f32 0.0, %v356
      %v358 = vpop.f32.mrf.mxu0
      %359 = vdwg.mxu0
      %v360 = vadd.f32 %v324, %v357
      %v361 = vld [vmem:[%s289] sm:$0xf]
      %s362 = scalar_lea.vmem %s1, 80
      %v363 = vld [vmem:[%s362] sm:$0xf]
      %v364 = vld [vmem:[%s362 + $0x4] sm:$0xf]
      %v365 = vld [vmem:[%s362 + $0x8] sm:$0xf]
      %v366 = vld [vmem:[%s362 + $0xc] sm:$0xf]
      %v368 = vunpack.c.l.b16 %v361
      %v369 = vpack.c.b16 %v368, %v368
      %v371 = vshrl.u32 %v369, 16
      %v373 = vshll.u32 %v369, 16
      %v375 = vrot.slane %v373, 1
      %v376 = vor.u32 %v371, %v375
      %v381 = vunpack.c.l.b16 %v363
      %v382 = vunpack.c.l.b16 %v364
      %v383 = vunpack.c.l.b16 %v365
      %v384 = vunpack.c.l.b16 %v366
      %v385 = vpack.c.b16 %v382, %v381
      %v386 = vpack.c.b16 %v384, %v383
      %v390 = vsel %vm199, %v376, 0
      %392 = vmatpush.bf16.msra.mxu0 0
      %393 = vmatpush.bf16.msra.mxu0 0
      %394 = vmatpush.bf16.msra.mxu0 0
      %395 = vmatpush.bf16.msra.mxu0 0
      %396 = vmatpush.bf16.msra.mxu0 0
      %397 = vmatpush.bf16.msra.mxu0 0
      %398 = vmatpush.bf16.msra.mxu0 %v386
      %399 = vmatpush.bf16.msra.mxu0 %v385
      %400 = vmatmul.bf16.gmra.mxu0 %v390
      %v401 = vpop.f32.mrf.mxu0
      %v402 = vadd.f32 0.0, %v401
      %v403 = vpop.f32.mrf.mxu0
      %404 = vdwg.mxu0
      %v405 = vadd.f32 %v360, %v402
      %v406 = vld [vmem:[%s168] sm:$0xe]
      %v407 = vld [vmem:[%s168 + $0x4] sm:$0x1]
      %s408 = scalar_lea.vmem %s1, 96
      %v409 = vld [vmem:[%s408] sm:$0xf]
      %v410 = vld [vmem:[%s408 + $0x4] sm:$0xf]
      %v411 = vld [vmem:[%s408 + $0x8] sm:$0xf]
      %v412 = vld [vmem:[%s408 + $0xc] sm:$0xf]
      %v415 = vunpack.c.l.b16 %v406
      %v416 = vunpack.c.l.b16 %v407
      %v417 = vpack.c.b16 %v416, %v415
      %v419 = vshrl.u32 %v417, 16
      %v421 = vrot.slane %v419, 1
      %v422 = vshll.u32 %v417, 16
      %v424 = vrot.slane %v422, 2
      %v425 = vor.u32 %v421, %v424
      %v430 = vunpack.c.l.b16 %v409
      %v431 = vunpack.c.l.b16 %v410
      %v432 = vunpack.c.l.b16 %v411
      %v433 = vunpack.c.l.b16 %v412
      %v434 = vpack.c.b16 %v431, %v430
      %v435 = vpack.c.b16 %v433, %v432
      %v439 = vsel %vm199, %v425, 0
      %441 = vmatpush.bf16.msra.mxu0 0
      %442 = vmatpush.bf16.msra.mxu0 0
      %443 = vmatpush.bf16.msra.mxu0 0
      %444 = vmatpush.bf16.msra.mxu0 0
      %445 = vmatpush.bf16.msra.mxu0 0
      %446 = vmatpush.bf16.msra.mxu0 0
      %447 = vmatpush.bf16.msra.mxu0 %v435
      %448 = vmatpush.bf16.msra.mxu0 %v434
      %449 = vmatmul.bf16.gmra.mxu0 %v439
      %v450 = vpop.f32.mrf.mxu0
      %v451 = vadd.f32 0.0, %v450
      %v452 = vpop.f32.mrf.mxu0
      %453 = vdwg.mxu0
      %v454 = vadd.f32 %v405, %v451
      %v455 = vld [vmem:[%s180] sm:$0xe]
      %v456 = vld [vmem:[%s180 + $0x4] sm:$0x1]
      %s457 = scalar_lea.vmem %s1, 112
      %v458 = vld [vmem:[%s457] sm:$0xf]
      %v459 = vld [vmem:[%s457 + $0x4] sm:$0xf]
      %v460 = vld [vmem:[%s457 + $0x8] sm:$0xf]
      %v461 = vld [vmem:[%s457 + $0xc] sm:$0xf]
      %v464 = vunpack.c.l.b16 %v455
      %v465 = vunpack.c.l.b16 %v456
      %v466 = vpack.c.b16 %v465, %v464
      %v468 = vshrl.u32 %v466, 16
      %v470 = vrot.slane %v468, 1
      %v471 = vshll.u32 %v466, 16
      %v473 = vrot.slane %v471, 2
      %v474 = vor.u32 %v470, %v473
      %v479 = vunpack.c.l.b16 %v458
      %v480 = vunpack.c.l.b16 %v459
      %v481 = vunpack.c.l.b16 %v460
      %v482 = vunpack.c.l.b16 %v461
      %v483 = vpack.c.b16 %v480, %v479
      %v484 = vpack.c.b16 %v482, %v481
      %v488 = vsel %vm199, %v474, 0
      %490 = vmatpush.bf16.msra.mxu0 0
      %491 = vmatpush.bf16.msra.mxu0 0
      %492 = vmatpush.bf16.msra.mxu0 0
      %493 = vmatpush.bf16.msra.mxu0 0
      %494 = vmatpush.bf16.msra.mxu0 0
      %495 = vmatpush.bf16.msra.mxu0 0
      %496 = vmatpush.bf16.msra.mxu0 %v484
      %497 = vmatpush.bf16.msra.mxu0 %v483
      %498 = vmatmul.bf16.gmra.mxu0 %v488
      %v499 = vpop.f32.mrf.mxu0
      %v500 = vadd.f32 0.0, %v499
      %v501 = vpop.f32.mrf.mxu0
      %502 = vdwg.mxu0
      %v503 = vadd.f32 %v454, %v500
      %v504 = vld [vmem:[%s168] sm:$0xc]
      %s505 = scalar_lea.vmem %s1, 128
      %v506 = vld [vmem:[%s505] sm:$0xf]
      %v507 = vld [vmem:[%s505 + $0x4] sm:$0xf]
      %v508 = vld [vmem:[%s505 + $0x8] sm:$0xf]
      %v509 = vld [vmem:[%s505 + $0xc] sm:$0xf]
      %v511 = vunpack.c.l.b16 %v504
      %v512 = vpack.c.b16 %v416, %v511
      %v513 = vrot.slane %v512, 2
      %v518 = vunpack.c.l.b16 %v506
      %v519 = vunpack.c.l.b16 %v507
      %v520 = vunpack.c.l.b16 %v508
      %v521 = vunpack.c.l.b16 %v509
      %v522 = vpack.c.b16 %v519, %v518
      %v523 = vpack.c.b16 %v521, %v520
      %v527 = vsel %vm199, %v513, 0
      %529 = vmatpush.bf16.msra.mxu0 0
      %530 = vmatpush.bf16.msra.mxu0 0
      %531 = vmatpush.bf16.msra.mxu0 0
      %532 = vmatpush.bf16.msra.mxu0 0
      %533 = vmatpush.bf16.msra.mxu0 0
      %534 = vmatpush.bf16.msra.mxu0 0
      %535 = vmatpush.bf16.msra.mxu0 %v523
      %536 = vmatpush.bf16.msra.mxu0 %v522
      %537 = vmatmul.bf16.gmra.mxu0 %v527
      %v538 = vpop.f32.mrf.mxu0
      %v539 = vadd.f32 0.0, %v538
      %v540 = vpop.f32.mrf.mxu0
      %541 = vdwg.mxu0
      %v542 = vadd.f32 %v503, %v539
      %v543 = vld [vmem:[%s2] sm:$0x1]
      %v545 = vperm.slane %v543, 0
      %v547 = vadd.f32 %v542, %v545
      %vm548 = vcmp.ge.f32.partialorder %v547, 0.0
      %v549 = vmul.f32 %v547, 0.2
      %v550 = vsel %vm548, %v547, %v549
      %v551 = vpack.c.bf16 %v550, %v550
      %vm552 = vcmask 518144
      %553 = vst.msk [vmem:[%s173] sm:$0x7] %vm552, %v551
      %p554 = scmp.lt.s32.totalorder %s14, 1
      %s555 = scalar_select %p554, %s14, 1
      %s556 = smul.addr %s555, 4
      %s557 = scalar_lea.vmem %s3, %s556
      // Predicated region
      $region33: #{_lambda_.7} parent=31 // pred_check
        %p558 = pneg %p100
      $region34: #{_lambda_.7} parent=31 // pred_check_branch
        %560 = sbr.rel (%p558) target = $region36
      $region35: #{_lambda_.7} parent=31 // pred_region
        _
      $region36: #{_lambda_.7} parent=31 // pred_fallthru
        _
    $region32: #{_lambda_.7} parent=5 // pred_fallthru
      _
    %p561 = scmp.le.s32.totalorder 2, %s9
    // Predicated region
    $region37: #{_lambda_.7} parent=5 // pred_check
      %p562 = pneg %p561
    $region38: #{_lambda_.7} parent=5 // pred_check_branch
      %564 = sbr.rel (%p562) target = $region40
    $region39: #{_lambda_.7} parent=5 // pred_region
      %s565 = ssub.s32 %s9, 2
      // Predicated region
      $region41: #{_lambda_.7} parent=39 // pred_check
        %p566 = pneg %p106
      $region42: #{_lambda_.7} parent=39 // pred_check_branch
        %568 = sbr.rel (%p566) target = $region44
      $region43: #{_lambda_.7} parent=39 // pred_region
        %p569 = scmp.lt.s32.totalorder %s15, 1
        %s570 = scalar_select %p569, %s15, 1
        %s571 = smul.addr %s570, 4
        %s572 = scalar_lea.vmem %s3, %s571
      $region44: #{_lambda_.7} parent=39 // pred_fallthru
        _
    $region40: #{_lambda_.7} parent=5 // pred_fallthru
      _
  $region6: #{_lambda_.7} parent=0 // loop_footer
    %s13 = sadd.s32 1, %s9
  $region7: #{_lambda_.7} parent=0 // loop_footer_branch
    %8 = sbr.rel target = $region3
  $region8: #{_lambda_.7} parent=0 // loop_exit
    _

// kernel: _lambda_.9
$region0: #{_lambda_.9}
  #allocation0 [shape = 'u32[]', space=smem, size = 0x4, offset = 0x4, fixed_abs, tag = 'smem constant byte address 0x4 - core index']
  #allocation1 [shape = 'u32[72,128]{1,0:T(1,128)}', space=vmem, size = 0x9000, scoped, tag = 'internal scratch']
  #allocation2 [shape = 'f32[2,1]{1,0:T(2,128)}', space=vmem, size = 0x400, scoped, tag = 'scratch operand']
  #allocation3 [shape = 'f32[1,1]{1,0:T(1,128)S(1)}', space=vmem, size = 0x200, scoped, tag = 'scoped memory for _lambda_.9']
  %s0 = inlined_call_operand.vmem [shape: bf16[2,512], index: 0, kind: input, shape index: {}]
  %s1 = inlined_call_operand.vmem [shape: bf16[1,512], index: 1, kind: input, shape index: {}]
  %s2 = inlined_call_operand.<no memory space> [shape: f32[1,1], index: 2, kind: input, shape index: {}]
  %s3 = inlined_call_operand.vmem [shape: f32[2,1], index: 3, kind: output, shape index: {}]
  %s4 = sld [smem:[#allocation0]]
  $region30: #{_lambda_.9} parent=0
    _
  %s6 = ssub.s32 1, %s4
  %s7 = scalar_select 0, %s6, %s4
  %v8 = vstv %s2
  %9 = vst [vmem:[#allocation3] sm:$0x1] %v8
  // Predicated region
  $region2: #{_lambda_.9} parent=0 // pred_check
    _
  $region3: #{_lambda_.9} parent=0 // pred_check_branch
    %11 = sbr.rel (0) target = $region5
  $region4: #{_lambda_.9} parent=0 // pred_region
    _
  $region5: #{_lambda_.9} parent=0 // pred_fallthru
    _
  // Predicated region
  $region6: #{_lambda_.9} parent=0 // pred_check
    _
  $region7: #{_lambda_.9} parent=0 // pred_check_branch
    %13 = sbr.rel (0) target = $region9
  $region8: #{_lambda_.9} parent=0 // pred_region
    _
  $region9: #{_lambda_.9} parent=0 // pred_fallthru
    _
  // Predicated region
  $region10: #{_lambda_.9} parent=0 // pred_check
    _
  $region11: #{_lambda_.9} parent=0 // pred_check_branch
    %15 = sbr.rel (0) target = $region13
  $region12: #{_lambda_.9} parent=0 // pred_region
    _
  $region13: #{_lambda_.9} parent=0 // pred_fallthru
    _
  %p16 = scmp.eq.s32.totalorder 0, 0
  // Predicated region
  $region14: #{_lambda_.9} parent=0 // pred_check
    %p17 = pneg %p16
  $region15: #{_lambda_.9} parent=0 // pred_check_branch
    %19 = sbr.rel (%p17) target = $region17
  $region16: #{_lambda_.9} parent=0 // pred_region
    %vm20 = vcmask 1024
    %21 = vst.msk [vmem:[#allocation2] sm:$0x3] %vm20, 0.0
  $region17: #{_lambda_.9} parent=0 // pred_fallthru
    _
  %v22 = vld [vmem:[%s0] sm:$0xf]
  %v23 = vunpack.c.l.bf16 %v22
  %v24 = vld [vmem:[%s1] sm:$0xf]
  %v25 = vunpack.c.l.bf16 %v24
  %v26 = vld [vmem:[#allocation2] sm:$0x3]
  %v28 = vperm.slane %v25, 0
  %v29 = vperm.slane %v25, 2
  %v30 = vperm.slane %v25, 4
  %v31 = vperm.slane %v25, 6
  %v36 = vperm.slane %v28, 0
  %v37 = vperm.slane %v29, 0
  %v38 = vperm.slane %v30, 0
  %v39 = vperm.slane %v31, 0
  %v44 = vrot.slane %v37, 6
  %v45 = vrot.slane %v38, 4
  %v46 = vrot.slane %v39, 2
  %vm47 = vcmask 1041408
  %v48 = vsel %vm47, %v36, %v44
  %vm49 = vcmask 1045508
  %v50 = vsel %vm49, %v45, %v46
  %vm51 = vcmask 1043456
  %v52 = vsel %vm51, %v48, %v50
  %v54 = vmul.f32 %v23, %v52
  %56 = vst [vmem:[#allocation1] ss:$4 sm:$0xff] %v54
  %v57 = vld.sshfl [vmem:[#allocation1] sm:$0xff pattern:$0x73625140]
  %v58 = vld.sshfl [vmem:[#allocation1 + $0x8] sm:$0xff pattern:$0x73625140]
  %v59 = vld.sshfl [vmem:[#allocation1 + $0x10] sm:$0xff pattern:$0x73625140]
  %v60 = vld.sshfl [vmem:[#allocation1 + $0x18] sm:$0xff pattern:$0x73625140]
  %v65 = vsel %vm47, %v57, 0.0
  %v66 = vsel %vm47, %v58, 0.0
  %v67 = vadd.f32 %v65, %v66
  %v68 = vsel %vm47, %v59, 0.0
  %v69 = vadd.f32 %v67, %v68
  %v70 = vsel %vm47, %v60, 0.0
  %v71 = vadd.f32 %v69, %v70
  %72 = vadd.xlane.f32.xlu0 %v71
  %v73 = vpop.xlane.xlu0 %72
  %v74 = vadd.f32 %v26, %v73
  %vm75 = vcmask 1024
  %76 = vst.msk [vmem:[#allocation2] sm:$0x3] %vm75, %v74
  // Predicated region
  $region18: #{_lambda_.9} parent=0 // pred_check
    %p77 = pneg %p16
  $region19: #{_lambda_.9} parent=0 // pred_check_branch
    %79 = sbr.rel (%p77) target = $region21
  $region20: #{_lambda_.9} parent=0 // pred_region
    %v80 = vld [vmem:[#allocation2] sm:$0x3]
    %v81 = vld [vmem:[#allocation3] sm:$0x1]
    %v83 = vperm.slane %v81, 0
    %v85 = vadd.f32 %v80, %v83
    %v86 = vsub.f32 0.0, %v85
    %v87 = vmul.f32 %v86, 1.442695
    %v88 = vpow.pop %v87
    %v89 = vadd.f32 %v88, 1.0
    %v90 = vrcp.pop %v89
    %v91 = vmul.f32 %v89, %v90
    %v92 = vsub.f32 1.0, %v91
    %v93 = vmul.f32 %v90, %v92
    %v94 = vadd.f32 %v90, %v93
    %vm95 = vweird.f32 %v89
    %vm96 = vweird.f32 %v90
    %vm97 = vmor %vm95, %vm96
    %v98 = vsel %vm97, %v90, %v94
    %v99 = vand.u32 2147483647, %v89
    %vm100 = vcmp.eq.f32.partialorder %v99, 8.507059e+37
    %v101 = vand.u32 %v89, 2147483648
    %v102 = vor.u32 1.1754944e-38, %v101
    %v103 = vsel %vm100, %v102, %v98
    %v104 = vmul.f32 1.0, %v103
    %105 = vst.msk [vmem:[%s3] sm:$0x3] %vm75, %v104
  $region21: #{_lambda_.9} parent=0 // pred_fallthru
    _
  // Predicated region
  $region22: #{_lambda_.9} parent=0 // pred_check
    _
  $region23: #{_lambda_.9} parent=0 // pred_check_branch
    %107 = sbr.rel (0) target = $region25
  $region24: #{_lambda_.9} parent=0 // pred_region
    _
  $region25: #{_lambda_.9} parent=0 // pred_fallthru
    _
  // Predicated region
  $region26: #{_lambda_.9} parent=0 // pred_check
    _
  $region27: #{_lambda_.9} parent=0 // pred_check_branch
    %109 = sbr.rel (0) target = $region29
  $region28: #{_lambda_.9} parent=0 // pred_region
    _
  $region29: #{_lambda_.9} parent=0 // pred_fallthru
    _

// kernel: _lambda_.8
$region0: #{_lambda_.8}
  #allocation0 [shape = 'u32[]', space=smem, size = 0x4, offset = 0x4, fixed_abs, tag = 'smem constant byte address 0x4 - core index']
  #allocation1 [shape = 'u32[72,128]{1,0:T(1,128)}', space=vmem, size = 0x9000, scoped, tag = 'internal scratch']
  %s0 = inlined_call_operand.vmem [shape: bf16[2,18,64], index: 0, kind: input, shape index: {}]
  %s1 = inlined_call_operand.vmem [shape: bf16[3,3,64,128], index: 1, kind: input, shape index: {}]
  %s2 = inlined_call_operand.vmem [shape: f32[1,128], index: 2, kind: input, shape index: {}]
  %s3 = inlined_call_operand.vmem [shape: bf16[2,8,128], index: 3, kind: output, shape index: {}]
  %s4 = sld [smem:[#allocation0]]
  $region45: #{_lambda_.8} parent=0
    _
  %s6 = ssub.s32 1, %s4
  %s7 = scalar_select 0, %s6, %s4
  loop: start=0, step=1, limit=4
  $region2: #{_lambda_.8} parent=0 // loop_pre_header
    _
  $region3: #{_lambda_.8} parent=0 // loop_header
    %s9 = sphi 0, %s13
    %p10 = scmp.ge.s32.totalorder %s9, 4
    %s19 = sphi 0, %s21
    %s22 = sphi 0, %s19
    %s23 = sphi 0, %s22
    %s39 = sphi 0, %s23
    %s43 = sphi 0, %s43
    %s45 = sphi 0, %s43
    %s46 = sphi 0, %s45
    %s60 = sphi 0, %s46
    %s64 = sphi 0, %s64
    %s66 = sphi 0, %s64
    %s67 = sphi 0, %s66
    %s81 = sphi 0, %s67
    %s87 = sphi 0, %s89
    %s90 = sphi 0, %s87
    %s91 = sphi 0, %s90
    %s107 = sphi 0, %s91
  $region4: #{_lambda_.8} parent=0 // loop_header_branch
    %12 = sbr.rel (%p10) target = $region8
  $region5: #{_lambda_.8} parent=0 // loop_body
    %s14 = ssub.s32 %s9, 1
    %s15 = ssub.s32 %s9, 2
    %s16 = sadd.s32 %s9, 1
    %s17 = ssub.s32 %s9, %s16
    %p18 = scmp.eq.s32.totalorder %s17, 0
    %s20 = sadd.s32 %s19, 1
    %s21 = scalar_select %p18, %s19, %s20
    %p24 = pneg %p18
    %p25 = scmp.eq.s32.totalorder %s9, 1
    %p26 = por %p24, %p25
    %p27 = scmp.ne.s32.totalorder %s19, %s22
    %p28 = scmp.eq.s32.totalorder %s9, 0
    %p29 = por %p27, %p28
    %p30 = scmp.ne.s32.totalorder %s19, %s22
    %p31 = scmp.eq.s32.totalorder %s14, 1
    %p32 = por %p30, %p31
    %p33 = scmp.ne.s32.totalorder %s22, %s23
    %p34 = scmp.eq.s32.totalorder %s14, 0
    %p35 = por %p33, %p34
    %p36 = scmp.ne.s32.totalorder %s22, %s23
    %p37 = scmp.eq.s32.totalorder %s15, 1
    %p38 = por %p36, %p37
    %p40 = scmp.ne.s32.totalorder %s23, %s39
    %p41 = scmp.eq.s32.totalorder %s15, 0
    %p42 = por %p40, %p41
    %s44 = sadd.s32 %s43, 1
    %p47 = scmp.eq.s32.totalorder %s9, 1
    %p48 = scmp.ne.s32.totalorder %s43, %s45
    %p49 = scmp.eq.s32.totalorder %s9, 0
    %p50 = por %p48, %p49
    %p51 = scmp.ne.s32.totalorder %s43, %s45
    %p52 = scmp.eq.s32.totalorder %s14, 1
    %p53 = por %p51, %p52
    %p54 = scmp.ne.s32.totalorder %s45, %s46
    %p55 = scmp.eq.s32.totalorder %s14, 0
    %p56 = por %p54, %p55
    %p57 = scmp.ne.s32.totalorder %s45, %s46
    %p58 = scmp.eq.s32.totalorder %s15, 1
    %p59 = por %p57, %p58
    %p61 = scmp.ne.s32.totalorder %s46, %s60
    %p62 = scmp.eq.s32.totalorder %s15, 0
    %p63 = por %p61, %p62
    %s65 = sadd.s32 %s64, 1
    %p68 = scmp.eq.s32.totalorder %s9, 1
    %p69 = scmp.ne.s32.totalorder %s64, %s66
    %p70 = scmp.eq.s32.totalorder %s9, 0
    %p71 = por %p69, %p70
    %p72 = scmp.ne.s32.totalorder %s64, %s66
    %p73 = scmp.eq.s32.totalorder %s14, 1
    %p74 = por %p72, %p73
    %p75 = scmp.ne.s32.totalorder %s66, %s67
    %p76 = scmp.eq.s32.totalorder %s14, 0
    %p77 = por %p75, %p76
    %p78 = scmp.ne.s32.totalorder %s66, %s67
    %p79 = scmp.eq.s32.totalorder %s15, 1
    %p80 = por %p78, %p79
    %p82 = scmp.ne.s32.totalorder %s67, %s81
    %p83 = scmp.eq.s32.totalorder %s15, 0
    %p84 = por %p82, %p83
    %s85 = ssub.s32 %s9, %s16
    %p86 = scmp.eq.s32.totalorder %s85, 0
    %s88 = sadd.s32 %s87, 1
    %s89 = scalar_select %p86, %s87, %s88
    %p92 = pneg %p86
    %p93 = scmp.eq.s32.totalorder %s9, 1
    %p94 = por %p92, %p93
    %p95 = scmp.ne.s32.totalorder %s87, %s90
    %p96 = scmp.eq.s32.totalorder %s9, 0
    %p97 = por %p95, %p96
    %p98 = scmp.ne.s32.totalorder %s87, %s90
    %p99 = scmp.eq.s32.totalorder %s14, 1
    %p100 = por %p98, %p99
    %p101 = scmp.ne.s32.totalorder %s90, %s91
    %p102 = scmp.eq.s32.totalorder %s14, 0
    %p103 = por %p101, %p102
    %p104 = scmp.ne.s32.totalorder %s90, %s91
    %p105 = scmp.eq.s32.totalorder %s15, 1
    %p106 = por %p104, %p105
    %p108 = scmp.ne.s32.totalorder %s91, %s107
    %p109 = scmp.eq.s32.totalorder %s15, 0
    %p110 = por %p108, %p109
    %p111 = scmp.le.s32.totalorder 1, %s9
    %p112 = scmp.lt.s32.totalorder %s9, 3
    %p113 = pnand %p111, %p112
    %p114 = pneg %p113
    // Predicated region
    $region9: #{_lambda_.8} parent=5 // pred_check
      _
    $region10: #{_lambda_.8} parent=5 // pred_check_branch
      %116 = sbr.rel (%p113) target = $region12
    $region11: #{_lambda_.8} parent=5 // pred_region
      %s117 = ssub.s32 %s9, 1
      // Predicated region
      $region13: #{_lambda_.8} parent=11 // pred_check
        %p118 = pneg %p56
      $region14: #{_lambda_.8} parent=11 // pred_check_branch
        %120 = sbr.rel (%p118) target = $region16
      $region15: #{_lambda_.8} parent=11 // pred_region
        _
      $region16: #{_lambda_.8} parent=11 // pred_fallthru
        _
      // Predicated region
      $region17: #{_lambda_.8} parent=11 // pred_check
        %p121 = pneg %p77
      $region18: #{_lambda_.8} parent=11 // pred_check_branch
        %123 = sbr.rel (%p121) target = $region20
      $region19: #{_lambda_.8} parent=11 // pred_region
        _
      $region20: #{_lambda_.8} parent=11 // pred_fallthru
        _
    $region12: #{_lambda_.8} parent=5 // pred_fallthru
      _
    %p124 = scmp.lt.s32.totalorder %s9, 2
    // Predicated region
    $region21: #{_lambda_.8} parent=5 // pred_check
      %p125 = pneg %p124
    $region22: #{_lambda_.8} parent=5 // pred_check_branch
      %127 = sbr.rel (%p125) target = $region24
    $region23: #{_lambda_.8} parent=5 // pred_region
      // Predicated region
      $region25: #{_lambda_.8} parent=23 // pred_check
        %p128 = pneg %p29
      $region26: #{_lambda_.8} parent=23 // pred_check_branch
        %130 = sbr.rel (%p128) target = $region28
      $region27: #{_lambda_.8} parent=23 // pred_region
        %p131 = scmp.lt.s32.totalorder %s9, 1
        %s132 = scalar_select %p131, %s9, 1
        %s133 = smul.addr %s132, 3
        %s134 = smul.addr %s133, 4
        %s135 = scalar_lea.vmem %s0, %s134
      $region28: #{_lambda_.8} parent=23 // pred_fallthru
        _
    $region24: #{_lambda_.8} parent=5 // pred_fallthru
      _
    %p136 = scmp.le.s32.totalorder 1, %s9
    %p137 = scmp.lt.s32.totalorder %s9, 3
    %p138 = pnand %p136, %p137
    %p139 = pneg %p138
    // Predicated region
    $region29: #{_lambda_.8} parent=5 // pred_check
      _
    $region30: #{_lambda_.8} parent=5 // pred_check_branch
      %141 = sbr.rel (%p138) target = $region32
    $region31: #{_lambda_.8} parent=5 // pred_region
      %s142 = ssub.s32 %s9, 1
      %p143 = scmp.lt.s32.totalorder %s14, 1
      %s144 = scalar_select %p143, %s14, 1
      %s145 = smul.addr %s144, 3
      %s146 = smul.addr %s145, 4
      %s147 = scalar_lea.vmem %s0, %s146
      %p148 = pneg %p35
      %p149 = pneg %p32
      %p150 = pneg %p56
      %p151 = pneg %p53
      %p152 = pneg %p77
      %p153 = pneg %p74
      %p154 = pneg %p103
      %p155 = pneg %p100
      %p156 = scmp.lt.s32.totalorder %s14, 1
      %s157 = scalar_select %p156, %s14, 1
      %s158 = smul.addr %s157, 4
      %s159 = scalar_lea.vmem %s3, %s158
      %p160 = scmp.lt.s32.totalorder %s14, 1
      %s161 = scalar_select %p160, %s14, 1
      %s162 = smul.addr %s161, 3
      %s163 = smul.addr %s162, 4
      %s164 = scalar_lea.vmem %s0, %s163
      %p165 = scmp.lt.s32.totalorder %s14, 1
      %s166 = scalar_select %p165, %s14, 1
      %s167 = smul.addr %s166, 4
      %s168 = scalar_lea.vmem %s3, %s167
      %v170 = vld [vmem:[%s164] sm:$0xf]
      %v171 = vld [vmem:[%s1] sm:$0xf]
      %v172 = vld [vmem:[%s1 + $0x4] sm:$0xf]
      %v173 = vld [vmem:[%s1 + $0x8] sm:$0xf]
      %v174 = vld [vmem:[%s1 + $0xc] sm:$0xf]
      %v175 = vld [vmem:[%s1 + $0x10] sm:$0xf]
      %v176 = vld [vmem:[%s1 + $0x14] sm:$0xf]
      %v177 = vld [vmem:[%s1 + $0x18] sm:$0xf]
      %v178 = vld [vmem:[%s1 + $0x1c] sm:$0xf]
      %v179 = vld [vmem:[%s164 + $0x4] sm:$0x1]
      %s180 = scalar_lea.vmem %s1, 32
      %v181 = vld [vmem:[%s180] sm:$0xf]
      %v182 = vld [vmem:[%s180 + $0x4] sm:$0xf]
      %v183 = vld [vmem:[%s180 + $0x8] sm:$0xf]
      %v184 = vld [vmem:[%s180 + $0xc] sm:$0xf]
      %v185 = vld [vmem:[%s180 + $0x10] sm:$0xf]
      %v186 = vld [vmem:[%s180 + $0x14] sm:$0xf]
      %v187 = vld [vmem:[%s180 + $0x18] sm:$0xf]
      %v188 = vld [vmem:[%s180 + $0x1c] sm:$0xf]
      %v191 = vunpack.c.l.b16 %v170
      %v192 = vunpack.c.l.b16 %v179
      %v193 = vpack.c.b16 %v192, %v191
      %v195 = vshrl.u32 %v193, 16
      %v197 = vshll.u32 %v193, 16
      %v199 = vrot.slane %v197, 1
      %v200 = vor.u32 %v195, %v199
      %v209 = vunpack.c.l.b16 %v181
      %v210 = vunpack.c.l.b16 %v182
      %v211 = vunpack.c.l.b16 %v183
      %v212 = vunpack.c.l.b16 %v184
      %v213 = vunpack.c.l.b16 %v185
      %v214 = vunpack.c.l.b16 %v186
      %v215 = vunpack.c.l.b16 %v187
      %v216 = vunpack.c.l.b16 %v188
      %v217 = vpack.c.b16 %v210, %v209
      %v218 = vpack.c.b16 %v212, %v211
      %v219 = vpack.c.b16 %v214, %v213
      %v220 = vpack.c.b16 %v216, %v215
      %vm225 = vcmask 523264
      %v227 = vsel %vm225, %v200, 0
      %229 = vmatpush.bf16.msra.mxu0 0
      %230 = vmatpush.bf16.msra.mxu0 0
      %231 = vmatpush.bf16.msra.mxu0 0
      %232 = vmatpush.bf16.msra.mxu0 0
      %233 = vmatpush.bf16.msra.mxu0 %v220
      %234 = vmatpush.bf16.msra.mxu0 %v219
      %235 = vmatpush.bf16.msra.mxu0 %v218
      %236 = vmatpush.bf16.msra.mxu0 %v217
      %237 = vmatmul.bf16.gmra.mxu0 %v227
      %v238 = vpop.f32.mrf.mxu0
      %v239 = vadd.f32 0.0, %v238
      %v240 = vpop.f32.mrf.mxu0
      %241 = vdwg.mxu0
      %v250 = vunpack.c.l.b16 %v171
      %v251 = vunpack.c.l.b16 %v172
      %v252 = vunpack.c.l.b16 %v173
      %v253 = vunpack.c.l.b16 %v174
      %v254 = vunpack.c.l.b16 %v175
      %v255 = vunpack.c.l.b16 %v176
      %v256 = vunpack.c.l.b16 %v177
      %v257 = vunpack.c.l.b16 %v178
      %v258 = vpack.c.b16 %v251, %v250
      %v259 = vpack.c.b16 %v253, %v252
      %v260 = vpack.c.b16 %v255, %v254
      %v261 = vpack.c.b16 %v257, %v256
      %v267 = vsel %vm225, %v170, 0
      %269 = vmatpush.bf16.msra.mxu0 0
      %270 = vmatpush.bf16.msra.mxu0 0
      %271 = vmatpush.bf16.msra.mxu0 0
      %272 = vmatpush.bf16.msra.mxu0 0
      %273 = vmatpush.bf16.msra.mxu0 %v261
      %274 = vmatpush.bf16.msra.mxu0 %v260
      %275 = vmatpush.bf16.msra.mxu0 %v259
      %276 = vmatpush.bf16.msra.mxu0 %v258
      %277 = vmatmul.bf16.gmra.mxu0 %v267
      %v278 = vpop.f32.mrf.mxu0
      %v279 = vadd.f32 %v239, %v278
      %v280 = vpop.f32.mrf.mxu0
      %281 = vdwg.mxu0
      %v282 = vld [vmem:[%s164] sm:$0xe]
      %s283 = scalar_lea.vmem %s1, 64
      %v284 = vld [vmem:[%s283] sm:$0xf]
      %v285 = vld [vmem:[%s283 + $0x4] sm:$0xf]
      %v286 = vld [vmem:[%s283 + $0x8] sm:$0xf]
      %v287 = vld [vmem:[%s283 + $0xc] sm:$0xf]
      %v288 = vld [vmem:[%s283 + $0x10] sm:$0xf]
      %v289 = vld [vmem:[%s283 + $0x14] sm:$0xf]
      %v290 = vld [vmem:[%s283 + $0x18] sm:$0xf]
      %v291 = vld [vmem:[%s283 + $0x1c] sm:$0xf]
      %v293 = vunpack.c.l.b16 %v282
      %v294 = vpack.c.b16 %v192, %v293
      %v295 = vrot.slane %v294, 1
      %v304 = vunpack.c.l.b16 %v284
      %v305 = vunpack.c.l.b16 %v285
      %v306 = vunpack.c.l.b16 %v286
      %v307 = vunpack.c.l.b16 %v287
      %v308 = vunpack.c.l.b16 %v288
      %v309 = vunpack.c.l.b16 %v289
      %v310 = vunpack.c.l.b16 %v290
      %v311 = vunpack.c.l.b16 %v291
      %v312 = vpack.c.b16 %v305, %v304
      %v313 = vpack.c.b16 %v307, %v306
      %v314 = vpack.c.b16 %v309, %v308
      %v315 = vpack.c.b16 %v311, %v310
      %v321 = vsel %vm225, %v295, 0
      %323 = vmatpush.bf16.msra.mxu0 0
      %324 = vmatpush.bf16.msra.mxu0 0
      %325 = vmatpush.bf16.msra.mxu0 0
      %326 = vmatpush.bf16.msra.mxu0 0
      %327 = vmatpush.bf16.msra.mxu0 %v315
      %328 = vmatpush.bf16.msra.mxu0 %v314
      %329 = vmatpush.bf16.msra.mxu0 %v313
      %330 = vmatpush.bf16.msra.mxu0 %v312
      %331 = vmatmul.bf16.gmra.mxu0 %v321
      %v332 = vpop.f32.mrf.mxu0
      %v333 = vadd.f32 0.0, %v332
      %v334 = vpop.f32.mrf.mxu0
      %335 = vdwg.mxu0
      %v336 = vadd.f32 %v279, %v333
      %v337 = vld [vmem:[%s164] sm:$0xc]
      %v338 = vld [vmem:[%s164 + $0x4] sm:$0x3]
      %s339 = scalar_lea.vmem %s1, 96
      %v340 = vld [vmem:[%s339] sm:$0xf]
      %v341 = vld [vmem:[%s339 + $0x4] sm:$0xf]
      %v342 = vld [vmem:[%s339 + $0x8] sm:$0xf]
      %v343 = vld [vmem:[%s339 + $0xc] sm:$0xf]
      %v344 = vld [vmem:[%s339 + $0x10] sm:$0xf]
      %v345 = vld [vmem:[%s339 + $0x14] sm:$0xf]
      %v346 = vld [vmem:[%s339 + $0x18] sm:$0xf]
      %v347 = vld [vmem:[%s339 + $0x1c] sm:$0xf]
      %v350 = vunpack.c.l.b16 %v337
      %v351 = vunpack.c.l.b16 %v338
      %v352 = vpack.c.b16 %v351, %v350
      %v353 = vrot.slane %v352, 2
      %v362 = vunpack.c.l.b16 %v340
      %v363 = vunpack.c.l.b16 %v341
      %v364 = vunpack.c.l.b16 %v342
      %v365 = vunpack.c.l.b16 %v343
      %v366 = vunpack.c.l.b16 %v344
      %v367 = vunpack.c.l.b16 %v345
      %v368 = vunpack.c.l.b16 %v346
      %v369 = vunpack.c.l.b16 %v347
      %v370 = vpack.c.b16 %v363, %v362
      %v371 = vpack.c.b16 %v365, %v364
      %v372 = vpack.c.b16 %v367, %v366
      %v373 = vpack.c.b16 %v369, %v368
      %v379 = vsel %vm225, %v353, 0
      %381 = vmatpush.bf16.msra.mxu0 0
      %382 = vmatpush.bf16.msra.mxu0 0
      %383 = vmatpush.bf16.msra.mxu0 0
      %384 = vmatpush.bf16.msra.mxu0 0
      %385 = vmatpush.bf16.msra.mxu0 %v373
      %386 = vmatpush.bf16.msra.mxu0 %v372
      %387 = vmatpush.bf16.msra.mxu0 %v371
      %388 = vmatpush.bf16.msra.mxu0 %v370
      %389 = vmatmul.bf16.gmra.mxu0 %v379
      %v390 = vpop.f32.mrf.mxu0
      %v391 = vadd.f32 0.0, %v390
      %v392 = vpop.f32.mrf.mxu0
      %393 = vdwg.mxu0
      %v394 = vadd.f32 %v336, %v391
      %v395 = vld [vmem:[%s164 + $0x4] sm:$0x7]
      %s396 = scalar_lea.vmem %s1, 128
      %v397 = vld [vmem:[%s396] sm:$0xf]
      %v398 = vld [vmem:[%s396 + $0x4] sm:$0xf]
      %v399 = vld [vmem:[%s396 + $0x8] sm:$0xf]
      %v400 = vld [vmem:[%s396 + $0xc] sm:$0xf]
      %v401 = vld [vmem:[%s396 + $0x10] sm:$0xf]
      %v402 = vld [vmem:[%s396 + $0x14] sm:$0xf]
      %v403 = vld [vmem:[%s396 + $0x18] sm:$0xf]
      %v404 = vld [vmem:[%s396 + $0x1c] sm:$0xf]
      %v406 = vunpack.c.l.b16 %v395
      %v407 = vpack.c.b16 %v406, %v350
      %v409 = vshrl.u32 %v407, 16
      %v411 = vrot.slane %v409, 2
      %v412 = vshll.u32 %v407, 16
      %v414 = vrot.slane %v412, 3
      %v415 = vor.u32 %v411, %v414
      %v424 = vunpack.c.l.b16 %v397
      %v425 = vunpack.c.l.b16 %v398
      %v426 = vunpack.c.l.b16 %v399
      %v427 = vunpack.c.l.b16 %v400
      %v428 = vunpack.c.l.b16 %v401
      %v429 = vunpack.c.l.b16 %v402
      %v430 = vunpack.c.l.b16 %v403
      %v431 = vunpack.c.l.b16 %v404
      %v432 = vpack.c.b16 %v425, %v424
      %v433 = vpack.c.b16 %v427, %v426
      %v434 = vpack.c.b16 %v429, %v428
      %v435 = vpack.c.b16 %v431, %v430
      %v441 = vsel %vm225, %v415, 0
      %443 = vmatpush.bf16.msra.mxu0 0
      %444 = vmatpush.bf16.msra.mxu0 0
      %445 = vmatpush.bf16.msra.mxu0 0
      %446 = vmatpush.bf16.msra.mxu0 0
      %447 = vmatpush.bf16.msra.mxu0 %v435
      %448 = vmatpush.bf16.msra.mxu0 %v434
      %449 = vmatpush.bf16.msra.mxu0 %v433
      %450 = vmatpush.bf16.msra.mxu0 %v432
      %451 = vmatmul.bf16.gmra.mxu0 %v441
      %v452 = vpop.f32.mrf.mxu0
      %v453 = vadd.f32 0.0, %v452
      %v454 = vpop.f32.mrf.mxu0
      %455 = vdwg.mxu0
      %v456 = vadd.f32 %v394, %v453
      %v457 = vld [vmem:[%s164] sm:$0x8]
      %s458 = scalar_lea.vmem %s1, 160
      %v459 = vld [vmem:[%s458] sm:$0xf]
      %v460 = vld [vmem:[%s458 + $0x4] sm:$0xf]
      %v461 = vld [vmem:[%s458 + $0x8] sm:$0xf]
      %v462 = vld [vmem:[%s458 + $0xc] sm:$0xf]
      %v463 = vld [vmem:[%s458 + $0x10] sm:$0xf]
      %v464 = vld [vmem:[%s458 + $0x14] sm:$0xf]
      %v465 = vld [vmem:[%s458 + $0x18] sm:$0xf]
      %v466 = vld [vmem:[%s458 + $0x1c] sm:$0xf]
      %v468 = vunpack.c.l.b16 %v457
      %v469 = vpack.c.b16 %v406, %v468
      %v470 = vrot.slane %v469, 3
      %v479 = vunpack.c.l.b16 %v459
      %v480 = vunpack.c.l.b16 %v460
      %v481 = vunpack.c.l.b16 %v461
      %v482 = vunpack.c.l.b16 %v462
      %v483 = vunpack.c.l.b16 %v463
      %v484 = vunpack.c.l.b16 %v464
      %v485 = vunpack.c.l.b16 %v465
      %v486 = vunpack.c.l.b16 %v466
      %v487 = vpack.c.b16 %v480, %v479
      %v488 = vpack.c.b16 %v482, %v481
      %v489 = vpack.c.b16 %v484, %v483
      %v490 = vpack.c.b16 %v486, %v485
      %v496 = vsel %vm225, %v470, 0
      %498 = vmatpush.bf16.msra.mxu0 0
      %499 = vmatpush.bf16.msra.mxu0 0
      %500 = vmatpush.bf16.msra.mxu0 0
      %501 = vmatpush.bf16.msra.mxu0 0
      %502 = vmatpush.bf16.msra.mxu0 %v490
      %503 = vmatpush.bf16.msra.mxu0 %v489
      %504 = vmatpush.bf16.msra.mxu0 %v488
      %505 = vmatpush.bf16.msra.mxu0 %v487
      %506 = vmatmul.bf16.gmra.mxu0 %v496
      %v507 = vpop.f32.mrf.mxu0
      %v508 = vadd.f32 0.0, %v507
      %v509 = vpop.f32.mrf.mxu0
      %510 = vdwg.mxu0
      %v511 = vadd.f32 %v456, %v508
      %v512 = vld [vmem:[%s164 + $0x4] sm:$0xf]
      %s513 = scalar_lea.vmem %s1, 192
      %v514 = vld [vmem:[%s513] sm:$0xf]
      %v515 = vld [vmem:[%s513 + $0x4] sm:$0xf]
      %v516 = vld [vmem:[%s513 + $0x8] sm:$0xf]
      %v517 = vld [vmem:[%s513 + $0xc] sm:$0xf]
      %v518 = vld [vmem:[%s513 + $0x10] sm:$0xf]
      %v519 = vld [vmem:[%s513 + $0x14] sm:$0xf]
      %v520 = vld [vmem:[%s513 + $0x18] sm:$0xf]
      %v521 = vld [vmem:[%s513 + $0x1c] sm:$0xf]
      %v530 = vunpack.c.l.b16 %v514
      %v531 = vunpack.c.l.b16 %v515
      %v532 = vunpack.c.l.b16 %v516
      %v533 = vunpack.c.l.b16 %v517
      %v534 = vunpack.c.l.b16 %v518
      %v535 = vunpack.c.l.b16 %v519
      %v536 = vunpack.c.l.b16 %v520
      %v537 = vunpack.c.l.b16 %v521
      %v538 = vpack.c.b16 %v531, %v530
      %v539 = vpack.c.b16 %v533, %v532
      %v540 = vpack.c.b16 %v535, %v534
      %v541 = vpack.c.b16 %v537, %v536
      %v547 = vsel %vm225, %v512, 0
      %549 = vmatpush.bf16.msra.mxu0 0
      %550 = vmatpush.bf16.msra.mxu0 0
      %551 = vmatpush.bf16.msra.mxu0 0
      %552 = vmatpush.bf16.msra.mxu0 0
      %553 = vmatpush.bf16.msra.mxu0 %v541
      %554 = vmatpush.bf16.msra.mxu0 %v540
      %555 = vmatpush.bf16.msra.mxu0 %v539
      %556 = vmatpush.bf16.msra.mxu0 %v538
      %557 = vmatmul.bf16.gmra.mxu0 %v547
      %v558 = vpop.f32.mrf.mxu0
      %v559 = vadd.f32 0.0, %v558
      %v560 = vpop.f32.mrf.mxu0
      %561 = vdwg.mxu0
      %v562 = vadd.f32 %v511, %v559
      %v563 = vld [vmem:[%s164 + $0x4] sm:$0xf]
      %v564 = vld [vmem:[%s164 + $0x8] sm:$0x1]
      %s565 = scalar_lea.vmem %s1, 224
      %v566 = vld [vmem:[%s565] sm:$0xf]
      %v567 = vld [vmem:[%s565 + $0x4] sm:$0xf]
      %v568 = vld [vmem:[%s565 + $0x8] sm:$0xf]
      %v569 = vld [vmem:[%s565 + $0xc] sm:$0xf]
      %v570 = vld [vmem:[%s565 + $0x10] sm:$0xf]
      %v571 = vld [vmem:[%s565 + $0x14] sm:$0xf]
      %v572 = vld [vmem:[%s565 + $0x18] sm:$0xf]
      %v573 = vld [vmem:[%s565 + $0x1c] sm:$0xf]
      %v576 = vunpack.c.l.b16 %v563
      %v577 = vunpack.c.l.b16 %v564
      %v578 = vpack.c.b16 %v577, %v576
      %v580 = vshrl.u32 %v578, 16
      %v582 = vshll.u32 %v578, 16
      %v584 = vrot.slane %v582, 1
      %v585 = vor.u32 %v580, %v584
      %v594 = vunpack.c.l.b16 %v566
      %v595 = vunpack.c.l.b16 %v567
      %v596 = vunpack.c.l.b16 %v568
      %v597 = vunpack.c.l.b16 %v569
      %v598 = vunpack.c.l.b16 %v570
      %v599 = vunpack.c.l.b16 %v571
      %v600 = vunpack.c.l.b16 %v572
      %v601 = vunpack.c.l.b16 %v573
      %v602 = vpack.c.b16 %v595, %v594
      %v603 = vpack.c.b16 %v597, %v596
      %v604 = vpack.c.b16 %v599, %v598
      %v605 = vpack.c.b16 %v601, %v600
      %v611 = vsel %vm225, %v585, 0
      %613 = vmatpush.bf16.msra.mxu0 0
      %614 = vmatpush.bf16.msra.mxu0 0
      %615 = vmatpush.bf16.msra.mxu0 0
      %616 = vmatpush.bf16.msra.mxu0 0
      %617 = vmatpush.bf16.msra.mxu0 %v605
      %618 = vmatpush.bf16.msra.mxu0 %v604
      %619 = vmatpush.bf16.msra.mxu0 %v603
      %620 = vmatpush.bf16.msra.mxu0 %v602
      %621 = vmatmul.bf16.gmra.mxu0 %v611
      %v622 = vpop.f32.mrf.mxu0
      %v623 = vadd.f32 0.0, %v622
      %v624 = vpop.f32.mrf.mxu0
      %625 = vdwg.mxu0
      %v626 = vadd.f32 %v562, %v623
      %v627 = vld [vmem:[%s164 + $0x4] sm:$0xe]
      %s628 = scalar_lea.vmem %s1, 256
      %v629 = vld [vmem:[%s628] sm:$0xf]
      %v630 = vld [vmem:[%s628 + $0x4] sm:$0xf]
      %v631 = vld [vmem:[%s628 + $0x8] sm:$0xf]
      %v632 = vld [vmem:[%s628 + $0xc] sm:$0xf]
      %v633 = vld [vmem:[%s628 + $0x10] sm:$0xf]
      %v634 = vld [vmem:[%s628 + $0x14] sm:$0xf]
      %v635 = vld [vmem:[%s628 + $0x18] sm:$0xf]
      %v636 = vld [vmem:[%s628 + $0x1c] sm:$0xf]
      %v638 = vunpack.c.l.b16 %v627
      %v639 = vpack.c.b16 %v577, %v638
      %v640 = vrot.slane %v639, 1
      %v649 = vunpack.c.l.b16 %v629
      %v650 = vunpack.c.l.b16 %v630
      %v651 = vunpack.c.l.b16 %v631
      %v652 = vunpack.c.l.b16 %v632
      %v653 = vunpack.c.l.b16 %v633
      %v654 = vunpack.c.l.b16 %v634
      %v655 = vunpack.c.l.b16 %v635
      %v656 = vunpack.c.l.b16 %v636
      %v657 = vpack.c.b16 %v650, %v649
      %v658 = vpack.c.b16 %v652, %v651
      %v659 = vpack.c.b16 %v654, %v653
      %v660 = vpack.c.b16 %v656, %v655
      %v666 = vsel %vm225, %v640, 0
      %668 = vmatpush.bf16.msra.mxu0 0
      %669 = vmatpush.bf16.msra.mxu0 0
      %670 = vmatpush.bf16.msra.mxu0 0
      %671 = vmatpush.bf16.msra.mxu0 0
      %672 = vmatpush.bf16.msra.mxu0 %v660
      %673 = vmatpush.bf16.msra.mxu0 %v659
      %674 = vmatpush.bf16.msra.mxu0 %v658
      %675 = vmatpush.bf16.msra.mxu0 %v657
      %676 = vmatmul.bf16.gmra.mxu0 %v666
      %v677 = vpop.f32.mrf.mxu0
      %v678 = vadd.f32 0.0, %v677
      %v679 = vpop.f32.mrf.mxu0
      %680 = vdwg.mxu0
      %v681 = vadd.f32 %v626, %v678
      %v682 = vld [vmem:[%s2] sm:$0x1]
      %v684 = vperm.slane %v682, 0
      %v686 = vadd.f32 %v681, %v684
      %vm687 = vcmp.ge.f32.partialorder %v686, 0.0
      %v688 = vmul.f32 %v686, 0.2
      %v689 = vsel %vm687, %v686, %v688
      %v690 = vpack.c.bf16 %v689, %v689
      %691 = vst [vmem:[%s168] sm:$0xf] %v690
      %p692 = scmp.lt.s32.totalorder %s14, 1
      %s693 = scalar_select %p692, %s14, 1
      %s694 = smul.addr %s693, 4
      %s695 = scalar_lea.vmem %s3, %s694
      // Predicated region
      $region33: #{_lambda_.8} parent=31 // pred_check
        %p696 = pneg %p100
      $region34: #{_lambda_.8} parent=31 // pred_check_branch
        %698 = sbr.rel (%p696) target = $region36
      $region35: #{_lambda_.8} parent=31 // pred_region
        _
      $region36: #{_lambda_.8} parent=31 // pred_fallthru
        _
    $region32: #{_lambda_.8} parent=5 // pred_fallthru
      _
    %p699 = scmp.le.s32.totalorder 2, %s9
    // Predicated region
    $region37: #{_lambda_.8} parent=5 // pred_check
      %p700 = pneg %p699
    $region38: #{_lambda_.8} parent=5 // pred_check_branch
      %702 = sbr.rel (%p700) target = $region40
    $region39: #{_lambda_.8} parent=5 // pred_region
      %s703 = ssub.s32 %s9, 2
      // Predicated region
      $region41: #{_lambda_.8} parent=39 // pred_check
        %p704 = pneg %p106
      $region42: #{_lambda_.8} parent=39 // pred_check_branch
        %706 = sbr.rel (%p704) target = $region44
      $region43: #{_lambda_.8} parent=39 // pred_region
        %p707 = scmp.lt.s32.totalorder %s15, 1
        %s708 = scalar_select %p707, %s15, 1
        %s709 = smul.addr %s708, 4
        %s710 = scalar_lea.vmem %s3, %s709
      $region44: #{_lambda_.8} parent=39 // pred_fallthru
        _
    $region40: #{_lambda_.8} parent=5 // pred_fallthru
      _
  $region6: #{_lambda_.8} parent=0 // loop_footer
    %s13 = sadd.s32 1, %s9
  $region7: #{_lambda_.8} parent=0 // loop_footer_branch
    %8 = sbr.rel target = $region3
  $region8: #{_lambda_.8} parent=0 // loop_exit
    _

</llo_original>
